<compile_context>
chip_gen: v5e
topology: v5e:2x2
jax: 0.10.0
libtpu: 0.0.40
codegen_flags: <defaults>
</compile_context>

<pallas_src>
import functools

import jax
import jax.numpy as jnp
from jax.experimental import pallas as pl
from jax.experimental.pallas import tpu as pltpu

_S_CONV = 8     # samples handled per conv-kernel grid step
_LANES = 128


def _round_up(n, m):
    return ((n + m - 1) // m) * m


def _conv_block_kernel(p1_ref, w1_ref, b1_ref, w2_ref, b2_ref, o_ref,
                       *, samples, offsets, n2):
    """Fused conv1(+ReLU)+conv2(+ReLU) for `samples` images, transposed layout.

    p1_ref : (samples, CP, NP1) f32   im2col patches of the input (spatial on lanes)
    w1_ref : (C1, CP)           bf16  conv1 weight
    b1_ref : (C1, 1)            f32
    w2_ref : (K2*K2, C2, C1)    bf16  conv2 weight, one (C2,C1) slab per tap
    b2_ref : (C2, 1)            f32
    o_ref  : (samples, C2, n2)  f32   conv2 output, "wide" spatial index on lanes
    """
    w1 = w1_ref[...]
    b1 = b1_ref[...]
    b2 = b2_ref[...]
    w2 = [w2_ref[k] for k in range(len(offsets))]
    c2 = b2.shape[0]

    for s in range(samples):
        p = p1_ref[s].astype(jnp.bfloat16)                       # (CP, NP1)
        h1 = jnp.dot(w1, p, preferred_element_type=jnp.float32)  # (C1, NP1) f32 acc
        h1 = jnp.maximum(h1 + b1, 0.0)
        acc = jnp.zeros((c2, n2), jnp.float32)
        for k, off in enumerate(offsets):                        # 9 shifted matmuls
            hs = h1[:, off:off + n2].astype(jnp.bfloat16)        # (C1, n2)
            acc = acc + jnp.dot(w2[k], hs, preferred_element_type=jnp.float32)
        o_ref[s] = jnp.maximum(acc + b2, 0.0)


def _fc_kernel(f_ref, w1_ref, b1_ref, w2_ref, b2_ref, o_ref):
    """fc1(+ReLU)+fc2 for one batch tile. Output lane dim padded to 128."""
    f = f_ref[...].astype(jnp.bfloat16)                                   # (TB, F)
    h = jnp.dot(f, w1_ref[...], preferred_element_type=jnp.float32) + b1_ref[...]
    h = jnp.maximum(h, 0.0).astype(jnp.bfloat16)                          # (TB, 256)
    o_ref[...] = (jnp.dot(h, w2_ref[...], preferred_element_type=jnp.float32)
                  + b2_ref[...])


@jax.jit
def conv_qnet_forward(x, params):
    """Conv_QNet forward pass as two Pallas TPU kernels.

    x      : (B, 2, H, W) float32, NCHW (PyTorch layout)
    params : PyTorch-layout weights (see init_params)
    """
    f32, bf16 = jnp.float32, jnp.bfloat16
    B, C_in, H, W = x.shape
    w_c1, b_c1 = params["w_conv1"], params["b_conv1"]    # (32,2,5,5), (32,)
    w_c2, b_c2 = params["w_conv2"], params["b_conv2"]    # (16,32,3,3), (16,)
    w_f1, b_f1 = params["w_fc1"], params["b_fc1"]        # (256,F), (256,)
    w_f2, b_f2 = params["w_fc2"], params["b_fc2"]        # (A,256), (A,)

    C1, _, K1, _ = w_c1.shape
    C2, _, K2, _ = w_c2.shape
    H1, W1 = H - K1 + 1, W - K1 + 1          # conv1 output spatial (12,12)
    H2, W2 = H1 - K2 + 1, W1 - K2 + 1        # conv2 output spatial (10,10)
    CP = C_in * K1 * K1                      # im2col patch length (50)
    hidden = w_f1.shape[0]
    A = w_f2.shape[0]

    # ---- conv-kernel geometry ("wide" spatial indexing with row stride W1) ----
    offsets = tuple(ky * W1 + kx for ky in range(K2) for kx in range(K2))
    N2 = _round_up((H2 - 1) * W1 + W2, _LANES)            # 128: lane-dense conv2 width
    NP1 = _round_up(max(H1 * W1, offsets[-1] + N2), 8)    # 160: conv1 width needed

    # ---- host-side im2col for conv1 (layout only; compute stays in the kernel) ----
    cols = []
    for ci in range(C_in):
        for ky in range(K1):
            for kx in range(K1):
                cols.append(x[:, ci, ky:ky + H1, kx:kx + W1].reshape(B, H1 * W1))
    p1 = jnp.stack(cols, axis=1)                                   # (B, CP, H1*W1)
    Bc = _round_up(B, _S_CONV)
    p1 = jnp.pad(p1, ((0, Bc - B), (0, 0), (0, NP1 - H1 * W1)))    # (Bc, CP, NP1)

    # conv weights in kernel layout (bf16 operands, f32 biases)
    w1_mat = w_c1.reshape(C1, CP).astype(bf16)                               # (32,50)
    b1_col = b_c1.reshape(C1, 1).astype(f32)
    w2_mat = jnp.transpose(w_c2, (2, 3, 0, 1)).reshape(K2 * K2, C2, C1).astype(bf16)
    b2_col = b_c2.reshape(C2, 1).astype(f32)

    conv_kernel = functools.partial(
        _conv_block_kernel, samples=_S_CONV, offsets=offsets, n2=N2)

    h2 = pl.pallas_call(
        conv_kernel,
        out_shape=jax.ShapeDtypeStruct((Bc, C2, N2), f32),
        grid=(Bc // _S_CONV,),
        in_specs=[
            pl.BlockSpec((_S_CONV, CP, NP1), lambda i: (i, 0, 0)),
            pl.BlockSpec((C1, CP), lambda i: (0, 0)),
            pl.BlockSpec((C1, 1), lambda i: (0, 0)),
            pl.BlockSpec((K2 * K2, C2, C1), lambda i: (0, 0, 0)),
            pl.BlockSpec((C2, 1), lambda i: (0, 0)),
        ],
        out_specs=pl.BlockSpec((_S_CONV, C2, N2), lambda i: (i, 0, 0)),
        compiler_params=pltpu.CompilerParams(
            dimension_semantics=("parallel",),
            vmem_limit_bytes=32 * 1024 * 1024),
    )(p1, w1_mat, b1_col, w2_mat, b2_col)

    # ---- drop pad/garbage columns, flatten in PyTorch (C, H, W) order ----
    h2 = h2[:B, :, :H2 * W1].reshape(B, C2, H2, W1)[:, :, :, :W2]   # (B,16,10,10)
    feats = h2.reshape(B, C2 * H2 * W2)                             # (B, 1600)

    # ---- fully-connected head (batch-tiled, action dim padded to 128 lanes) ----
    A_pad = _round_up(A, _LANES)
    TB = 256 if B >= 256 else _round_up(B, 8)
    Bf = _round_up(B, TB)
    feats = jnp.pad(feats, ((0, Bf - B), (0, 0)))
    F = feats.shape[1]

    w_f1_mat = w_f1.T.astype(bf16)                                   # (F, 256)
    b_f1_row = b_f1.reshape(1, hidden).astype(f32)
    w_f2_mat = jnp.pad(w_f2.T, ((0, 0), (0, A_pad - A))).astype(bf16)  # (256, A_pad)
    b_f2_row = jnp.pad(b_f2, (0, A_pad - A)).reshape(1, A_pad).astype(f32)

    out = pl.pallas_call(
        _fc_kernel,
        out_shape=jax.ShapeDtypeStruct((Bf, A_pad), f32),
        grid=(Bf // TB,),
        in_specs=[
            pl.BlockSpec((TB, F), lambda i: (i, 0)),
            pl.BlockSpec((F, hidden), lambda i: (0, 0)),
            pl.BlockSpec((1, hidden), lambda i: (0, 0)),
            pl.BlockSpec((hidden, A_pad), lambda i: (0, 0)),
            pl.BlockSpec((1, A_pad), lambda i: (0, 0)),
        ],
        out_specs=pl.BlockSpec((TB, A_pad), lambda i: (i, 0)),
        compiler_params=pltpu.CompilerParams(
            dimension_semantics=("parallel",),
            vmem_limit_bytes=32 * 1024 * 1024),
    )(feats, w_f1_mat, b_f1_row, w_f2_mat, b_f2_row)

    return out[:B, :A]


def init_params(key, input_shape=(2, 16, 16), num_actions=3):
    """PyTorch-default-style init (uniform +-1/sqrt(fan_in)), PyTorch weight layouts."""
    C_in, H, W = input_shape
    H2, W2 = (H - 4) - 2, (W - 4) - 2
    feat = 16 * H2 * W2

    def unif(k, shape, fan_in):
        bound = 1.0 / jnp.sqrt(jnp.float32(fan_in))
        return jax.random.uniform(k, shape, jnp.float32, -bound, bound)

    ks = jax.random.split(key, 8)
    return {
        "w_conv1": unif(ks[0], (32, C_in, 5, 5), C_in * 25),
        "b_conv1": unif(ks[1], (32,), C_in * 25),
        "w_conv2": unif(ks[2], (16, 32, 3, 3), 32 * 9),
        "b_conv2": unif(ks[3], (16,), 32 * 9),
        "w_fc1":   unif(ks[4], (256, feat), feat),
        "b_fc1":   unif(ks[5], (256,), feat),
        "w_fc2":   unif(ks[6], (num_actions, 256), 256),
        "b_fc2":   unif(ks[7], (num_actions,), 256),
    }


def reference_forward(x, p):
    """Pure-JAX reference mirroring the PyTorch module (f32)."""
    h = jax.lax.conv(x, p["w_conv1"], (1, 1), "VALID") + p["b_conv1"][None, :, None, None]
    h = jnp.maximum(h, 0.0)
    h = jax.lax.conv(h, p["w_conv2"], (1, 1), "VALID") + p["b_conv2"][None, :, None, None]
    h = jnp.maximum(h, 0.0)
    f = h.reshape(h.shape[0], -1)
    f = jnp.maximum(f @ p["w_fc1"].T + p["b_fc1"], 0.0)
    return f @ p["w_fc2"].T + p["b_fc2"]


if __name__ == "__main__":
    batch, input_shape, num_actions = 2, (2, 16, 16), 3

    key = jax.random.PRNGKey(0)
    kx, kp = jax.random.split(key)
    x = jax.random.normal(kx, (batch,) + input_shape, jnp.float32)
    params = init_params(kp, input_shape, num_actions)

    out = jax.block_until_ready(conv_qnet_forward(x, params))
    ref = reference_forward(x, params)

    assert out.shape == (batch, num_actions)
    max_err = float(jnp.max(jnp.abs(out - ref)))
    # bf16 matmul operands with f32 accumulation -> loosened tolerance vs f32 reference.
    assert max_err < 3e-2, f"max abs error {max_err}"

    print("KERNEL_OK")
</pallas_src>

<mosaic_0001>
module attributes {stable_mosaic.version = 11 : i64} {
  func.func @_conv_block_kernel(%arg0: i32, %arg1: memref<8x50x160xf32, #tpu.memory_space<vmem>>, %arg2: memref<32x50xbf16, #tpu.memory_space<vmem>>, %arg3: memref<32x1xf32, #tpu.memory_space<vmem>>, %arg4: memref<9x16x32xbf16, #tpu.memory_space<vmem>>, %arg5: memref<16x1xf32, #tpu.memory_space<vmem>>, %arg6: memref<8x16x128xf32, #tpu.memory_space<vmem>>) attributes {dimension_semantics = [#tpu.dimension_semantics<parallel>], iteration_bounds = array<i64: 1>, scalar_prefetch = 0 : i64, scratch_operands = 0 : i64, tpu.core_type = #tpu.core_type<tc>, window_params = [{transform_indices = @transform_0, window_bounds = array<i64: 8, 50, 160>}, {pipeline_mode = #tpu.pipeline_mode<synchronous>, transform_indices = @transform_1, window_bounds = array<i64: 32, 50>}, {pipeline_mode = #tpu.pipeline_mode<synchronous>, transform_indices = @transform_2, window_bounds = array<i64: 32, 1>}, {pipeline_mode = #tpu.pipeline_mode<synchronous>, transform_indices = @transform_3, window_bounds = array<i64: 9, 16, 32>}, {pipeline_mode = #tpu.pipeline_mode<synchronous>, transform_indices = @transform_4, window_bounds = array<i64: 16, 1>}, {transform_indices = @transform_5, window_bounds = array<i64: 8, 16, 128>}]} {
    %c0 = arith.constant 0 : index
    %c0_0 = arith.constant 0 : index
    %0 = vector.load %arg2[%c0, %c0_0] : memref<32x50xbf16, #tpu.memory_space<vmem>>, vector<32x50xbf16>
    %c0_1 = arith.constant 0 : index
    %c0_2 = arith.constant 0 : index
    %1 = vector.load %arg3[%c0_1, %c0_2] : memref<32x1xf32, #tpu.memory_space<vmem>>, vector<32x1xf32>
    %c0_3 = arith.constant 0 : index
    %c0_4 = arith.constant 0 : index
    %2 = vector.load %arg5[%c0_3, %c0_4] : memref<16x1xf32, #tpu.memory_space<vmem>>, vector<16x1xf32>
    %c0_5 = arith.constant 0 : index
    %c0_6 = arith.constant 0 : index
    %c0_7 = arith.constant 0 : index
    %3 = vector.load %arg4[%c0_5, %c0_6, %c0_7] : memref<9x16x32xbf16, #tpu.memory_space<vmem>>, vector<1x16x32xbf16>
    %4 = vector.shape_cast %3 : vector<1x16x32xbf16> to vector<16x32xbf16>
    %c1 = arith.constant 1 : index
    %c0_8 = arith.constant 0 : index
    %c0_9 = arith.constant 0 : index
    %5 = vector.load %arg4[%c1, %c0_8, %c0_9] : memref<9x16x32xbf16, #tpu.memory_space<vmem>>, vector<1x16x32xbf16>
    %6 = vector.shape_cast %5 : vector<1x16x32xbf16> to vector<16x32xbf16>
    %c2 = arith.constant 2 : index
    %c0_10 = arith.constant 0 : index
    %c0_11 = arith.constant 0 : index
    %7 = vector.load %arg4[%c2, %c0_10, %c0_11] : memref<9x16x32xbf16, #tpu.memory_space<vmem>>, vector<1x16x32xbf16>
    %8 = vector.shape_cast %7 : vector<1x16x32xbf16> to vector<16x32xbf16>
    %c3 = arith.constant 3 : index
    %c0_12 = arith.constant 0 : index
    %c0_13 = arith.constant 0 : index
    %9 = vector.load %arg4[%c3, %c0_12, %c0_13] : memref<9x16x32xbf16, #tpu.memory_space<vmem>>, vector<1x16x32xbf16>
    %10 = vector.shape_cast %9 : vector<1x16x32xbf16> to vector<16x32xbf16>
    %c4 = arith.constant 4 : index
    %c0_14 = arith.constant 0 : index
    %c0_15 = arith.constant 0 : index
    %11 = vector.load %arg4[%c4, %c0_14, %c0_15] : memref<9x16x32xbf16, #tpu.memory_space<vmem>>, vector<1x16x32xbf16>
    %12 = vector.shape_cast %11 : vector<1x16x32xbf16> to vector<16x32xbf16>
    %c5 = arith.constant 5 : index
    %c0_16 = arith.constant 0 : index
    %c0_17 = arith.constant 0 : index
    %13 = vector.load %arg4[%c5, %c0_16, %c0_17] : memref<9x16x32xbf16, #tpu.memory_space<vmem>>, vector<1x16x32xbf16>
    %14 = vector.shape_cast %13 : vector<1x16x32xbf16> to vector<16x32xbf16>
    %c6 = arith.constant 6 : index
    %c0_18 = arith.constant 0 : index
    %c0_19 = arith.constant 0 : index
    %15 = vector.load %arg4[%c6, %c0_18, %c0_19] : memref<9x16x32xbf16, #tpu.memory_space<vmem>>, vector<1x16x32xbf16>
    %16 = vector.shape_cast %15 : vector<1x16x32xbf16> to vector<16x32xbf16>
    %c7 = arith.constant 7 : index
    %c0_20 = arith.constant 0 : index
    %c0_21 = arith.constant 0 : index
    %17 = vector.load %arg4[%c7, %c0_20, %c0_21] : memref<9x16x32xbf16, #tpu.memory_space<vmem>>, vector<1x16x32xbf16>
    %18 = vector.shape_cast %17 : vector<1x16x32xbf16> to vector<16x32xbf16>
    %c8 = arith.constant 8 : index
    %c0_22 = arith.constant 0 : index
    %c0_23 = arith.constant 0 : index
    %19 = vector.load %arg4[%c8, %c0_22, %c0_23] : memref<9x16x32xbf16, #tpu.memory_space<vmem>>, vector<1x16x32xbf16>
    %20 = vector.shape_cast %19 : vector<1x16x32xbf16> to vector<16x32xbf16>
    %c0_24 = arith.constant 0 : index
    %c0_25 = arith.constant 0 : index
    %c0_26 = arith.constant 0 : index
    %21 = vector.load %arg1[%c0_24, %c0_25, %c0_26] : memref<8x50x160xf32, #tpu.memory_space<vmem>>, vector<1x50x160xf32>
    %22 = vector.shape_cast %21 : vector<1x50x160xf32> to vector<50x160xf32>
    %23 = arith.truncf %22 : vector<50x160xf32> to vector<50x160xbf16>
    %cst = arith.constant dense<0.000000e+00> : vector<32x160xf32>
    %24 = tpu.matmul %0, %23, %cst {dimension_numbers = #tpu.dot_dimension_numbers<[1], [0], [0], [1], [0, 0, 1, 1], [], []>} : vector<32x50xbf16>, vector<50x160xbf16>, vector<32x160xf32> -> vector<32x160xf32>
    %25 = vector.broadcast %1 : vector<32x1xf32> to vector<32x160xf32>
    %26 = arith.addf %24, %25 : vector<32x160xf32>
    %cst_27 = arith.constant 0.000000e+00 : f32
    %27 = vector.broadcast %cst_27 : f32 to vector<32x160xf32>
    %28 = arith.maximumf %26, %27 : vector<32x160xf32>
    %cst_28 = arith.constant 0.000000e+00 : f32
    %29 = vector.broadcast %cst_28 : f32 to vector<16x128xf32>
    %30 = vector.extract_strided_slice %28 {offsets = [0, 0], sizes = [32, 128], strides = [1, 1]} : vector<32x160xf32> to vector<32x128xf32>
    %31 = arith.truncf %30 : vector<32x128xf32> to vector<32x128xbf16>
    %cst_29 = arith.constant dense<0.000000e+00> : vector<16x128xf32>
    %32 = tpu.matmul %4, %31, %cst_29 {dimension_numbers = #tpu.dot_dimension_numbers<[1], [0], [0], [1], [0, 0, 1, 1], [], []>} : vector<16x32xbf16>, vector<32x128xbf16>, vector<16x128xf32> -> vector<16x128xf32>
    %33 = arith.addf %29, %32 : vector<16x128xf32>
    %34 = vector.extract_strided_slice %28 {offsets = [0, 1], sizes = [32, 128], strides = [1, 1]} : vector<32x160xf32> to vector<32x128xf32>
    %35 = arith.truncf %34 : vector<32x128xf32> to vector<32x128xbf16>
    %cst_30 = arith.constant dense<0.000000e+00> : vector<16x128xf32>
    %36 = tpu.matmul %6, %35, %cst_30 {dimension_numbers = #tpu.dot_dimension_numbers<[1], [0], [0], [1], [0, 0, 1, 1], [], []>} : vector<16x32xbf16>, vector<32x128xbf16>, vector<16x128xf32> -> vector<16x128xf32>
    %37 = arith.addf %33, %36 : vector<16x128xf32>
    %38 = vector.extract_strided_slice %28 {offsets = [0, 2], sizes = [32, 128], strides = [1, 1]} : vector<32x160xf32> to vector<32x128xf32>
    %39 = arith.truncf %38 : vector<32x128xf32> to vector<32x128xbf16>
    %cst_31 = arith.constant dense<0.000000e+00> : vector<16x128xf32>
    %40 = tpu.matmul %8, %39, %cst_31 {dimension_numbers = #tpu.dot_dimension_numbers<[1], [0], [0], [1], [0, 0, 1, 1], [], []>} : vector<16x32xbf16>, vector<32x128xbf16>, vector<16x128xf32> -> vector<16x128xf32>
    %41 = arith.addf %37, %40 : vector<16x128xf32>
    %42 = vector.extract_strided_slice %28 {offsets = [0, 12], sizes = [32, 128], strides = [1, 1]} : vector<32x160xf32> to vector<32x128xf32>
    %43 = arith.truncf %42 : vector<32x128xf32> to vector<32x128xbf16>
    %cst_32 = arith.constant dense<0.000000e+00> : vector<16x128xf32>
    %44 = tpu.matmul %10, %43, %cst_32 {dimension_numbers = #tpu.dot_dimension_numbers<[1], [0], [0], [1], [0, 0, 1, 1], [], []>} : vector<16x32xbf16>, vector<32x128xbf16>, vector<16x128xf32> -> vector<16x128xf32>
    %45 = arith.addf %41, %44 : vector<16x128xf32>
    %46 = vector.extract_strided_slice %28 {offsets = [0, 13], sizes = [32, 128], strides = [1, 1]} : vector<32x160xf32> to vector<32x128xf32>
    %47 = arith.truncf %46 : vector<32x128xf32> to vector<32x128xbf16>
    %cst_33 = arith.constant dense<0.000000e+00> : vector<16x128xf32>
    %48 = tpu.matmul %12, %47, %cst_33 {dimension_numbers = #tpu.dot_dimension_numbers<[1], [0], [0], [1], [0, 0, 1, 1], [], []>} : vector<16x32xbf16>, vector<32x128xbf16>, vector<16x128xf32> -> vector<16x128xf32>
    %49 = arith.addf %45, %48 : vector<16x128xf32>
    %50 = vector.extract_strided_slice %28 {offsets = [0, 14], sizes = [32, 128], strides = [1, 1]} : vector<32x160xf32> to vector<32x128xf32>
    %51 = arith.truncf %50 : vector<32x128xf32> to vector<32x128xbf16>
    %cst_34 = arith.constant dense<0.000000e+00> : vector<16x128xf32>
    %52 = tpu.matmul %14, %51, %cst_34 {dimension_numbers = #tpu.dot_dimension_numbers<[1], [0], [0], [1], [0, 0, 1, 1], [], []>} : vector<16x32xbf16>, vector<32x128xbf16>, vector<16x128xf32> -> vector<16x128xf32>
    %53 = arith.addf %49, %52 : vector<16x128xf32>
    %54 = vector.extract_strided_slice %28 {offsets = [0, 24], sizes = [32, 128], strides = [1, 1]} : vector<32x160xf32> to vector<32x128xf32>
    %55 = arith.truncf %54 : vector<32x128xf32> to vector<32x128xbf16>
    %cst_35 = arith.constant dense<0.000000e+00> : vector<16x128xf32>
    %56 = tpu.matmul %16, %55, %cst_35 {dimension_numbers = #tpu.dot_dimension_numbers<[1], [0], [0], [1], [0, 0, 1, 1], [], []>} : vector<16x32xbf16>, vector<32x128xbf16>, vector<16x128xf32> -> vector<16x128xf32>
    %57 = arith.addf %53, %56 : vector<16x128xf32>
    %58 = vector.extract_strided_slice %28 {offsets = [0, 25], sizes = [32, 128], strides = [1, 1]} : vector<32x160xf32> to vector<32x128xf32>
    %59 = arith.truncf %58 : vector<32x128xf32> to vector<32x128xbf16>
    %cst_36 = arith.constant dense<0.000000e+00> : vector<16x128xf32>
    %60 = tpu.matmul %18, %59, %cst_36 {dimension_numbers = #tpu.dot_dimension_numbers<[1], [0], [0], [1], [0, 0, 1, 1], [], []>} : vector<16x32xbf16>, vector<32x128xbf16>, vector<16x128xf32> -> vector<16x128xf32>
    %61 = arith.addf %57, %60 : vector<16x128xf32>
    %62 = vector.extract_strided_slice %28 {offsets = [0, 26], sizes = [32, 128], strides = [1, 1]} : vector<32x160xf32> to vector<32x128xf32>
    %63 = arith.truncf %62 : vector<32x128xf32> to vector<32x128xbf16>
    %cst_37 = arith.constant dense<0.000000e+00> : vector<16x128xf32>
    %64 = tpu.matmul %20, %63, %cst_37 {dimension_numbers = #tpu.dot_dimension_numbers<[1], [0], [0], [1], [0, 0, 1, 1], [], []>} : vector<16x32xbf16>, vector<32x128xbf16>, vector<16x128xf32> -> vector<16x128xf32>
    %65 = arith.addf %61, %64 : vector<16x128xf32>
    %66 = vector.broadcast %2 : vector<16x1xf32> to vector<16x128xf32>
    %67 = arith.addf %65, %66 : vector<16x128xf32>
    %cst_38 = arith.constant 0.000000e+00 : f32
    %68 = vector.broadcast %cst_38 : f32 to vector<16x128xf32>
    %69 = arith.maximumf %67, %68 : vector<16x128xf32>
    %c0_39 = arith.constant 0 : index
    %c0_40 = arith.constant 0 : index
    %c0_41 = arith.constant 0 : index
    %70 = vector.load %arg6[%c0_39, %c0_40, %c0_41] : memref<8x16x128xf32, #tpu.memory_space<vmem>>, vector<1x16x128xf32>
    %71 = vector.shape_cast %70 : vector<1x16x128xf32> to vector<16x128xf32>
    %72 = vector.shape_cast %69 : vector<16x128xf32> to vector<1x16x128xf32>
    tpu.vector_store %arg6[%c0_39, %c0_40, %c0_41], %72 {strides = array<i32>} : memref<8x16x128xf32, #tpu.memory_space<vmem>>, vector<1x16x128xf32>,
    %c1_42 = arith.constant 1 : index
    %c0_43 = arith.constant 0 : index
    %c0_44 = arith.constant 0 : index
    %73 = vector.load %arg1[%c1_42, %c0_43, %c0_44] : memref<8x50x160xf32, #tpu.memory_space<vmem>>, vector<1x50x160xf32>
    %74 = vector.shape_cast %73 : vector<1x50x160xf32> to vector<50x160xf32>
    %75 = arith.truncf %74 : vector<50x160xf32> to vector<50x160xbf16>
    %cst_45 = arith.constant dense<0.000000e+00> : vector<32x160xf32>
    %76 = tpu.matmul %0, %75, %cst_45 {dimension_numbers = #tpu.dot_dimension_numbers<[1], [0], [0], [1], [0, 0, 1, 1], [], []>} : vector<32x50xbf16>, vector<50x160xbf16>, vector<32x160xf32> -> vector<32x160xf32>
    %77 = vector.broadcast %1 : vector<32x1xf32> to vector<32x160xf32>
    %78 = arith.addf %76, %77 : vector<32x160xf32>
    %cst_46 = arith.constant 0.000000e+00 : f32
    %79 = vector.broadcast %cst_46 : f32 to vector<32x160xf32>
    %80 = arith.maximumf %78, %79 : vector<32x160xf32>
    %cst_47 = arith.constant 0.000000e+00 : f32
    %81 = vector.broadcast %cst_47 : f32 to vector<16x128xf32>
    %82 = vector.extract_strided_slice %80 {offsets = [0, 0], sizes = [32, 128], strides = [1, 1]} : vector<32x160xf32> to vector<32x128xf32>
    %83 = arith.truncf %82 : vector<32x128xf32> to vector<32x128xbf16>
    %cst_48 = arith.constant dense<0.000000e+00> : vector<16x128xf32>
    %84 = tpu.matmul %4, %83, %cst_48 {dimension_numbers = #tpu.dot_dimension_numbers<[1], [0], [0], [1], [0, 0, 1, 1], [], []>} : vector<16x32xbf16>, vector<32x128xbf16>, vector<16x128xf32> -> vector<16x128xf32>
    %85 = arith.addf %81, %84 : vector<16x128xf32>
    %86 = vector.extract_strided_slice %80 {offsets = [0, 1], sizes = [32, 128], strides = [1, 1]} : vector<32x160xf32> to vector<32x128xf32>
    %87 = arith.truncf %86 : vector<32x128xf32> to vector<32x128xbf16>
    %cst_49 = arith.constant dense<0.000000e+00> : vector<16x128xf32>
    %88 = tpu.matmul %6, %87, %cst_49 {dimension_numbers = #tpu.dot_dimension_numbers<[1], [0], [0], [1], [0, 0, 1, 1], [], []>} : vector<16x32xbf16>, vector<32x128xbf16>, vector<16x128xf32> -> vector<16x128xf32>
    %89 = arith.addf %85, %88 : vector<16x128xf32>
    %90 = vector.extract_strided_slice %80 {offsets = [0, 2], sizes = [32, 128], strides = [1, 1]} : vector<32x160xf32> to vector<32x128xf32>
    %91 = arith.truncf %90 : vector<32x128xf32> to vector<32x128xbf16>
    %cst_50 = arith.constant dense<0.000000e+00> : vector<16x128xf32>
    %92 = tpu.matmul %8, %91, %cst_50 {dimension_numbers = #tpu.dot_dimension_numbers<[1], [0], [0], [1], [0, 0, 1, 1], [], []>} : vector<16x32xbf16>, vector<32x128xbf16>, vector<16x128xf32> -> vector<16x128xf32>
    %93 = arith.addf %89, %92 : vector<16x128xf32>
    %94 = vector.extract_strided_slice %80 {offsets = [0, 12], sizes = [32, 128], strides = [1, 1]} : vector<32x160xf32> to vector<32x128xf32>
    %95 = arith.truncf %94 : vector<32x128xf32> to vector<32x128xbf16>
    %cst_51 = arith.constant dense<0.000000e+00> : vector<16x128xf32>
    %96 = tpu.matmul %10, %95, %cst_51 {dimension_numbers = #tpu.dot_dimension_numbers<[1], [0], [0], [1], [0, 0, 1, 1], [], []>} : vector<16x32xbf16>, vector<32x128xbf16>, vector<16x128xf32> -> vector<16x128xf32>
    %97 = arith.addf %93, %96 : vector<16x128xf32>
    %98 = vector.extract_strided_slice %80 {offsets = [0, 13], sizes = [32, 128], strides = [1, 1]} : vector<32x160xf32> to vector<32x128xf32>
    %99 = arith.truncf %98 : vector<32x128xf32> to vector<32x128xbf16>
    %cst_52 = arith.constant dense<0.000000e+00> : vector<16x128xf32>
    %100 = tpu.matmul %12, %99, %cst_52 {dimension_numbers = #tpu.dot_dimension_numbers<[1], [0], [0], [1], [0, 0, 1, 1], [], []>} : vector<16x32xbf16>, vector<32x128xbf16>, vector<16x128xf32> -> vector<16x128xf32>
    %101 = arith.addf %97, %100 : vector<16x128xf32>
    %102 = vector.extract_strided_slice %80 {offsets = [0, 14], sizes = [32, 128], strides = [1, 1]} : vector<32x160xf32> to vector<32x128xf32>
    %103 = arith.truncf %102 : vector<32x128xf32> to vector<32x128xbf16>
    %cst_53 = arith.constant dense<0.000000e+00> : vector<16x128xf32>
    %104 = tpu.matmul %14, %103, %cst_53 {dimension_numbers = #tpu.dot_dimension_numbers<[1], [0], [0], [1], [0, 0, 1, 1], [], []>} : vector<16x32xbf16>, vector<32x128xbf16>, vector<16x128xf32> -> vector<16x128xf32>
    %105 = arith.addf %101, %104 : vector<16x128xf32>
    %106 = vector.extract_strided_slice %80 {offsets = [0, 24], sizes = [32, 128], strides = [1, 1]} : vector<32x160xf32> to vector<32x128xf32>
    %107 = arith.truncf %106 : vector<32x128xf32> to vector<32x128xbf16>
    %cst_54 = arith.constant dense<0.000000e+00> : vector<16x128xf32>
    %108 = tpu.matmul %16, %107, %cst_54 {dimension_numbers = #tpu.dot_dimension_numbers<[1], [0], [0], [1], [0, 0, 1, 1], [], []>} : vector<16x32xbf16>, vector<32x128xbf16>, vector<16x128xf32> -> vector<16x128xf32>
    %109 = arith.addf %105, %108 : vector<16x128xf32>
    %110 = vector.extract_strided_slice %80 {offsets = [0, 25], sizes = [32, 128], strides = [1, 1]} : vector<32x160xf32> to vector<32x128xf32>
    %111 = arith.truncf %110 : vector<32x128xf32> to vector<32x128xbf16>
    %cst_55 = arith.constant dense<0.000000e+00> : vector<16x128xf32>
    %112 = tpu.matmul %18, %111, %cst_55 {dimension_numbers = #tpu.dot_dimension_numbers<[1], [0], [0], [1], [0, 0, 1, 1], [], []>} : vector<16x32xbf16>, vector<32x128xbf16>, vector<16x128xf32> -> vector<16x128xf32>
    %113 = arith.addf %109, %112 : vector<16x128xf32>
    %114 = vector.extract_strided_slice %80 {offsets = [0, 26], sizes = [32, 128], strides = [1, 1]} : vector<32x160xf32> to vector<32x128xf32>
    %115 = arith.truncf %114 : vector<32x128xf32> to vector<32x128xbf16>
    %cst_56 = arith.constant dense<0.000000e+00> : vector<16x128xf32>
    %116 = tpu.matmul %20, %115, %cst_56 {dimension_numbers = #tpu.dot_dimension_numbers<[1], [0], [0], [1], [0, 0, 1, 1], [], []>} : vector<16x32xbf16>, vector<32x128xbf16>, vector<16x128xf32> -> vector<16x128xf32>
    %117 = arith.addf %113, %116 : vector<16x128xf32>
    %118 = vector.broadcast %2 : vector<16x1xf32> to vector<16x128xf32>
    %119 = arith.addf %117, %118 : vector<16x128xf32>
    %cst_57 = arith.constant 0.000000e+00 : f32
    %120 = vector.broadcast %cst_57 : f32 to vector<16x128xf32>
    %121 = arith.maximumf %119, %120 : vector<16x128xf32>
    %c1_58 = arith.constant 1 : index
    %c0_59 = arith.constant 0 : index
    %c0_60 = arith.constant 0 : index
    %122 = vector.load %arg6[%c1_58, %c0_59, %c0_60] : memref<8x16x128xf32, #tpu.memory_space<vmem>>, vector<1x16x128xf32>
    %123 = vector.shape_cast %122 : vector<1x16x128xf32> to vector<16x128xf32>
    %124 = vector.shape_cast %121 : vector<16x128xf32> to vector<1x16x128xf32>
    tpu.vector_store %arg6[%c1_58, %c0_59, %c0_60], %124 {strides = array<i32>} : memref<8x16x128xf32, #tpu.memory_space<vmem>>, vector<1x16x128xf32>,
    %c2_61 = arith.constant 2 : index
    %c0_62 = arith.constant 0 : index
    %c0_63 = arith.constant 0 : index
    %125 = vector.load %arg1[%c2_61, %c0_62, %c0_63] : memref<8x50x160xf32, #tpu.memory_space<vmem>>, vector<1x50x160xf32>
    %126 = vector.shape_cast %125 : vector<1x50x160xf32> to vector<50x160xf32>
    %127 = arith.truncf %126 : vector<50x160xf32> to vector<50x160xbf16>
    %cst_64 = arith.constant dense<0.000000e+00> : vector<32x160xf32>
    %128 = tpu.matmul %0, %127, %cst_64 {dimension_numbers = #tpu.dot_dimension_numbers<[1], [0], [0], [1], [0, 0, 1, 1], [], []>} : vector<32x50xbf16>, vector<50x160xbf16>, vector<32x160xf32> -> vector<32x160xf32>
    %129 = vector.broadcast %1 : vector<32x1xf32> to vector<32x160xf32>
    %130 = arith.addf %128, %129 : vector<32x160xf32>
    %cst_65 = arith.constant 0.000000e+00 : f32
    %131 = vector.broadcast %cst_65 : f32 to vector<32x160xf32>
    %132 = arith.maximumf %130, %131 : vector<32x160xf32>
    %cst_66 = arith.constant 0.000000e+00 : f32
    %133 = vector.broadcast %cst_66 : f32 to vector<16x128xf32>
    %134 = vector.extract_strided_slice %132 {offsets = [0, 0], sizes = [32, 128], strides = [1, 1]} : vector<32x160xf32> to vector<32x128xf32>
    %135 = arith.truncf %134 : vector<32x128xf32> to vector<32x128xbf16>
    %cst_67 = arith.constant dense<0.000000e+00> : vector<16x128xf32>
    %136 = tpu.matmul %4, %135, %cst_67 {dimension_numbers = #tpu.dot_dimension_numbers<[1], [0], [0], [1], [0, 0, 1, 1], [], []>} : vector<16x32xbf16>, vector<32x128xbf16>, vector<16x128xf32> -> vector<16x128xf32>
    %137 = arith.addf %133, %136 : vector<16x128xf32>
    %138 = vector.extract_strided_slice %132 {offsets = [0, 1], sizes = [32, 128], strides = [1, 1]} : vector<32x160xf32> to vector<32x128xf32>
    %139 = arith.truncf %138 : vector<32x128xf32> to vector<32x128xbf16>
    %cst_68 = arith.constant dense<0.000000e+00> : vector<16x128xf32>
    %140 = tpu.matmul %6, %139, %cst_68 {dimension_numbers = #tpu.dot_dimension_numbers<[1], [0], [0], [1], [0, 0, 1, 1], [], []>} : vector<16x32xbf16>, vector<32x128xbf16>, vector<16x128xf32> -> vector<16x128xf32>
    %141 = arith.addf %137, %140 : vector<16x128xf32>
    %142 = vector.extract_strided_slice %132 {offsets = [0, 2], sizes = [32, 128], strides = [1, 1]} : vector<32x160xf32> to vector<32x128xf32>
    %143 = arith.truncf %142 : vector<32x128xf32> to vector<32x128xbf16>
    %cst_69 = arith.constant dense<0.000000e+00> : vector<16x128xf32>
    %144 = tpu.matmul %8, %143, %cst_69 {dimension_numbers = #tpu.dot_dimension_numbers<[1], [0], [0], [1], [0, 0, 1, 1], [], []>} : vector<16x32xbf16>, vector<32x128xbf16>, vector<16x128xf32> -> vector<16x128xf32>
    %145 = arith.addf %141, %144 : vector<16x128xf32>
    %146 = vector.extract_strided_slice %132 {offsets = [0, 12], sizes = [32, 128], strides = [1, 1]} : vector<32x160xf32> to vector<32x128xf32>
    %147 = arith.truncf %146 : vector<32x128xf32> to vector<32x128xbf16>
    %cst_70 = arith.constant dense<0.000000e+00> : vector<16x128xf32>
    %148 = tpu.matmul %10, %147, %cst_70 {dimension_numbers = #tpu.dot_dimension_numbers<[1], [0], [0], [1], [0, 0, 1, 1], [], []>} : vector<16x32xbf16>, vector<32x128xbf16>, vector<16x128xf32> -> vector<16x128xf32>
    %149 = arith.addf %145, %148 : vector<16x128xf32>
    %150 = vector.extract_strided_slice %132 {offsets = [0, 13], sizes = [32, 128], strides = [1, 1]} : vector<32x160xf32> to vector<32x128xf32>
    %151 = arith.truncf %150 : vector<32x128xf32> to vector<32x128xbf16>
    %cst_71 = arith.constant dense<0.000000e+00> : vector<16x128xf32>
    %152 = tpu.matmul %12, %151, %cst_71 {dimension_numbers = #tpu.dot_dimension_numbers<[1], [0], [0], [1], [0, 0, 1, 1], [], []>} : vector<16x32xbf16>, vector<32x128xbf16>, vector<16x128xf32> -> vector<16x128xf32>
    %153 = arith.addf %149, %152 : vector<16x128xf32>
    %154 = vector.extract_strided_slice %132 {offsets = [0, 14], sizes = [32, 128], strides = [1, 1]} : vector<32x160xf32> to vector<32x128xf32>
    %155 = arith.truncf %154 : vector<32x128xf32> to vector<32x128xbf16>
    %cst_72 = arith.constant dense<0.000000e+00> : vector<16x128xf32>
    %156 = tpu.matmul %14, %155, %cst_72 {dimension_numbers = #tpu.dot_dimension_numbers<[1], [0], [0], [1], [0, 0, 1, 1], [], []>} : vector<16x32xbf16>, vector<32x128xbf16>, vector<16x128xf32> -> vector<16x128xf32>
    %157 = arith.addf %153, %156 : vector<16x128xf32>
    %158 = vector.extract_strided_slice %132 {offsets = [0, 24], sizes = [32, 128], strides = [1, 1]} : vector<32x160xf32> to vector<32x128xf32>
    %159 = arith.truncf %158 : vector<32x128xf32> to vector<32x128xbf16>
    %cst_73 = arith.constant dense<0.000000e+00> : vector<16x128xf32>
    %160 = tpu.matmul %16, %159, %cst_73 {dimension_numbers = #tpu.dot_dimension_numbers<[1], [0], [0], [1], [0, 0, 1, 1], [], []>} : vector<16x32xbf16>, vector<32x128xbf16>, vector<16x128xf32> -> vector<16x128xf32>
    %161 = arith.addf %157, %160 : vector<16x128xf32>
    %162 = vector.extract_strided_slice %132 {offsets = [0, 25], sizes = [32, 128], strides = [1, 1]} : vector<32x160xf32> to vector<32x128xf32>
    %163 = arith.truncf %162 : vector<32x128xf32> to vector<32x128xbf16>
    %cst_74 = arith.constant dense<0.000000e+00> : vector<16x128xf32>
    %164 = tpu.matmul %18, %163, %cst_74 {dimension_numbers = #tpu.dot_dimension_numbers<[1], [0], [0], [1], [0, 0, 1, 1], [], []>} : vector<16x32xbf16>, vector<32x128xbf16>, vector<16x128xf32> -> vector<16x128xf32>
    %165 = arith.addf %161, %164 : vector<16x128xf32>
    %166 = vector.extract_strided_slice %132 {offsets = [0, 26], sizes = [32, 128], strides = [1, 1]} : vector<32x160xf32> to vector<32x128xf32>
    %167 = arith.truncf %166 : vector<32x128xf32> to vector<32x128xbf16>
    %cst_75 = arith.constant dense<0.000000e+00> : vector<16x128xf32>
    %168 = tpu.matmul %20, %167, %cst_75 {dimension_numbers = #tpu.dot_dimension_numbers<[1], [0], [0], [1], [0, 0, 1, 1], [], []>} : vector<16x32xbf16>, vector<32x128xbf16>, vector<16x128xf32> -> vector<16x128xf32>
    %169 = arith.addf %165, %168 : vector<16x128xf32>
    %170 = vector.broadcast %2 : vector<16x1xf32> to vector<16x128xf32>
    %171 = arith.addf %169, %170 : vector<16x128xf32>
    %cst_76 = arith.constant 0.000000e+00 : f32
    %172 = vector.broadcast %cst_76 : f32 to vector<16x128xf32>
    %173 = arith.maximumf %171, %172 : vector<16x128xf32>
    %c2_77 = arith.constant 2 : index
    %c0_78 = arith.constant 0 : index
    %c0_79 = arith.constant 0 : index
    %174 = vector.load %arg6[%c2_77, %c0_78, %c0_79] : memref<8x16x128xf32, #tpu.memory_space<vmem>>, vector<1x16x128xf32>
    %175 = vector.shape_cast %174 : vector<1x16x128xf32> to vector<16x128xf32>
    %176 = vector.shape_cast %173 : vector<16x128xf32> to vector<1x16x128xf32>
    tpu.vector_store %arg6[%c2_77, %c0_78, %c0_79], %176 {strides = array<i32>} : memref<8x16x128xf32, #tpu.memory_space<vmem>>, vector<1x16x128xf32>,
    %c3_80 = arith.constant 3 : index
    %c0_81 = arith.constant 0 : index
    %c0_82 = arith.constant 0 : index
    %177 = vector.load %arg1[%c3_80, %c0_81, %c0_82] : memref<8x50x160xf32, #tpu.memory_space<vmem>>, vector<1x50x160xf32>
    %178 = vector.shape_cast %177 : vector<1x50x160xf32> to vector<50x160xf32>
    %179 = arith.truncf %178 : vector<50x160xf32> to vector<50x160xbf16>
    %cst_83 = arith.constant dense<0.000000e+00> : vector<32x160xf32>
    %180 = tpu.matmul %0, %179, %cst_83 {dimension_numbers = #tpu.dot_dimension_numbers<[1], [0], [0], [1], [0, 0, 1, 1], [], []>} : vector<32x50xbf16>, vector<50x160xbf16>, vector<32x160xf32> -> vector<32x160xf32>
    %181 = vector.broadcast %1 : vector<32x1xf32> to vector<32x160xf32>
    %182 = arith.addf %180, %181 : vector<32x160xf32>
    %cst_84 = arith.constant 0.000000e+00 : f32
    %183 = vector.broadcast %cst_84 : f32 to vector<32x160xf32>
    %184 = arith.maximumf %182, %183 : vector<32x160xf32>
    %cst_85 = arith.constant 0.000000e+00 : f32
    %185 = vector.broadcast %cst_85 : f32 to vector<16x128xf32>
    %186 = vector.extract_strided_slice %184 {offsets = [0, 0], sizes = [32, 128], strides = [1, 1]} : vector<32x160xf32> to vector<32x128xf32>
    %187 = arith.truncf %186 : vector<32x128xf32> to vector<32x128xbf16>
    %cst_86 = arith.constant dense<0.000000e+00> : vector<16x128xf32>
    %188 = tpu.matmul %4, %187, %cst_86 {dimension_numbers = #tpu.dot_dimension_numbers<[1], [0], [0], [1], [0, 0, 1, 1], [], []>} : vector<16x32xbf16>, vector<32x128xbf16>, vector<16x128xf32> -> vector<16x128xf32>
    %189 = arith.addf %185, %188 : vector<16x128xf32>
    %190 = vector.extract_strided_slice %184 {offsets = [0, 1], sizes = [32, 128], strides = [1, 1]} : vector<32x160xf32> to vector<32x128xf32>
    %191 = arith.truncf %190 : vector<32x128xf32> to vector<32x128xbf16>
    %cst_87 = arith.constant dense<0.000000e+00> : vector<16x128xf32>
    %192 = tpu.matmul %6, %191, %cst_87 {dimension_numbers = #tpu.dot_dimension_numbers<[1], [0], [0], [1], [0, 0, 1, 1], [], []>} : vector<16x32xbf16>, vector<32x128xbf16>, vector<16x128xf32> -> vector<16x128xf32>
    %193 = arith.addf %189, %192 : vector<16x128xf32>
    %194 = vector.extract_strided_slice %184 {offsets = [0, 2], sizes = [32, 128], strides = [1, 1]} : vector<32x160xf32> to vector<32x128xf32>
    %195 = arith.truncf %194 : vector<32x128xf32> to vector<32x128xbf16>
    %cst_88 = arith.constant dense<0.000000e+00> : vector<16x128xf32>
    %196 = tpu.matmul %8, %195, %cst_88 {dimension_numbers = #tpu.dot_dimension_numbers<[1], [0], [0], [1], [0, 0, 1, 1], [], []>} : vector<16x32xbf16>, vector<32x128xbf16>, vector<16x128xf32> -> vector<16x128xf32>
    %197 = arith.addf %193, %196 : vector<16x128xf32>
    %198 = vector.extract_strided_slice %184 {offsets = [0, 12], sizes = [32, 128], strides = [1, 1]} : vector<32x160xf32> to vector<32x128xf32>
    %199 = arith.truncf %198 : vector<32x128xf32> to vector<32x128xbf16>
    %cst_89 = arith.constant dense<0.000000e+00> : vector<16x128xf32>
    %200 = tpu.matmul %10, %199, %cst_89 {dimension_numbers = #tpu.dot_dimension_numbers<[1], [0], [0], [1], [0, 0, 1, 1], [], []>} : vector<16x32xbf16>, vector<32x128xbf16>, vector<16x128xf32> -> vector<16x128xf32>
    %201 = arith.addf %197, %200 : vector<16x128xf32>
    %202 = vector.extract_strided_slice %184 {offsets = [0, 13], sizes = [32, 128], strides = [1, 1]} : vector<32x160xf32> to vector<32x128xf32>
    %203 = arith.truncf %202 : vector<32x128xf32> to vector<32x128xbf16>
    %cst_90 = arith.constant dense<0.000000e+00> : vector<16x128xf32>
    %204 = tpu.matmul %12, %203, %cst_90 {dimension_numbers = #tpu.dot_dimension_numbers<[1], [0], [0], [1], [0, 0, 1, 1], [], []>} : vector<16x32xbf16>, vector<32x128xbf16>, vector<16x128xf32> -> vector<16x128xf32>
    %205 = arith.addf %201, %204 : vector<16x128xf32>
    %206 = vector.extract_strided_slice %184 {offsets = [0, 14], sizes = [32, 128], strides = [1, 1]} : vector<32x160xf32> to vector<32x128xf32>
    %207 = arith.truncf %206 : vector<32x128xf32> to vector<32x128xbf16>
    %cst_91 = arith.constant dense<0.000000e+00> : vector<16x128xf32>
    %208 = tpu.matmul %14, %207, %cst_91 {dimension_numbers = #tpu.dot_dimension_numbers<[1], [0], [0], [1], [0, 0, 1, 1], [], []>} : vector<16x32xbf16>, vector<32x128xbf16>, vector<16x128xf32> -> vector<16x128xf32>
    %209 = arith.addf %205, %208 : vector<16x128xf32>
    %210 = vector.extract_strided_slice %184 {offsets = [0, 24], sizes = [32, 128], strides = [1, 1]} : vector<32x160xf32> to vector<32x128xf32>
    %211 = arith.truncf %210 : vector<32x128xf32> to vector<32x128xbf16>
    %cst_92 = arith.constant dense<0.000000e+00> : vector<16x128xf32>
    %212 = tpu.matmul %16, %211, %cst_92 {dimension_numbers = #tpu.dot_dimension_numbers<[1], [0], [0], [1], [0, 0, 1, 1], [], []>} : vector<16x32xbf16>, vector<32x128xbf16>, vector<16x128xf32> -> vector<16x128xf32>
    %213 = arith.addf %209, %212 : vector<16x128xf32>
    %214 = vector.extract_strided_slice %184 {offsets = [0, 25], sizes = [32, 128], strides = [1, 1]} : vector<32x160xf32> to vector<32x128xf32>
    %215 = arith.truncf %214 : vector<32x128xf32> to vector<32x128xbf16>
    %cst_93 = arith.constant dense<0.000000e+00> : vector<16x128xf32>
    %216 = tpu.matmul %18, %215, %cst_93 {dimension_numbers = #tpu.dot_dimension_numbers<[1], [0], [0], [1], [0, 0, 1, 1], [], []>} : vector<16x32xbf16>, vector<32x128xbf16>, vector<16x128xf32> -> vector<16x128xf32>
    %217 = arith.addf %213, %216 : vector<16x128xf32>
    %218 = vector.extract_strided_slice %184 {offsets = [0, 26], sizes = [32, 128], strides = [1, 1]} : vector<32x160xf32> to vector<32x128xf32>
    %219 = arith.truncf %218 : vector<32x128xf32> to vector<32x128xbf16>
    %cst_94 = arith.constant dense<0.000000e+00> : vector<16x128xf32>
    %220 = tpu.matmul %20, %219, %cst_94 {dimension_numbers = #tpu.dot_dimension_numbers<[1], [0], [0], [1], [0, 0, 1, 1], [], []>} : vector<16x32xbf16>, vector<32x128xbf16>, vector<16x128xf32> -> vector<16x128xf32>
    %221 = arith.addf %217, %220 : vector<16x128xf32>
    %222 = vector.broadcast %2 : vector<16x1xf32> to vector<16x128xf32>
    %223 = arith.addf %221, %222 : vector<16x128xf32>
    %cst_95 = arith.constant 0.000000e+00 : f32
    %224 = vector.broadcast %cst_95 : f32 to vector<16x128xf32>
    %225 = arith.maximumf %223, %224 : vector<16x128xf32>
    %c3_96 = arith.constant 3 : index
    %c0_97 = arith.constant 0 : index
    %c0_98 = arith.constant 0 : index
    %226 = vector.load %arg6[%c3_96, %c0_97, %c0_98] : memref<8x16x128xf32, #tpu.memory_space<vmem>>, vector<1x16x128xf32>
    %227 = vector.shape_cast %226 : vector<1x16x128xf32> to vector<16x128xf32>
    %228 = vector.shape_cast %225 : vector<16x128xf32> to vector<1x16x128xf32>
    tpu.vector_store %arg6[%c3_96, %c0_97, %c0_98], %228 {strides = array<i32>} : memref<8x16x128xf32, #tpu.memory_space<vmem>>, vector<1x16x128xf32>,
    %c4_99 = arith.constant 4 : index
    %c0_100 = arith.constant 0 : index
    %c0_101 = arith.constant 0 : index
    %229 = vector.load %arg1[%c4_99, %c0_100, %c0_101] : memref<8x50x160xf32, #tpu.memory_space<vmem>>, vector<1x50x160xf32>
    %230 = vector.shape_cast %229 : vector<1x50x160xf32> to vector<50x160xf32>
    %231 = arith.truncf %230 : vector<50x160xf32> to vector<50x160xbf16>
    %cst_102 = arith.constant dense<0.000000e+00> : vector<32x160xf32>
    %232 = tpu.matmul %0, %231, %cst_102 {dimension_numbers = #tpu.dot_dimension_numbers<[1], [0], [0], [1], [0, 0, 1, 1], [], []>} : vector<32x50xbf16>, vector<50x160xbf16>, vector<32x160xf32> -> vector<32x160xf32>
    %233 = vector.broadcast %1 : vector<32x1xf32> to vector<32x160xf32>
    %234 = arith.addf %232, %233 : vector<32x160xf32>
    %cst_103 = arith.constant 0.000000e+00 : f32
    %235 = vector.broadcast %cst_103 : f32 to vector<32x160xf32>
    %236 = arith.maximumf %234, %235 : vector<32x160xf32>
    %cst_104 = arith.constant 0.000000e+00 : f32
    %237 = vector.broadcast %cst_104 : f32 to vector<16x128xf32>
    %238 = vector.extract_strided_slice %236 {offsets = [0, 0], sizes = [32, 128], strides = [1, 1]} : vector<32x160xf32> to vector<32x128xf32>
    %239 = arith.truncf %238 : vector<32x128xf32> to vector<32x128xbf16>
    %cst_105 = arith.constant dense<0.000000e+00> : vector<16x128xf32>
    %240 = tpu.matmul %4, %239, %cst_105 {dimension_numbers = #tpu.dot_dimension_numbers<[1], [0], [0], [1], [0, 0, 1, 1], [], []>} : vector<16x32xbf16>, vector<32x128xbf16>, vector<16x128xf32> -> vector<16x128xf32>
    %241 = arith.addf %237, %240 : vector<16x128xf32>
    %242 = vector.extract_strided_slice %236 {offsets = [0, 1], sizes = [32, 128], strides = [1, 1]} : vector<32x160xf32> to vector<32x128xf32>
    %243 = arith.truncf %242 : vector<32x128xf32> to vector<32x128xbf16>
    %cst_106 = arith.constant dense<0.000000e+00> : vector<16x128xf32>
    %244 = tpu.matmul %6, %243, %cst_106 {dimension_numbers = #tpu.dot_dimension_numbers<[1], [0], [0], [1], [0, 0, 1, 1], [], []>} : vector<16x32xbf16>, vector<32x128xbf16>, vector<16x128xf32> -> vector<16x128xf32>
    %245 = arith.addf %241, %244 : vector<16x128xf32>
    %246 = vector.extract_strided_slice %236 {offsets = [0, 2], sizes = [32, 128], strides = [1, 1]} : vector<32x160xf32> to vector<32x128xf32>
    %247 = arith.truncf %246 : vector<32x128xf32> to vector<32x128xbf16>
    %cst_107 = arith.constant dense<0.000000e+00> : vector<16x128xf32>
    %248 = tpu.matmul %8, %247, %cst_107 {dimension_numbers = #tpu.dot_dimension_numbers<[1], [0], [0], [1], [0, 0, 1, 1], [], []>} : vector<16x32xbf16>, vector<32x128xbf16>, vector<16x128xf32> -> vector<16x128xf32>
    %249 = arith.addf %245, %248 : vector<16x128xf32>
    %250 = vector.extract_strided_slice %236 {offsets = [0, 12], sizes = [32, 128], strides = [1, 1]} : vector<32x160xf32> to vector<32x128xf32>
    %251 = arith.truncf %250 : vector<32x128xf32> to vector<32x128xbf16>
    %cst_108 = arith.constant dense<0.000000e+00> : vector<16x128xf32>
    %252 = tpu.matmul %10, %251, %cst_108 {dimension_numbers = #tpu.dot_dimension_numbers<[1], [0], [0], [1], [0, 0, 1, 1], [], []>} : vector<16x32xbf16>, vector<32x128xbf16>, vector<16x128xf32> -> vector<16x128xf32>
    %253 = arith.addf %249, %252 : vector<16x128xf32>
    %254 = vector.extract_strided_slice %236 {offsets = [0, 13], sizes = [32, 128], strides = [1, 1]} : vector<32x160xf32> to vector<32x128xf32>
    %255 = arith.truncf %254 : vector<32x128xf32> to vector<32x128xbf16>
    %cst_109 = arith.constant dense<0.000000e+00> : vector<16x128xf32>
    %256 = tpu.matmul %12, %255, %cst_109 {dimension_numbers = #tpu.dot_dimension_numbers<[1], [0], [0], [1], [0, 0, 1, 1], [], []>} : vector<16x32xbf16>, vector<32x128xbf16>, vector<16x128xf32> -> vector<16x128xf32>
    %257 = arith.addf %253, %256 : vector<16x128xf32>
    %258 = vector.extract_strided_slice %236 {offsets = [0, 14], sizes = [32, 128], strides = [1, 1]} : vector<32x160xf32> to vector<32x128xf32>
    %259 = arith.truncf %258 : vector<32x128xf32> to vector<32x128xbf16>
    %cst_110 = arith.constant dense<0.000000e+00> : vector<16x128xf32>
    %260 = tpu.matmul %14, %259, %cst_110 {dimension_numbers = #tpu.dot_dimension_numbers<[1], [0], [0], [1], [0, 0, 1, 1], [], []>} : vector<16x32xbf16>, vector<32x128xbf16>, vector<16x128xf32> -> vector<16x128xf32>
    %261 = arith.addf %257, %260 : vector<16x128xf32>
    %262 = vector.extract_strided_slice %236 {offsets = [0, 24], sizes = [32, 128], strides = [1, 1]} : vector<32x160xf32> to vector<32x128xf32>
    %263 = arith.truncf %262 : vector<32x128xf32> to vector<32x128xbf16>
    %cst_111 = arith.constant dense<0.000000e+00> : vector<16x128xf32>
    %264 = tpu.matmul %16, %263, %cst_111 {dimension_numbers = #tpu.dot_dimension_numbers<[1], [0], [0], [1], [0, 0, 1, 1], [], []>} : vector<16x32xbf16>, vector<32x128xbf16>, vector<16x128xf32> -> vector<16x128xf32>
    %265 = arith.addf %261, %264 : vector<16x128xf32>
    %266 = vector.extract_strided_slice %236 {offsets = [0, 25], sizes = [32, 128], strides = [1, 1]} : vector<32x160xf32> to vector<32x128xf32>
    %267 = arith.truncf %266 : vector<32x128xf32> to vector<32x128xbf16>
    %cst_112 = arith.constant dense<0.000000e+00> : vector<16x128xf32>
    %268 = tpu.matmul %18, %267, %cst_112 {dimension_numbers = #tpu.dot_dimension_numbers<[1], [0], [0], [1], [0, 0, 1, 1], [], []>} : vector<16x32xbf16>, vector<32x128xbf16>, vector<16x128xf32> -> vector<16x128xf32>
    %269 = arith.addf %265, %268 : vector<16x128xf32>
    %270 = vector.extract_strided_slice %236 {offsets = [0, 26], sizes = [32, 128], strides = [1, 1]} : vector<32x160xf32> to vector<32x128xf32>
    %271 = arith.truncf %270 : vector<32x128xf32> to vector<32x128xbf16>
    %cst_113 = arith.constant dense<0.000000e+00> : vector<16x128xf32>
    %272 = tpu.matmul %20, %271, %cst_113 {dimension_numbers = #tpu.dot_dimension_numbers<[1], [0], [0], [1], [0, 0, 1, 1], [], []>} : vector<16x32xbf16>, vector<32x128xbf16>, vector<16x128xf32> -> vector<16x128xf32>
    %273 = arith.addf %269, %272 : vector<16x128xf32>
    %274 = vector.broadcast %2 : vector<16x1xf32> to vector<16x128xf32>
    %275 = arith.addf %273, %274 : vector<16x128xf32>
    %cst_114 = arith.constant 0.000000e+00 : f32
    %276 = vector.broadcast %cst_114 : f32 to vector<16x128xf32>
    %277 = arith.maximumf %275, %276 : vector<16x128xf32>
    %c4_115 = arith.constant 4 : index
    %c0_116 = arith.constant 0 : index
    %c0_117 = arith.constant 0 : index
    %278 = vector.load %arg6[%c4_115, %c0_116, %c0_117] : memref<8x16x128xf32, #tpu.memory_space<vmem>>, vector<1x16x128xf32>
    %279 = vector.shape_cast %278 : vector<1x16x128xf32> to vector<16x128xf32>
    %280 = vector.shape_cast %277 : vector<16x128xf32> to vector<1x16x128xf32>
    tpu.vector_store %arg6[%c4_115, %c0_116, %c0_117], %280 {strides = array<i32>} : memref<8x16x128xf32, #tpu.memory_space<vmem>>, vector<1x16x128xf32>,
    %c5_118 = arith.constant 5 : index
    %c0_119 = arith.constant 0 : index
    %c0_120 = arith.constant 0 : index
    %281 = vector.load %arg1[%c5_118, %c0_119, %c0_120] : memref<8x50x160xf32, #tpu.memory_space<vmem>>, vector<1x50x160xf32>
    %282 = vector.shape_cast %281 : vector<1x50x160xf32> to vector<50x160xf32>
    %283 = arith.truncf %282 : vector<50x160xf32> to vector<50x160xbf16>
    %cst_121 = arith.constant dense<0.000000e+00> : vector<32x160xf32>
    %284 = tpu.matmul %0, %283, %cst_121 {dimension_numbers = #tpu.dot_dimension_numbers<[1], [0], [0], [1], [0, 0, 1, 1], [], []>} : vector<32x50xbf16>, vector<50x160xbf16>, vector<32x160xf32> -> vector<32x160xf32>
    %285 = vector.broadcast %1 : vector<32x1xf32> to vector<32x160xf32>
    %286 = arith.addf %284, %285 : vector<32x160xf32>
    %cst_122 = arith.constant 0.000000e+00 : f32
    %287 = vector.broadcast %cst_122 : f32 to vector<32x160xf32>
    %288 = arith.maximumf %286, %287 : vector<32x160xf32>
    %cst_123 = arith.constant 0.000000e+00 : f32
    %289 = vector.broadcast %cst_123 : f32 to vector<16x128xf32>
    %290 = vector.extract_strided_slice %288 {offsets = [0, 0], sizes = [32, 128], strides = [1, 1]} : vector<32x160xf32> to vector<32x128xf32>
    %291 = arith.truncf %290 : vector<32x128xf32> to vector<32x128xbf16>
    %cst_124 = arith.constant dense<0.000000e+00> : vector<16x128xf32>
    %292 = tpu.matmul %4, %291, %cst_124 {dimension_numbers = #tpu.dot_dimension_numbers<[1], [0], [0], [1], [0, 0, 1, 1], [], []>} : vector<16x32xbf16>, vector<32x128xbf16>, vector<16x128xf32> -> vector<16x128xf32>
    %293 = arith.addf %289, %292 : vector<16x128xf32>
    %294 = vector.extract_strided_slice %288 {offsets = [0, 1], sizes = [32, 128], strides = [1, 1]} : vector<32x160xf32> to vector<32x128xf32>
    %295 = arith.truncf %294 : vector<32x128xf32> to vector<32x128xbf16>
    %cst_125 = arith.constant dense<0.000000e+00> : vector<16x128xf32>
    %296 = tpu.matmul %6, %295, %cst_125 {dimension_numbers = #tpu.dot_dimension_numbers<[1], [0], [0], [1], [0, 0, 1, 1], [], []>} : vector<16x32xbf16>, vector<32x128xbf16>, vector<16x128xf32> -> vector<16x128xf32>
    %297 = arith.addf %293, %296 : vector<16x128xf32>
    %298 = vector.extract_strided_slice %288 {offsets = [0, 2], sizes = [32, 128], strides = [1, 1]} : vector<32x160xf32> to vector<32x128xf32>
    %299 = arith.truncf %298 : vector<32x128xf32> to vector<32x128xbf16>
    %cst_126 = arith.constant dense<0.000000e+00> : vector<16x128xf32>
    %300 = tpu.matmul %8, %299, %cst_126 {dimension_numbers = #tpu.dot_dimension_numbers<[1], [0], [0], [1], [0, 0, 1, 1], [], []>} : vector<16x32xbf16>, vector<32x128xbf16>, vector<16x128xf32> -> vector<16x128xf32>
    %301 = arith.addf %297, %300 : vector<16x128xf32>
    %302 = vector.extract_strided_slice %288 {offsets = [0, 12], sizes = [32, 128], strides = [1, 1]} : vector<32x160xf32> to vector<32x128xf32>
    %303 = arith.truncf %302 : vector<32x128xf32> to vector<32x128xbf16>
    %cst_127 = arith.constant dense<0.000000e+00> : vector<16x128xf32>
    %304 = tpu.matmul %10, %303, %cst_127 {dimension_numbers = #tpu.dot_dimension_numbers<[1], [0], [0], [1], [0, 0, 1, 1], [], []>} : vector<16x32xbf16>, vector<32x128xbf16>, vector<16x128xf32> -> vector<16x128xf32>
    %305 = arith.addf %301, %304 : vector<16x128xf32>
    %306 = vector.extract_strided_slice %288 {offsets = [0, 13], sizes = [32, 128], strides = [1, 1]} : vector<32x160xf32> to vector<32x128xf32>
    %307 = arith.truncf %306 : vector<32x128xf32> to vector<32x128xbf16>
    %cst_128 = arith.constant dense<0.000000e+00> : vector<16x128xf32>
    %308 = tpu.matmul %12, %307, %cst_128 {dimension_numbers = #tpu.dot_dimension_numbers<[1], [0], [0], [1], [0, 0, 1, 1], [], []>} : vector<16x32xbf16>, vector<32x128xbf16>, vector<16x128xf32> -> vector<16x128xf32>
    %309 = arith.addf %305, %308 : vector<16x128xf32>
    %310 = vector.extract_strided_slice %288 {offsets = [0, 14], sizes = [32, 128], strides = [1, 1]} : vector<32x160xf32> to vector<32x128xf32>
    %311 = arith.truncf %310 : vector<32x128xf32> to vector<32x128xbf16>
    %cst_129 = arith.constant dense<0.000000e+00> : vector<16x128xf32>
    %312 = tpu.matmul %14, %311, %cst_129 {dimension_numbers = #tpu.dot_dimension_numbers<[1], [0], [0], [1], [0, 0, 1, 1], [], []>} : vector<16x32xbf16>, vector<32x128xbf16>, vector<16x128xf32> -> vector<16x128xf32>
    %313 = arith.addf %309, %312 : vector<16x128xf32>
    %314 = vector.extract_strided_slice %288 {offsets = [0, 24], sizes = [32, 128], strides = [1, 1]} : vector<32x160xf32> to vector<32x128xf32>
    %315 = arith.truncf %314 : vector<32x128xf32> to vector<32x128xbf16>
    %cst_130 = arith.constant dense<0.000000e+00> : vector<16x128xf32>
    %316 = tpu.matmul %16, %315, %cst_130 {dimension_numbers = #tpu.dot_dimension_numbers<[1], [0], [0], [1], [0, 0, 1, 1], [], []>} : vector<16x32xbf16>, vector<32x128xbf16>, vector<16x128xf32> -> vector<16x128xf32>
    %317 = arith.addf %313, %316 : vector<16x128xf32>
    %318 = vector.extract_strided_slice %288 {offsets = [0, 25], sizes = [32, 128], strides = [1, 1]} : vector<32x160xf32> to vector<32x128xf32>
    %319 = arith.truncf %318 : vector<32x128xf32> to vector<32x128xbf16>
    %cst_131 = arith.constant dense<0.000000e+00> : vector<16x128xf32>
    %320 = tpu.matmul %18, %319, %cst_131 {dimension_numbers = #tpu.dot_dimension_numbers<[1], [0], [0], [1], [0, 0, 1, 1], [], []>} : vector<16x32xbf16>, vector<32x128xbf16>, vector<16x128xf32> -> vector<16x128xf32>
    %321 = arith.addf %317, %320 : vector<16x128xf32>
    %322 = vector.extract_strided_slice %288 {offsets = [0, 26], sizes = [32, 128], strides = [1, 1]} : vector<32x160xf32> to vector<32x128xf32>
    %323 = arith.truncf %322 : vector<32x128xf32> to vector<32x128xbf16>
    %cst_132 = arith.constant dense<0.000000e+00> : vector<16x128xf32>
    %324 = tpu.matmul %20, %323, %cst_132 {dimension_numbers = #tpu.dot_dimension_numbers<[1], [0], [0], [1], [0, 0, 1, 1], [], []>} : vector<16x32xbf16>, vector<32x128xbf16>, vector<16x128xf32> -> vector<16x128xf32>
    %325 = arith.addf %321, %324 : vector<16x128xf32>
    %326 = vector.broadcast %2 : vector<16x1xf32> to vector<16x128xf32>
    %327 = arith.addf %325, %326 : vector<16x128xf32>
    %cst_133 = arith.constant 0.000000e+00 : f32
    %328 = vector.broadcast %cst_133 : f32 to vector<16x128xf32>
    %329 = arith.maximumf %327, %328 : vector<16x128xf32>
    %c5_134 = arith.constant 5 : index
    %c0_135 = arith.constant 0 : index
    %c0_136 = arith.constant 0 : index
    %330 = vector.load %arg6[%c5_134, %c0_135, %c0_136] : memref<8x16x128xf32, #tpu.memory_space<vmem>>, vector<1x16x128xf32>
    %331 = vector.shape_cast %330 : vector<1x16x128xf32> to vector<16x128xf32>
    %332 = vector.shape_cast %329 : vector<16x128xf32> to vector<1x16x128xf32>
    tpu.vector_store %arg6[%c5_134, %c0_135, %c0_136], %332 {strides = array<i32>} : memref<8x16x128xf32, #tpu.memory_space<vmem>>, vector<1x16x128xf32>,
    %c6_137 = arith.constant 6 : index
    %c0_138 = arith.constant 0 : index
    %c0_139 = arith.constant 0 : index
    %333 = vector.load %arg1[%c6_137, %c0_138, %c0_139] : memref<8x50x160xf32, #tpu.memory_space<vmem>>, vector<1x50x160xf32>
    %334 = vector.shape_cast %333 : vector<1x50x160xf32> to vector<50x160xf32>
    %335 = arith.truncf %334 : vector<50x160xf32> to vector<50x160xbf16>
    %cst_140 = arith.constant dense<0.000000e+00> : vector<32x160xf32>
    %336 = tpu.matmul %0, %335, %cst_140 {dimension_numbers = #tpu.dot_dimension_numbers<[1], [0], [0], [1], [0, 0, 1, 1], [], []>} : vector<32x50xbf16>, vector<50x160xbf16>, vector<32x160xf32> -> vector<32x160xf32>
    %337 = vector.broadcast %1 : vector<32x1xf32> to vector<32x160xf32>
    %338 = arith.addf %336, %337 : vector<32x160xf32>
    %cst_141 = arith.constant 0.000000e+00 : f32
    %339 = vector.broadcast %cst_141 : f32 to vector<32x160xf32>
    %340 = arith.maximumf %338, %339 : vector<32x160xf32>
    %cst_142 = arith.constant 0.000000e+00 : f32
    %341 = vector.broadcast %cst_142 : f32 to vector<16x128xf32>
    %342 = vector.extract_strided_slice %340 {offsets = [0, 0], sizes = [32, 128], strides = [1, 1]} : vector<32x160xf32> to vector<32x128xf32>
    %343 = arith.truncf %342 : vector<32x128xf32> to vector<32x128xbf16>
    %cst_143 = arith.constant dense<0.000000e+00> : vector<16x128xf32>
    %344 = tpu.matmul %4, %343, %cst_143 {dimension_numbers = #tpu.dot_dimension_numbers<[1], [0], [0], [1], [0, 0, 1, 1], [], []>} : vector<16x32xbf16>, vector<32x128xbf16>, vector<16x128xf32> -> vector<16x128xf32>
    %345 = arith.addf %341, %344 : vector<16x128xf32>
    %346 = vector.extract_strided_slice %340 {offsets = [0, 1], sizes = [32, 128], strides = [1, 1]} : vector<32x160xf32> to vector<32x128xf32>
    %347 = arith.truncf %346 : vector<32x128xf32> to vector<32x128xbf16>
    %cst_144 = arith.constant dense<0.000000e+00> : vector<16x128xf32>
    %348 = tpu.matmul %6, %347, %cst_144 {dimension_numbers = #tpu.dot_dimension_numbers<[1], [0], [0], [1], [0, 0, 1, 1], [], []>} : vector<16x32xbf16>, vector<32x128xbf16>, vector<16x128xf32> -> vector<16x128xf32>
    %349 = arith.addf %345, %348 : vector<16x128xf32>
    %350 = vector.extract_strided_slice %340 {offsets = [0, 2], sizes = [32, 128], strides = [1, 1]} : vector<32x160xf32> to vector<32x128xf32>
    %351 = arith.truncf %350 : vector<32x128xf32> to vector<32x128xbf16>
    %cst_145 = arith.constant dense<0.000000e+00> : vector<16x128xf32>
    %352 = tpu.matmul %8, %351, %cst_145 {dimension_numbers = #tpu.dot_dimension_numbers<[1], [0], [0], [1], [0, 0, 1, 1], [], []>} : vector<16x32xbf16>, vector<32x128xbf16>, vector<16x128xf32> -> vector<16x128xf32>
    %353 = arith.addf %349, %352 : vector<16x128xf32>
    %354 = vector.extract_strided_slice %340 {offsets = [0, 12], sizes = [32, 128], strides = [1, 1]} : vector<32x160xf32> to vector<32x128xf32>
    %355 = arith.truncf %354 : vector<32x128xf32> to vector<32x128xbf16>
    %cst_146 = arith.constant dense<0.000000e+00> : vector<16x128xf32>
    %356 = tpu.matmul %10, %355, %cst_146 {dimension_numbers = #tpu.dot_dimension_numbers<[1], [0], [0], [1], [0, 0, 1, 1], [], []>} : vector<16x32xbf16>, vector<32x128xbf16>, vector<16x128xf32> -> vector<16x128xf32>
    %357 = arith.addf %353, %356 : vector<16x128xf32>
    %358 = vector.extract_strided_slice %340 {offsets = [0, 13], sizes = [32, 128], strides = [1, 1]} : vector<32x160xf32> to vector<32x128xf32>
    %359 = arith.truncf %358 : vector<32x128xf32> to vector<32x128xbf16>
    %cst_147 = arith.constant dense<0.000000e+00> : vector<16x128xf32>
    %360 = tpu.matmul %12, %359, %cst_147 {dimension_numbers = #tpu.dot_dimension_numbers<[1], [0], [0], [1], [0, 0, 1, 1], [], []>} : vector<16x32xbf16>, vector<32x128xbf16>, vector<16x128xf32> -> vector<16x128xf32>
    %361 = arith.addf %357, %360 : vector<16x128xf32>
    %362 = vector.extract_strided_slice %340 {offsets = [0, 14], sizes = [32, 128], strides = [1, 1]} : vector<32x160xf32> to vector<32x128xf32>
    %363 = arith.truncf %362 : vector<32x128xf32> to vector<32x128xbf16>
    %cst_148 = arith.constant dense<0.000000e+00> : vector<16x128xf32>
    %364 = tpu.matmul %14, %363, %cst_148 {dimension_numbers = #tpu.dot_dimension_numbers<[1], [0], [0], [1], [0, 0, 1, 1], [], []>} : vector<16x32xbf16>, vector<32x128xbf16>, vector<16x128xf32> -> vector<16x128xf32>
    %365 = arith.addf %361, %364 : vector<16x128xf32>
    %366 = vector.extract_strided_slice %340 {offsets = [0, 24], sizes = [32, 128], strides = [1, 1]} : vector<32x160xf32> to vector<32x128xf32>
    %367 = arith.truncf %366 : vector<32x128xf32> to vector<32x128xbf16>
    %cst_149 = arith.constant dense<0.000000e+00> : vector<16x128xf32>
    %368 = tpu.matmul %16, %367, %cst_149 {dimension_numbers = #tpu.dot_dimension_numbers<[1], [0], [0], [1], [0, 0, 1, 1], [], []>} : vector<16x32xbf16>, vector<32x128xbf16>, vector<16x128xf32> -> vector<16x128xf32>
    %369 = arith.addf %365, %368 : vector<16x128xf32>
    %370 = vector.extract_strided_slice %340 {offsets = [0, 25], sizes = [32, 128], strides = [1, 1]} : vector<32x160xf32> to vector<32x128xf32>
    %371 = arith.truncf %370 : vector<32x128xf32> to vector<32x128xbf16>
    %cst_150 = arith.constant dense<0.000000e+00> : vector<16x128xf32>
    %372 = tpu.matmul %18, %371, %cst_150 {dimension_numbers = #tpu.dot_dimension_numbers<[1], [0], [0], [1], [0, 0, 1, 1], [], []>} : vector<16x32xbf16>, vector<32x128xbf16>, vector<16x128xf32> -> vector<16x128xf32>
    %373 = arith.addf %369, %372 : vector<16x128xf32>
    %374 = vector.extract_strided_slice %340 {offsets = [0, 26], sizes = [32, 128], strides = [1, 1]} : vector<32x160xf32> to vector<32x128xf32>
    %375 = arith.truncf %374 : vector<32x128xf32> to vector<32x128xbf16>
    %cst_151 = arith.constant dense<0.000000e+00> : vector<16x128xf32>
    %376 = tpu.matmul %20, %375, %cst_151 {dimension_numbers = #tpu.dot_dimension_numbers<[1], [0], [0], [1], [0, 0, 1, 1], [], []>} : vector<16x32xbf16>, vector<32x128xbf16>, vector<16x128xf32> -> vector<16x128xf32>
    %377 = arith.addf %373, %376 : vector<16x128xf32>
    %378 = vector.broadcast %2 : vector<16x1xf32> to vector<16x128xf32>
    %379 = arith.addf %377, %378 : vector<16x128xf32>
    %cst_152 = arith.constant 0.000000e+00 : f32
    %380 = vector.broadcast %cst_152 : f32 to vector<16x128xf32>
    %381 = arith.maximumf %379, %380 : vector<16x128xf32>
    %c6_153 = arith.constant 6 : index
    %c0_154 = arith.constant 0 : index
    %c0_155 = arith.constant 0 : index
    %382 = vector.load %arg6[%c6_153, %c0_154, %c0_155] : memref<8x16x128xf32, #tpu.memory_space<vmem>>, vector<1x16x128xf32>
    %383 = vector.shape_cast %382 : vector<1x16x128xf32> to vector<16x128xf32>
    %384 = vector.shape_cast %381 : vector<16x128xf32> to vector<1x16x128xf32>
    tpu.vector_store %arg6[%c6_153, %c0_154, %c0_155], %384 {strides = array<i32>} : memref<8x16x128xf32, #tpu.memory_space<vmem>>, vector<1x16x128xf32>,
    %c7_156 = arith.constant 7 : index
    %c0_157 = arith.constant 0 : index
    %c0_158 = arith.constant 0 : index
    %385 = vector.load %arg1[%c7_156, %c0_157, %c0_158] : memref<8x50x160xf32, #tpu.memory_space<vmem>>, vector<1x50x160xf32>
    %386 = vector.shape_cast %385 : vector<1x50x160xf32> to vector<50x160xf32>
    %387 = arith.truncf %386 : vector<50x160xf32> to vector<50x160xbf16>
    %cst_159 = arith.constant dense<0.000000e+00> : vector<32x160xf32>
    %388 = tpu.matmul %0, %387, %cst_159 {dimension_numbers = #tpu.dot_dimension_numbers<[1], [0], [0], [1], [0, 0, 1, 1], [], []>} : vector<32x50xbf16>, vector<50x160xbf16>, vector<32x160xf32> -> vector<32x160xf32>
    %389 = vector.broadcast %1 : vector<32x1xf32> to vector<32x160xf32>
    %390 = arith.addf %388, %389 : vector<32x160xf32>
    %cst_160 = arith.constant 0.000000e+00 : f32
    %391 = vector.broadcast %cst_160 : f32 to vector<32x160xf32>
    %392 = arith.maximumf %390, %391 : vector<32x160xf32>
    %cst_161 = arith.constant 0.000000e+00 : f32
    %393 = vector.broadcast %cst_161 : f32 to vector<16x128xf32>
    %394 = vector.extract_strided_slice %392 {offsets = [0, 0], sizes = [32, 128], strides = [1, 1]} : vector<32x160xf32> to vector<32x128xf32>
    %395 = arith.truncf %394 : vector<32x128xf32> to vector<32x128xbf16>
    %cst_162 = arith.constant dense<0.000000e+00> : vector<16x128xf32>
    %396 = tpu.matmul %4, %395, %cst_162 {dimension_numbers = #tpu.dot_dimension_numbers<[1], [0], [0], [1], [0, 0, 1, 1], [], []>} : vector<16x32xbf16>, vector<32x128xbf16>, vector<16x128xf32> -> vector<16x128xf32>
    %397 = arith.addf %393, %396 : vector<16x128xf32>
    %398 = vector.extract_strided_slice %392 {offsets = [0, 1], sizes = [32, 128], strides = [1, 1]} : vector<32x160xf32> to vector<32x128xf32>
    %399 = arith.truncf %398 : vector<32x128xf32> to vector<32x128xbf16>
    %cst_163 = arith.constant dense<0.000000e+00> : vector<16x128xf32>
    %400 = tpu.matmul %6, %399, %cst_163 {dimension_numbers = #tpu.dot_dimension_numbers<[1], [0], [0], [1], [0, 0, 1, 1], [], []>} : vector<16x32xbf16>, vector<32x128xbf16>, vector<16x128xf32> -> vector<16x128xf32>
    %401 = arith.addf %397, %400 : vector<16x128xf32>
    %402 = vector.extract_strided_slice %392 {offsets = [0, 2], sizes = [32, 128], strides = [1, 1]} : vector<32x160xf32> to vector<32x128xf32>
    %403 = arith.truncf %402 : vector<32x128xf32> to vector<32x128xbf16>
    %cst_164 = arith.constant dense<0.000000e+00> : vector<16x128xf32>
    %404 = tpu.matmul %8, %403, %cst_164 {dimension_numbers = #tpu.dot_dimension_numbers<[1], [0], [0], [1], [0, 0, 1, 1], [], []>} : vector<16x32xbf16>, vector<32x128xbf16>, vector<16x128xf32> -> vector<16x128xf32>
    %405 = arith.addf %401, %404 : vector<16x128xf32>
    %406 = vector.extract_strided_slice %392 {offsets = [0, 12], sizes = [32, 128], strides = [1, 1]} : vector<32x160xf32> to vector<32x128xf32>
    %407 = arith.truncf %406 : vector<32x128xf32> to vector<32x128xbf16>
    %cst_165 = arith.constant dense<0.000000e+00> : vector<16x128xf32>
    %408 = tpu.matmul %10, %407, %cst_165 {dimension_numbers = #tpu.dot_dimension_numbers<[1], [0], [0], [1], [0, 0, 1, 1], [], []>} : vector<16x32xbf16>, vector<32x128xbf16>, vector<16x128xf32> -> vector<16x128xf32>
    %409 = arith.addf %405, %408 : vector<16x128xf32>
    %410 = vector.extract_strided_slice %392 {offsets = [0, 13], sizes = [32, 128], strides = [1, 1]} : vector<32x160xf32> to vector<32x128xf32>
    %411 = arith.truncf %410 : vector<32x128xf32> to vector<32x128xbf16>
    %cst_166 = arith.constant dense<0.000000e+00> : vector<16x128xf32>
    %412 = tpu.matmul %12, %411, %cst_166 {dimension_numbers = #tpu.dot_dimension_numbers<[1], [0], [0], [1], [0, 0, 1, 1], [], []>} : vector<16x32xbf16>, vector<32x128xbf16>, vector<16x128xf32> -> vector<16x128xf32>
    %413 = arith.addf %409, %412 : vector<16x128xf32>
    %414 = vector.extract_strided_slice %392 {offsets = [0, 14], sizes = [32, 128], strides = [1, 1]} : vector<32x160xf32> to vector<32x128xf32>
    %415 = arith.truncf %414 : vector<32x128xf32> to vector<32x128xbf16>
    %cst_167 = arith.constant dense<0.000000e+00> : vector<16x128xf32>
    %416 = tpu.matmul %14, %415, %cst_167 {dimension_numbers = #tpu.dot_dimension_numbers<[1], [0], [0], [1], [0, 0, 1, 1], [], []>} : vector<16x32xbf16>, vector<32x128xbf16>, vector<16x128xf32> -> vector<16x128xf32>
    %417 = arith.addf %413, %416 : vector<16x128xf32>
    %418 = vector.extract_strided_slice %392 {offsets = [0, 24], sizes = [32, 128], strides = [1, 1]} : vector<32x160xf32> to vector<32x128xf32>
    %419 = arith.truncf %418 : vector<32x128xf32> to vector<32x128xbf16>
    %cst_168 = arith.constant dense<0.000000e+00> : vector<16x128xf32>
    %420 = tpu.matmul %16, %419, %cst_168 {dimension_numbers = #tpu.dot_dimension_numbers<[1], [0], [0], [1], [0, 0, 1, 1], [], []>} : vector<16x32xbf16>, vector<32x128xbf16>, vector<16x128xf32> -> vector<16x128xf32>
    %421 = arith.addf %417, %420 : vector<16x128xf32>
    %422 = vector.extract_strided_slice %392 {offsets = [0, 25], sizes = [32, 128], strides = [1, 1]} : vector<32x160xf32> to vector<32x128xf32>
    %423 = arith.truncf %422 : vector<32x128xf32> to vector<32x128xbf16>
    %cst_169 = arith.constant dense<0.000000e+00> : vector<16x128xf32>
    %424 = tpu.matmul %18, %423, %cst_169 {dimension_numbers = #tpu.dot_dimension_numbers<[1], [0], [0], [1], [0, 0, 1, 1], [], []>} : vector<16x32xbf16>, vector<32x128xbf16>, vector<16x128xf32> -> vector<16x128xf32>
    %425 = arith.addf %421, %424 : vector<16x128xf32>
    %426 = vector.extract_strided_slice %392 {offsets = [0, 26], sizes = [32, 128], strides = [1, 1]} : vector<32x160xf32> to vector<32x128xf32>
    %427 = arith.truncf %426 : vector<32x128xf32> to vector<32x128xbf16>
    %cst_170 = arith.constant dense<0.000000e+00> : vector<16x128xf32>
    %428 = tpu.matmul %20, %427, %cst_170 {dimension_numbers = #tpu.dot_dimension_numbers<[1], [0], [0], [1], [0, 0, 1, 1], [], []>} : vector<16x32xbf16>, vector<32x128xbf16>, vector<16x128xf32> -> vector<16x128xf32>
    %429 = arith.addf %425, %428 : vector<16x128xf32>
    %430 = vector.broadcast %2 : vector<16x1xf32> to vector<16x128xf32>
    %431 = arith.addf %429, %430 : vector<16x128xf32>
    %cst_171 = arith.constant 0.000000e+00 : f32
    %432 = vector.broadcast %cst_171 : f32 to vector<16x128xf32>
    %433 = arith.maximumf %431, %432 : vector<16x128xf32>
    %c7_172 = arith.constant 7 : index
    %c0_173 = arith.constant 0 : index
    %c0_174 = arith.constant 0 : index
    %434 = vector.load %arg6[%c7_172, %c0_173, %c0_174] : memref<8x16x128xf32, #tpu.memory_space<vmem>>, vector<1x16x128xf32>
    %435 = vector.shape_cast %434 : vector<1x16x128xf32> to vector<16x128xf32>
    %436 = vector.shape_cast %433 : vector<16x128xf32> to vector<1x16x128xf32>
    tpu.vector_store %arg6[%c7_172, %c0_173, %c0_174], %436 {strides = array<i32>} : memref<8x16x128xf32, #tpu.memory_space<vmem>>, vector<1x16x128xf32>,
    return
  }
  func.func @transform_0(%arg0: i32) -> (i32, i32, i32) {
    %c0_i32 = arith.constant 0 : i32
    %c0_i32_0 = arith.constant 0 : i32
    %c0_i32_1 = arith.constant 0 : i32
    return %arg0, %c0_i32, %c0_i32_0 : i32, i32, i32
  }
  func.func @transform_1(%arg0: i32) -> (i32, i32) {
    %c0_i32 = arith.constant 0 : i32
    %c0_i32_0 = arith.constant 0 : i32
    %c0_i32_1 = arith.constant 0 : i32
    return %c0_i32, %c0_i32_0 : i32, i32
  }
  func.func @transform_2(%arg0: i32) -> (i32, i32) {
    %c0_i32 = arith.constant 0 : i32
    %c0_i32_0 = arith.constant 0 : i32
    %c0_i32_1 = arith.constant 0 : i32
    return %c0_i32, %c0_i32_0 : i32, i32
  }
  func.func @transform_3(%arg0: i32) -> (i32, i32, i32) {
    %c0_i32 = arith.constant 0 : i32
    %c0_i32_0 = arith.constant 0 : i32
    %c0_i32_1 = arith.constant 0 : i32
    %c0_i32_2 = arith.constant 0 : i32
    return %c0_i32, %c0_i32_0, %c0_i32_1 : i32, i32, i32
  }
  func.func @transform_4(%arg0: i32) -> (i32, i32) {
    %c0_i32 = arith.constant 0 : i32
    %c0_i32_0 = arith.constant 0 : i32
    %c0_i32_1 = arith.constant 0 : i32
    return %c0_i32, %c0_i32_0 : i32, i32
  }
  func.func @transform_5(%arg0: i32) -> (i32, i32, i32) {
    %c0_i32 = arith.constant 0 : i32
    %c0_i32_0 = arith.constant 0 : i32
    %c0_i32_1 = arith.constant 0 : i32
    return %arg0, %c0_i32, %c0_i32_0 : i32, i32, i32
  }
}

module attributes {stable_mosaic.version = 11 : i64} {
  func.func @_fc_kernel(%arg0: i32, %arg1: memref<8x1600xf32, #tpu.memory_space<vmem>>, %arg2: memref<1600x256xbf16, #tpu.memory_space<vmem>>, %arg3: memref<1x256xf32, #tpu.memory_space<vmem>>, %arg4: memref<256x128xbf16, #tpu.memory_space<vmem>>, %arg5: memref<1x128xf32, #tpu.memory_space<vmem>>, %arg6: memref<8x128xf32, #tpu.memory_space<vmem>>) attributes {dimension_semantics = [#tpu.dimension_semantics<parallel>], iteration_bounds = array<i64: 1>, scalar_prefetch = 0 : i64, scratch_operands = 0 : i64, tpu.core_type = #tpu.core_type<tc>, window_params = [{transform_indices = @transform_0, window_bounds = array<i64: 8, 1600>}, {pipeline_mode = #tpu.pipeline_mode<synchronous>, transform_indices = @transform_1, window_bounds = array<i64: 1600, 256>}, {pipeline_mode = #tpu.pipeline_mode<synchronous>, transform_indices = @transform_2, window_bounds = array<i64: 1, 256>}, {pipeline_mode = #tpu.pipeline_mode<synchronous>, transform_indices = @transform_3, window_bounds = array<i64: 256, 128>}, {pipeline_mode = #tpu.pipeline_mode<synchronous>, transform_indices = @transform_4, window_bounds = array<i64: 1, 128>}, {transform_indices = @transform_5, window_bounds = array<i64: 8, 128>}]} {
    %c0 = arith.constant 0 : index
    %c0_0 = arith.constant 0 : index
    %0 = vector.load %arg1[%c0, %c0_0] : memref<8x1600xf32, #tpu.memory_space<vmem>>, vector<8x1600xf32>
    %1 = arith.truncf %0 : vector<8x1600xf32> to vector<8x1600xbf16>
    %c0_1 = arith.constant 0 : index
    %c0_2 = arith.constant 0 : index
    %2 = vector.load %arg2[%c0_1, %c0_2] : memref<1600x256xbf16, #tpu.memory_space<vmem>>, vector<1600x256xbf16>
    %cst = arith.constant dense<0.000000e+00> : vector<8x256xf32>
    %3 = tpu.matmul %1, %2, %cst {dimension_numbers = #tpu.dot_dimension_numbers<[1], [0], [0], [1], [0, 0, 1, 1], [], []>} : vector<8x1600xbf16>, vector<1600x256xbf16>, vector<8x256xf32> -> vector<8x256xf32>
    %c0_3 = arith.constant 0 : index
    %c0_4 = arith.constant 0 : index
    %4 = vector.load %arg3[%c0_3, %c0_4] : memref<1x256xf32, #tpu.memory_space<vmem>>, vector<1x256xf32>
    %5 = vector.broadcast %4 : vector<1x256xf32> to vector<8x256xf32>
    %6 = arith.addf %3, %5 : vector<8x256xf32>
    %cst_5 = arith.constant 0.000000e+00 : f32
    %7 = vector.broadcast %cst_5 : f32 to vector<8x256xf32>
    %8 = arith.maximumf %6, %7 : vector<8x256xf32>
    %9 = arith.truncf %8 : vector<8x256xf32> to vector<8x256xbf16>
    %c0_6 = arith.constant 0 : index
    %c0_7 = arith.constant 0 : index
    %10 = vector.load %arg4[%c0_6, %c0_7] : memref<256x128xbf16, #tpu.memory_space<vmem>>, vector<256x128xbf16>
    %cst_8 = arith.constant dense<0.000000e+00> : vector<8x128xf32>
    %11 = tpu.matmul %9, %10, %cst_8 {dimension_numbers = #tpu.dot_dimension_numbers<[1], [0], [0], [1], [0, 0, 1, 1], [], []>} : vector<8x256xbf16>, vector<256x128xbf16>, vector<8x128xf32> -> vector<8x128xf32>
    %c0_9 = arith.constant 0 : index
    %c0_10 = arith.constant 0 : index
    %12 = vector.load %arg5[%c0_9, %c0_10] : memref<1x128xf32, #tpu.memory_space<vmem>>, vector<1x128xf32>
    %13 = vector.broadcast %12 : vector<1x128xf32> to vector<8x128xf32>
    %14 = arith.addf %11, %13 : vector<8x128xf32>
    %c0_11 = arith.constant 0 : index
    %c0_12 = arith.constant 0 : index
    %15 = vector.load %arg6[%c0_11, %c0_12] : memref<8x128xf32, #tpu.memory_space<vmem>>, vector<8x128xf32>
    tpu.vector_store %arg6[%c0_11, %c0_12], %14 {strides = array<i32>} : memref<8x128xf32, #tpu.memory_space<vmem>>, vector<8x128xf32>,
    return
  }
  func.func @transform_0(%arg0: i32) -> (i32, i32) {
    %c0_i32 = arith.constant 0 : i32
    %c0_i32_0 = arith.constant 0 : i32
    return %arg0, %c0_i32 : i32, i32
  }
  func.func @transform_1(%arg0: i32) -> (i32, i32) {
    %c0_i32 = arith.constant 0 : i32
    %c0_i32_0 = arith.constant 0 : i32
    %c0_i32_1 = arith.constant 0 : i32
    return %c0_i32, %c0_i32_0 : i32, i32
  }
  func.func @transform_2(%arg0: i32) -> (i32, i32) {
    %c0_i32 = arith.constant 0 : i32
    %c0_i32_0 = arith.constant 0 : i32
    %c0_i32_1 = arith.constant 0 : i32
    return %c0_i32, %c0_i32_0 : i32, i32
  }
  func.func @transform_3(%arg0: i32) -> (i32, i32) {
    %c0_i32 = arith.constant 0 : i32
    %c0_i32_0 = arith.constant 0 : i32
    %c0_i32_1 = arith.constant 0 : i32
    return %c0_i32, %c0_i32_0 : i32, i32
  }
  func.func @transform_4(%arg0: i32) -> (i32, i32) {
    %c0_i32 = arith.constant 0 : i32
    %c0_i32_0 = arith.constant 0 : i32
    %c0_i32_1 = arith.constant 0 : i32
    return %c0_i32, %c0_i32_0 : i32, i32
  }
  func.func @transform_5(%arg0: i32) -> (i32, i32) {
    %c0_i32 = arith.constant 0 : i32
    %c0_i32_0 = arith.constant 0 : i32
    return %arg0, %c0_i32 : i32, i32
  }
}

</mosaic_0001>

<llo_original>
// kernel: squeeze.61
$region0: #{squeeze.61}
  %s0 = inlined_call_operand.vmem [shape: f32[2,1,12,12], index: 0, kind: input, shape index: {}]
  %s1 = inlined_call_operand.vmem [shape: f32[2,1,144], index: 1, kind: output, shape index: {}]
  $region1: #{squeeze.61} parent=0
    #allocation0 [shape = 'u8[16384]{0}', space=vmem, size = 0x4000, scoped, tag = 'scoped mem for output reshape']
    %s2 = smov 3
    %v3 = vld [vmem:[%s0] ss:$16 sm:%s2]
    %vm4 = vcmask 97280
    %5 = vst.msk [vmem:[#allocation0] ss:$16 sm:$0x3] %vm4, %v3
    %s6 = scalar_lea.vmem %s0, 10
    %s7 = smov 3
    %v8 = vld [vmem:[%s6] ss:$16 sm:%s7]
    %s9 = scalar_lea.vmem %s0, 10
    %s10 = smov 3
    %v11 = vld [vmem:[%s9] ss:$16 sm:%s10]
    %vm12 = vcmask 64512
    %v13 = vsel %vm12, %v11, %v8
    %14 = vrot.lane.b32.xlu0 %v13, 120
    %v15 = vpop.permute.xlu0 %14
    %vm16 = vcmask 31744
    %s17 = scalar_lea.vmem [#allocation0], 8
    %18 = vst.msk [vmem:[%s17] ss:$16 sm:$0x3] %vm16, %v15
    %vm19 = vcmask 1048512
    %20 = vst.msk [vmem:[#allocation0] ss:$16 sm:$0x3] %vm19, %v15
    %s21 = scalar_lea.vmem %s0, 9
    %s22 = smov 3
    %v23 = vld [vmem:[%s21] ss:$16 sm:%s22]
    %24 = vrot.lane.b32.xlu0 %v23, 108
    %v25 = vpop.permute.xlu0 %24
    %vm26 = vcmask 982880
    %27 = vst.msk [vmem:[#allocation0] ss:$16 sm:$0x3] %vm26, %v25
    %s28 = scalar_lea.vmem %s0, 8
    %s29 = smov 3
    %v30 = vld [vmem:[%s28] ss:$16 sm:%s29]
    %31 = vrot.lane.b32.xlu0 %v30, 96
    %v32 = vpop.permute.xlu0 %31
    %vm33 = vcmask 884480
    %34 = vst.msk [vmem:[#allocation0] ss:$16 sm:$0x3] %vm33, %v32
    %s35 = scalar_lea.vmem %s0, 7
    %s36 = smov 3
    %v37 = vld [vmem:[%s35] ss:$16 sm:%s36]
    %38 = vrot.lane.b32.xlu0 %v37, 84
    %v39 = vpop.permute.xlu0 %38
    %vm40 = vcmask 786080
    %41 = vst.msk [vmem:[#allocation0] ss:$16 sm:$0x3] %vm40, %v39
    %s42 = scalar_lea.vmem %s0, 6
    %s43 = smov 3
    %v44 = vld [vmem:[%s42] ss:$16 sm:%s43]
    %45 = vrot.lane.b32.xlu0 %v44, 72
    %v46 = vpop.permute.xlu0 %45
    %vm47 = vcmask 687680
    %48 = vst.msk [vmem:[#allocation0] ss:$16 sm:$0x3] %vm47, %v46
    %s49 = scalar_lea.vmem %s0, 5
    %s50 = smov 3
    %v51 = vld [vmem:[%s49] ss:$16 sm:%s50]
    %52 = vrot.lane.b32.xlu0 %v51, 60
    %v53 = vpop.permute.xlu0 %52
    %vm54 = vcmask 589280
    %55 = vst.msk [vmem:[#allocation0] ss:$16 sm:$0x3] %vm54, %v53
    %s56 = scalar_lea.vmem %s0, 4
    %s57 = smov 3
    %v58 = vld [vmem:[%s56] ss:$16 sm:%s57]
    %59 = vrot.lane.b32.xlu0 %v58, 48
    %v60 = vpop.permute.xlu0 %59
    %vm61 = vcmask 490880
    %62 = vst.msk [vmem:[#allocation0] ss:$16 sm:$0x3] %vm61, %v60
    %s63 = scalar_lea.vmem %s0, 3
    %s64 = smov 3
    %v65 = vld [vmem:[%s63] ss:$16 sm:%s64]
    %66 = vrot.lane.b32.xlu0 %v65, 36
    %v67 = vpop.permute.xlu0 %66
    %vm68 = vcmask 392480
    %69 = vst.msk [vmem:[#allocation0] ss:$16 sm:$0x3] %vm68, %v67
    %s70 = scalar_lea.vmem %s0, 2
    %s71 = smov 3
    %v72 = vld [vmem:[%s70] ss:$16 sm:%s71]
    %73 = vrot.lane.b32.xlu0 %v72, 24
    %v74 = vpop.permute.xlu0 %73
    %vm75 = vcmask 294080
    %76 = vst.msk [vmem:[#allocation0] ss:$16 sm:$0x3] %vm75, %v74
    %s77 = scalar_lea.vmem %s0, 1
    %s78 = smov 3
    %v79 = vld [vmem:[%s77] ss:$16 sm:%s78]
    %80 = vrot.lane.b32.xlu0 %v79, 12
    %v81 = vpop.permute.xlu0 %80
    %vm82 = vcmask 195680
    %83 = vst.msk [vmem:[#allocation0] ss:$16 sm:$0x3] %vm82, %v81
    %s84 = scalar_lea.vmem %s0, 11
    %s85 = smov 3
    %v86 = vld [vmem:[%s84] ss:$16 sm:%s85]
    %87 = vrot.lane.b32.xlu0 %v86, 4
    %v88 = vpop.permute.xlu0 %87
    %vm89 = vcmask 130080
    %s90 = scalar_lea.vmem [#allocation0], 8
    %91 = vst.msk [vmem:[%s90] ss:$16 sm:$0x3] %vm89, %v88
    %s93 = ssub.s32 2, 1
    %v94 = vld [vmem:[#allocation0] sm:%s93]
    %s96 = ssub.s32 2, 1
    %97 = vst [vmem:[%s1] sm:%s96] %v94
    %s98 = scalar_lea.vmem [#allocation0], 8
    %v99 = vld [vmem:[%s98] sm:%s93]
    %s101 = ssub.s32 2, 1
    %s102 = scalar_lea.vmem %s1, 1
    %103 = vst [vmem:[%s102] sm:%s101] %v99
    %s104 = scalar_lea.vmem [#allocation0], 16
    %v105 = vld [vmem:[%s104] sm:%s93]
    %s107 = ssub.s32 2, 1
    %s108 = scalar_lea.vmem %s1, 2
    %109 = vst [vmem:[%s108] sm:%s107] %v105
    %s110 = scalar_lea.vmem [#allocation0], 24
    %v111 = vld [vmem:[%s110] sm:%s93]
    %s113 = ssub.s32 2, 1
    %s114 = scalar_lea.vmem %s1, 3
    %115 = vst [vmem:[%s114] sm:%s113] %v111

// kernel: conv_qnet_forward.3
$region0: #{conv_qnet_forward.3}
  #allocation0 [shape = 'u32[]', space=smem, size = 0x4, offset = 0x4, fixed_abs, tag = 'smem constant byte address 0x4 - core index']
  #allocation1 [shape = 'u32[72,128]{1,0:T(1,128)}', space=vmem, size = 0x9000, scoped, tag = 'internal scratch']
  %s0 = inlined_call_operand.vmem [shape: f32[8,1600], index: 0, kind: input, shape index: {}]
  %s1 = inlined_call_operand.vmem [shape: bf16[1600,256], index: 1, kind: input, shape index: {}]
  %s2 = inlined_call_operand.vmem [shape: f32[1,256], index: 2, kind: input, shape index: {}]
  %s3 = inlined_call_operand.vmem [shape: bf16[256,128], index: 3, kind: input, shape index: {}]
  %s4 = inlined_call_operand.vmem [shape: f32[1,128], index: 4, kind: input, shape index: {}]
  %s5 = inlined_call_operand.vmem [shape: f32[8,128], index: 5, kind: output, shape index: {}]
  %s6 = sld [smem:[#allocation0]]
  $region30: #{conv_qnet_forward.3} parent=0
    _
  %s8 = ssub.s32 1, %s6
  %s9 = scalar_select 0, %s8, %s6
  // Predicated region
  $region2: #{conv_qnet_forward.3} parent=0 // pred_check
    _
  $region3: #{conv_qnet_forward.3} parent=0 // pred_check_branch
    %11 = sbr.rel (0) target = $region5
  $region4: #{conv_qnet_forward.3} parent=0 // pred_region
    _
  $region5: #{conv_qnet_forward.3} parent=0 // pred_fallthru
    _
  // Predicated region
  $region6: #{conv_qnet_forward.3} parent=0 // pred_check
    _
  $region7: #{conv_qnet_forward.3} parent=0 // pred_check_branch
    %13 = sbr.rel (0) target = $region9
  $region8: #{conv_qnet_forward.3} parent=0 // pred_region
    _
  $region9: #{conv_qnet_forward.3} parent=0 // pred_fallthru
    _
  // Predicated region
  $region10: #{conv_qnet_forward.3} parent=0 // pred_check
    _
  $region11: #{conv_qnet_forward.3} parent=0 // pred_check_branch
    %15 = sbr.rel (0) target = $region13
  $region12: #{conv_qnet_forward.3} parent=0 // pred_region
    _
  $region13: #{conv_qnet_forward.3} parent=0 // pred_fallthru
    _
  // Predicated region
  $region14: #{conv_qnet_forward.3} parent=0 // pred_check
    _
  $region15: #{conv_qnet_forward.3} parent=0 // pred_check_branch
    %17 = sbr.rel (0) target = $region17
  $region16: #{conv_qnet_forward.3} parent=0 // pred_region
    _
  $region17: #{conv_qnet_forward.3} parent=0 // pred_fallthru
    _
  // Predicated region
  $region18: #{conv_qnet_forward.3} parent=0 // pred_check
    _
  $region19: #{conv_qnet_forward.3} parent=0 // pred_check_branch
    %19 = sbr.rel (0) target = $region21
  $region20: #{conv_qnet_forward.3} parent=0 // pred_region
    _
  $region21: #{conv_qnet_forward.3} parent=0 // pred_fallthru
    _
  %v21 = vld [vmem:[%s0] sm:$0xff]
  %v22 = vld [vmem:[%s0 + $0x8] sm:$0xff]
  %v23 = vld [vmem:[%s0 + $0x10] sm:$0xff]
  %v24 = vld [vmem:[%s0 + $0x18] sm:$0xff]
  %v25 = vld [vmem:[%s0 + $0x20] sm:$0xff]
  %v26 = vld [vmem:[%s0 + $0x28] sm:$0xff]
  %v27 = vld [vmem:[%s0 + $0x30] sm:$0xff]
  %v28 = vld [vmem:[%s0 + $0x38] sm:$0xff]
  %v29 = vld [vmem:[%s0 + $0x40] sm:$0xff]
  %v30 = vld [vmem:[%s0 + $0x48] sm:$0xff]
  %v31 = vld [vmem:[%s0 + $0x50] sm:$0xff]
  %v32 = vld [vmem:[%s0 + $0x58] sm:$0xff]
  %v33 = vld [vmem:[%s0 + $0x60] sm:$0xff]
  %v34 = vpack.c.bf16 %v21, %v21
  %v35 = vpack.c.bf16 %v22, %v22
  %v36 = vpack.c.bf16 %v23, %v23
  %v37 = vpack.c.bf16 %v24, %v24
  %v38 = vpack.c.bf16 %v25, %v25
  %v39 = vpack.c.bf16 %v26, %v26
  %v40 = vpack.c.bf16 %v27, %v27
  %v41 = vpack.c.bf16 %v28, %v28
  %v42 = vpack.c.bf16 %v29, %v29
  %v43 = vpack.c.bf16 %v30, %v30
  %v44 = vpack.c.bf16 %v31, %v31
  %v45 = vpack.c.bf16 %v32, %v32
  %v46 = vpack.c.bf16 %v33, %v33
  %v47 = vld [vmem:[%s1] sm:$0xff]
  %v48 = vld [vmem:[%s1 + $0x8] sm:$0xff]
  %v49 = vld [vmem:[%s1 + $0x10] sm:$0xff]
  %v50 = vld [vmem:[%s1 + $0x18] sm:$0xff]
  %v51 = vld [vmem:[%s1 + $0x20] sm:$0xff]
  %v52 = vld [vmem:[%s1 + $0x28] sm:$0xff]
  %v53 = vld [vmem:[%s1 + $0x30] sm:$0xff]
  %v54 = vld [vmem:[%s1 + $0x38] sm:$0xff]
  %v55 = vld [vmem:[%s1 + $0x40] sm:$0xff]
  %v56 = vld [vmem:[%s1 + $0x48] sm:$0xff]
  %v57 = vld [vmem:[%s1 + $0x50] sm:$0xff]
  %v58 = vld [vmem:[%s1 + $0x58] sm:$0xff]
  %v59 = vld [vmem:[%s1 + $0x60] sm:$0xff]
  %v60 = vld [vmem:[%s1 + $0x68] sm:$0xff]
  %v61 = vld [vmem:[%s1 + $0x70] sm:$0xff]
  %v62 = vld [vmem:[%s1 + $0x78] sm:$0xff]
  %v63 = vld [vmem:[%s1 + $0x80] sm:$0xff]
  %v64 = vld [vmem:[%s1 + $0x88] sm:$0xff]
  %v65 = vld [vmem:[%s1 + $0x90] sm:$0xff]
  %v66 = vld [vmem:[%s1 + $0x98] sm:$0xff]
  %v67 = vld [vmem:[%s1 + $0xa0] sm:$0xff]
  %v68 = vld [vmem:[%s1 + $0xa8] sm:$0xff]
  %v69 = vld [vmem:[%s1 + $0xb0] sm:$0xff]
  %v70 = vld [vmem:[%s1 + $0xb8] sm:$0xff]
  %v71 = vld [vmem:[%s1 + $0xc0] sm:$0xff]
  %v72 = vld [vmem:[%s1 + $0xc8] sm:$0xff]
  %v73 = vld [vmem:[%s1 + $0xd0] sm:$0xff]
  %v74 = vld [vmem:[%s1 + $0xd8] sm:$0xff]
  %v75 = vld [vmem:[%s1 + $0xe0] sm:$0xff]
  %v76 = vld [vmem:[%s1 + $0xe8] sm:$0xff]
  %v77 = vld [vmem:[%s1 + $0xf0] sm:$0xff]
  %v78 = vld [vmem:[%s1 + $0xf8] sm:$0xff]
  %v79 = vld [vmem:[%s1 + $0x100] sm:$0xff]
  %v80 = vld [vmem:[%s1 + $0x108] sm:$0xff]
  %v81 = vld [vmem:[%s1 + $0x110] sm:$0xff]
  %v82 = vld [vmem:[%s1 + $0x118] sm:$0xff]
  %v83 = vld [vmem:[%s1 + $0x120] sm:$0xff]
  %v84 = vld [vmem:[%s1 + $0x128] sm:$0xff]
  %v85 = vld [vmem:[%s1 + $0x130] sm:$0xff]
  %v86 = vld [vmem:[%s1 + $0x138] sm:$0xff]
  %v87 = vld [vmem:[%s1 + $0x140] sm:$0xff]
  %v88 = vld [vmem:[%s1 + $0x148] sm:$0xff]
  %v89 = vld [vmem:[%s1 + $0x150] sm:$0xff]
  %v90 = vld [vmem:[%s1 + $0x158] sm:$0xff]
  %v91 = vld [vmem:[%s1 + $0x160] sm:$0xff]
  %v92 = vld [vmem:[%s1 + $0x168] sm:$0xff]
  %v93 = vld [vmem:[%s1 + $0x170] sm:$0xff]
  %v94 = vld [vmem:[%s1 + $0x178] sm:$0xff]
  %v95 = vld [vmem:[%s1 + $0x180] sm:$0xff]
  %v96 = vld [vmem:[%s1 + $0x188] sm:$0xff]
  %v97 = vld [vmem:[%s1 + $0x190] sm:$0xff]
  %v98 = vld [vmem:[%s1 + $0x198] sm:$0xff]
  %v99 = vld [vmem:[%s1 + $0x1a0] sm:$0xff]
  %v100 = vld [vmem:[%s1 + $0x1a8] sm:$0xff]
  %v101 = vld [vmem:[%s1 + $0x1b0] sm:$0xff]
  %v102 = vld [vmem:[%s1 + $0x1b8] sm:$0xff]
  %v103 = vld [vmem:[%s1 + $0x1c0] sm:$0xff]
  %v104 = vld [vmem:[%s1 + $0x1c8] sm:$0xff]
  %v105 = vld [vmem:[%s1 + $0x1d0] sm:$0xff]
  %v106 = vld [vmem:[%s1 + $0x1d8] sm:$0xff]
  %v107 = vld [vmem:[%s1 + $0x1e0] sm:$0xff]
  %v108 = vld [vmem:[%s1 + $0x1e8] sm:$0xff]
  %v109 = vld [vmem:[%s1 + $0x1f0] sm:$0xff]
  %v110 = vld [vmem:[%s1 + $0x1f8] sm:$0xff]
  %v111 = vld [vmem:[%s1 + $0x200] sm:$0xff]
  %v112 = vld [vmem:[%s1 + $0x208] sm:$0xff]
  %v113 = vld [vmem:[%s1 + $0x210] sm:$0xff]
  %v114 = vld [vmem:[%s1 + $0x218] sm:$0xff]
  %v115 = vld [vmem:[%s1 + $0x220] sm:$0xff]
  %v116 = vld [vmem:[%s1 + $0x228] sm:$0xff]
  %v117 = vld [vmem:[%s1 + $0x230] sm:$0xff]
  %v118 = vld [vmem:[%s1 + $0x238] sm:$0xff]
  %v119 = vld [vmem:[%s1 + $0x240] sm:$0xff]
  %v120 = vld [vmem:[%s1 + $0x248] sm:$0xff]
  %v121 = vld [vmem:[%s1 + $0x250] sm:$0xff]
  %v122 = vld [vmem:[%s1 + $0x258] sm:$0xff]
  %v123 = vld [vmem:[%s1 + $0x260] sm:$0xff]
  %v124 = vld [vmem:[%s1 + $0x268] sm:$0xff]
  %v125 = vld [vmem:[%s1 + $0x270] sm:$0xff]
  %v126 = vld [vmem:[%s1 + $0x278] sm:$0xff]
  %v127 = vld [vmem:[%s1 + $0x280] sm:$0xff]
  %v128 = vld [vmem:[%s1 + $0x288] sm:$0xff]
  %v129 = vld [vmem:[%s1 + $0x290] sm:$0xff]
  %v130 = vld [vmem:[%s1 + $0x298] sm:$0xff]
  %v131 = vld [vmem:[%s1 + $0x2a0] sm:$0xff]
  %v132 = vld [vmem:[%s1 + $0x2a8] sm:$0xff]
  %v133 = vld [vmem:[%s1 + $0x2b0] sm:$0xff]
  %v134 = vld [vmem:[%s1 + $0x2b8] sm:$0xff]
  %v135 = vld [vmem:[%s1 + $0x2c0] sm:$0xff]
  %v136 = vld [vmem:[%s1 + $0x2c8] sm:$0xff]
  %v137 = vld [vmem:[%s1 + $0x2d0] sm:$0xff]
  %v138 = vld [vmem:[%s1 + $0x2d8] sm:$0xff]
  %v139 = vld [vmem:[%s1 + $0x2e0] sm:$0xff]
  %v140 = vld [vmem:[%s1 + $0x2e8] sm:$0xff]
  %v141 = vld [vmem:[%s1 + $0x2f0] sm:$0xff]
  %v142 = vld [vmem:[%s1 + $0x2f8] sm:$0xff]
  %v143 = vld [vmem:[%s1 + $0x300] sm:$0xff]
  %v144 = vld [vmem:[%s1 + $0x308] sm:$0xff]
  %v145 = vld [vmem:[%s1 + $0x310] sm:$0xff]
  %v146 = vld [vmem:[%s1 + $0x318] sm:$0xff]
  %v147 = vld [vmem:[%s1 + $0x320] sm:$0xff]
  %v148 = vld [vmem:[%s1 + $0x328] sm:$0xff]
  %v149 = vld [vmem:[%s1 + $0x330] sm:$0xff]
  %v150 = vld [vmem:[%s1 + $0x338] sm:$0xff]
  %v151 = vld [vmem:[%s1 + $0x340] sm:$0xff]
  %v152 = vld [vmem:[%s1 + $0x348] sm:$0xff]
  %v153 = vld [vmem:[%s1 + $0x350] sm:$0xff]
  %v154 = vld [vmem:[%s1 + $0x358] sm:$0xff]
  %v155 = vld [vmem:[%s1 + $0x360] sm:$0xff]
  %v156 = vld [vmem:[%s1 + $0x368] sm:$0xff]
  %v157 = vld [vmem:[%s1 + $0x370] sm:$0xff]
  %v158 = vld [vmem:[%s1 + $0x378] sm:$0xff]
  %v159 = vld [vmem:[%s1 + $0x380] sm:$0xff]
  %v160 = vld [vmem:[%s1 + $0x388] sm:$0xff]
  %v161 = vld [vmem:[%s1 + $0x390] sm:$0xff]
  %v162 = vld [vmem:[%s1 + $0x398] sm:$0xff]
  %v163 = vld [vmem:[%s1 + $0x3a0] sm:$0xff]
  %v164 = vld [vmem:[%s1 + $0x3a8] sm:$0xff]
  %v165 = vld [vmem:[%s1 + $0x3b0] sm:$0xff]
  %v166 = vld [vmem:[%s1 + $0x3b8] sm:$0xff]
  %v167 = vld [vmem:[%s1 + $0x3c0] sm:$0xff]
  %v168 = vld [vmem:[%s1 + $0x3c8] sm:$0xff]
  %v169 = vld [vmem:[%s1 + $0x3d0] sm:$0xff]
  %v170 = vld [vmem:[%s1 + $0x3d8] sm:$0xff]
  %v171 = vld [vmem:[%s1 + $0x3e0] sm:$0xff]
  %v172 = vld [vmem:[%s1 + $0x3e8] sm:$0xff]
  %v173 = vld [vmem:[%s1 + $0x3f0] sm:$0xff]
  %v174 = vld [vmem:[%s1 + $0x3f8] sm:$0xff]
  %v175 = vld [vmem:[%s1 + $0x400] sm:$0xff]
  %v176 = vld [vmem:[%s1 + $0x408] sm:$0xff]
  %v177 = vld [vmem:[%s1 + $0x410] sm:$0xff]
  %v178 = vld [vmem:[%s1 + $0x418] sm:$0xff]
  %v179 = vld [vmem:[%s1 + $0x420] sm:$0xff]
  %v180 = vld [vmem:[%s1 + $0x428] sm:$0xff]
  %v181 = vld [vmem:[%s1 + $0x430] sm:$0xff]
  %v182 = vld [vmem:[%s1 + $0x438] sm:$0xff]
  %v183 = vld [vmem:[%s1 + $0x440] sm:$0xff]
  %v184 = vld [vmem:[%s1 + $0x448] sm:$0xff]
  %v185 = vld [vmem:[%s1 + $0x450] sm:$0xff]
  %v186 = vld [vmem:[%s1 + $0x458] sm:$0xff]
  %v187 = vld [vmem:[%s1 + $0x460] sm:$0xff]
  %v188 = vld [vmem:[%s1 + $0x468] sm:$0xff]
  %v189 = vld [vmem:[%s1 + $0x470] sm:$0xff]
  %v190 = vld [vmem:[%s1 + $0x478] sm:$0xff]
  %v191 = vld [vmem:[%s1 + $0x480] sm:$0xff]
  %v192 = vld [vmem:[%s1 + $0x488] sm:$0xff]
  %v193 = vld [vmem:[%s1 + $0x490] sm:$0xff]
  %v194 = vld [vmem:[%s1 + $0x498] sm:$0xff]
  %v195 = vld [vmem:[%s1 + $0x4a0] sm:$0xff]
  %v196 = vld [vmem:[%s1 + $0x4a8] sm:$0xff]
  %v197 = vld [vmem:[%s1 + $0x4b0] sm:$0xff]
  %v198 = vld [vmem:[%s1 + $0x4b8] sm:$0xff]
  %v199 = vld [vmem:[%s1 + $0x4c0] sm:$0xff]
  %v200 = vld [vmem:[%s1 + $0x4c8] sm:$0xff]
  %v201 = vld [vmem:[%s1 + $0x4d0] sm:$0xff]
  %v202 = vld [vmem:[%s1 + $0x4d8] sm:$0xff]
  %v203 = vld [vmem:[%s1 + $0x4e0] sm:$0xff]
  %v204 = vld [vmem:[%s1 + $0x4e8] sm:$0xff]
  %v205 = vld [vmem:[%s1 + $0x4f0] sm:$0xff]
  %v206 = vld [vmem:[%s1 + $0x4f8] sm:$0xff]
  %v207 = vld [vmem:[%s1 + $0x500] sm:$0xff]
  %v208 = vld [vmem:[%s1 + $0x508] sm:$0xff]
  %v209 = vld [vmem:[%s1 + $0x510] sm:$0xff]
  %v210 = vld [vmem:[%s1 + $0x518] sm:$0xff]
  %v211 = vld [vmem:[%s1 + $0x520] sm:$0xff]
  %v212 = vld [vmem:[%s1 + $0x528] sm:$0xff]
  %v213 = vld [vmem:[%s1 + $0x530] sm:$0xff]
  %v214 = vld [vmem:[%s1 + $0x538] sm:$0xff]
  %v215 = vld [vmem:[%s1 + $0x540] sm:$0xff]
  %v216 = vld [vmem:[%s1 + $0x548] sm:$0xff]
  %v217 = vld [vmem:[%s1 + $0x550] sm:$0xff]
  %v218 = vld [vmem:[%s1 + $0x558] sm:$0xff]
  %v219 = vld [vmem:[%s1 + $0x560] sm:$0xff]
  %v220 = vld [vmem:[%s1 + $0x568] sm:$0xff]
  %v221 = vld [vmem:[%s1 + $0x570] sm:$0xff]
  %v222 = vld [vmem:[%s1 + $0x578] sm:$0xff]
  %v223 = vld [vmem:[%s1 + $0x580] sm:$0xff]
  %v224 = vld [vmem:[%s1 + $0x588] sm:$0xff]
  %v225 = vld [vmem:[%s1 + $0x590] sm:$0xff]
  %v226 = vld [vmem:[%s1 + $0x598] sm:$0xff]
  %v227 = vld [vmem:[%s1 + $0x5a0] sm:$0xff]
  %v228 = vld [vmem:[%s1 + $0x5a8] sm:$0xff]
  %v229 = vld [vmem:[%s1 + $0x5b0] sm:$0xff]
  %v230 = vld [vmem:[%s1 + $0x5b8] sm:$0xff]
  %v231 = vld [vmem:[%s1 + $0x5c0] sm:$0xff]
  %v232 = vld [vmem:[%s1 + $0x5c8] sm:$0xff]
  %v233 = vld [vmem:[%s1 + $0x5d0] sm:$0xff]
  %v234 = vld [vmem:[%s1 + $0x5d8] sm:$0xff]
  %v235 = vld [vmem:[%s1 + $0x5e0] sm:$0xff]
  %v236 = vld [vmem:[%s1 + $0x5e8] sm:$0xff]
  %v237 = vld [vmem:[%s1 + $0x5f0] sm:$0xff]
  %v238 = vld [vmem:[%s1 + $0x5f8] sm:$0xff]
  %v239 = vld [vmem:[%s1 + $0x600] sm:$0xff]
  %v240 = vld [vmem:[%s1 + $0x608] sm:$0xff]
  %v241 = vld [vmem:[%s1 + $0x610] sm:$0xff]
  %v242 = vld [vmem:[%s1 + $0x618] sm:$0xff]
  %v243 = vld [vmem:[%s1 + $0x620] sm:$0xff]
  %v244 = vld [vmem:[%s1 + $0x628] sm:$0xff]
  %v245 = vld [vmem:[%s1 + $0x630] sm:$0xff]
  %v246 = vld [vmem:[%s1 + $0x638] sm:$0xff]
  %v247 = vld [vmem:[%s2] sm:$0x3]
  %v249 = vperm.slane %v247, 0
  %v250 = vperm.slane %v247, 1
  %v453 = vunpack.c.l.b16 %v47
  %v454 = vunpack.c.h.b16 %v47
  %v455 = vunpack.c.l.b16 %v48
  %v456 = vunpack.c.h.b16 %v48
  %v457 = vunpack.c.l.b16 %v49
  %v458 = vunpack.c.h.b16 %v49
  %v459 = vunpack.c.l.b16 %v50
  %v460 = vunpack.c.h.b16 %v50
  %v461 = vunpack.c.l.b16 %v51
  %v462 = vunpack.c.h.b16 %v51
  %v463 = vunpack.c.l.b16 %v52
  %v464 = vunpack.c.h.b16 %v52
  %v465 = vunpack.c.l.b16 %v53
  %v466 = vunpack.c.h.b16 %v53
  %v467 = vunpack.c.l.b16 %v54
  %v468 = vunpack.c.h.b16 %v54
  %v469 = vunpack.c.l.b16 %v55
  %v470 = vunpack.c.h.b16 %v55
  %v471 = vunpack.c.l.b16 %v56
  %v472 = vunpack.c.h.b16 %v56
  %v473 = vunpack.c.l.b16 %v57
  %v474 = vunpack.c.h.b16 %v57
  %v475 = vunpack.c.l.b16 %v58
  %v476 = vunpack.c.h.b16 %v58
  %v477 = vunpack.c.l.b16 %v59
  %v478 = vunpack.c.h.b16 %v59
  %v479 = vunpack.c.l.b16 %v60
  %v480 = vunpack.c.h.b16 %v60
  %v481 = vunpack.c.l.b16 %v61
  %v482 = vunpack.c.h.b16 %v61
  %v483 = vunpack.c.l.b16 %v62
  %v484 = vunpack.c.h.b16 %v62
  %v485 = vunpack.c.l.b16 %v63
  %v486 = vunpack.c.h.b16 %v63
  %v487 = vunpack.c.l.b16 %v64
  %v488 = vunpack.c.h.b16 %v64
  %v489 = vunpack.c.l.b16 %v65
  %v490 = vunpack.c.h.b16 %v65
  %v491 = vunpack.c.l.b16 %v66
  %v492 = vunpack.c.h.b16 %v66
  %v493 = vunpack.c.l.b16 %v67
  %v494 = vunpack.c.h.b16 %v67
  %v495 = vunpack.c.l.b16 %v68
  %v496 = vunpack.c.h.b16 %v68
  %v497 = vunpack.c.l.b16 %v69
  %v498 = vunpack.c.h.b16 %v69
  %v499 = vunpack.c.l.b16 %v70
  %v500 = vunpack.c.h.b16 %v70
  %v501 = vunpack.c.l.b16 %v71
  %v502 = vunpack.c.h.b16 %v71
  %v503 = vunpack.c.l.b16 %v72
  %v504 = vunpack.c.h.b16 %v72
  %v505 = vunpack.c.l.b16 %v73
  %v506 = vunpack.c.h.b16 %v73
  %v507 = vunpack.c.l.b16 %v74
  %v508 = vunpack.c.h.b16 %v74
  %v509 = vunpack.c.l.b16 %v75
  %v510 = vunpack.c.h.b16 %v75
  %v511 = vunpack.c.l.b16 %v76
  %v512 = vunpack.c.h.b16 %v76
  %v513 = vunpack.c.l.b16 %v77
  %v514 = vunpack.c.h.b16 %v77
  %v515 = vunpack.c.l.b16 %v78
  %v516 = vunpack.c.h.b16 %v78
  %v517 = vunpack.c.l.b16 %v79
  %v518 = vunpack.c.h.b16 %v79
  %v519 = vunpack.c.l.b16 %v80
  %v520 = vunpack.c.h.b16 %v80
  %v521 = vunpack.c.l.b16 %v81
  %v522 = vunpack.c.h.b16 %v81
  %v523 = vunpack.c.l.b16 %v82
  %v524 = vunpack.c.h.b16 %v82
  %v525 = vunpack.c.l.b16 %v83
  %v526 = vunpack.c.h.b16 %v83
  %v527 = vunpack.c.l.b16 %v84
  %v528 = vunpack.c.h.b16 %v84
  %v529 = vunpack.c.l.b16 %v85
  %v530 = vunpack.c.h.b16 %v85
  %v531 = vunpack.c.l.b16 %v86
  %v532 = vunpack.c.h.b16 %v86
  %v533 = vunpack.c.l.b16 %v87
  %v534 = vunpack.c.h.b16 %v87
  %v535 = vunpack.c.l.b16 %v88
  %v536 = vunpack.c.h.b16 %v88
  %v537 = vunpack.c.l.b16 %v89
  %v538 = vunpack.c.h.b16 %v89
  %v539 = vunpack.c.l.b16 %v90
  %v540 = vunpack.c.h.b16 %v90
  %v541 = vunpack.c.l.b16 %v91
  %v542 = vunpack.c.h.b16 %v91
  %v543 = vunpack.c.l.b16 %v92
  %v544 = vunpack.c.h.b16 %v92
  %v545 = vunpack.c.l.b16 %v93
  %v546 = vunpack.c.h.b16 %v93
  %v547 = vunpack.c.l.b16 %v94
  %v548 = vunpack.c.h.b16 %v94
  %v549 = vunpack.c.l.b16 %v95
  %v550 = vunpack.c.h.b16 %v95
  %v551 = vunpack.c.l.b16 %v96
  %v552 = vunpack.c.h.b16 %v96
  %v553 = vunpack.c.l.b16 %v97
  %v554 = vunpack.c.h.b16 %v97
  %v555 = vunpack.c.l.b16 %v98
  %v556 = vunpack.c.h.b16 %v98
  %v557 = vunpack.c.l.b16 %v99
  %v558 = vunpack.c.h.b16 %v99
  %v559 = vunpack.c.l.b16 %v100
  %v560 = vunpack.c.h.b16 %v100
  %v561 = vunpack.c.l.b16 %v101
  %v562 = vunpack.c.h.b16 %v101
  %v563 = vunpack.c.l.b16 %v102
  %v564 = vunpack.c.h.b16 %v102
  %v565 = vunpack.c.l.b16 %v103
  %v566 = vunpack.c.h.b16 %v103
  %v567 = vunpack.c.l.b16 %v104
  %v568 = vunpack.c.h.b16 %v104
  %v569 = vunpack.c.l.b16 %v105
  %v570 = vunpack.c.h.b16 %v105
  %v571 = vunpack.c.l.b16 %v106
  %v572 = vunpack.c.h.b16 %v106
  %v573 = vunpack.c.l.b16 %v107
  %v574 = vunpack.c.h.b16 %v107
  %v575 = vunpack.c.l.b16 %v108
  %v576 = vunpack.c.h.b16 %v108
  %v577 = vunpack.c.l.b16 %v109
  %v578 = vunpack.c.h.b16 %v109
  %v579 = vunpack.c.l.b16 %v110
  %v580 = vunpack.c.h.b16 %v110
  %v581 = vunpack.c.l.b16 %v111
  %v582 = vunpack.c.h.b16 %v111
  %v583 = vunpack.c.l.b16 %v112
  %v584 = vunpack.c.h.b16 %v112
  %v585 = vunpack.c.l.b16 %v113
  %v586 = vunpack.c.h.b16 %v113
  %v587 = vunpack.c.l.b16 %v114
  %v588 = vunpack.c.h.b16 %v114
  %v589 = vunpack.c.l.b16 %v115
  %v590 = vunpack.c.h.b16 %v115
  %v591 = vunpack.c.l.b16 %v116
  %v592 = vunpack.c.h.b16 %v116
  %v593 = vunpack.c.l.b16 %v117
  %v594 = vunpack.c.h.b16 %v117
  %v595 = vunpack.c.l.b16 %v118
  %v596 = vunpack.c.h.b16 %v118
  %v597 = vunpack.c.l.b16 %v119
  %v598 = vunpack.c.h.b16 %v119
  %v599 = vunpack.c.l.b16 %v120
  %v600 = vunpack.c.h.b16 %v120
  %v601 = vunpack.c.l.b16 %v121
  %v602 = vunpack.c.h.b16 %v121
  %v603 = vunpack.c.l.b16 %v122
  %v604 = vunpack.c.h.b16 %v122
  %v605 = vunpack.c.l.b16 %v123
  %v606 = vunpack.c.h.b16 %v123
  %v607 = vunpack.c.l.b16 %v124
  %v608 = vunpack.c.h.b16 %v124
  %v609 = vunpack.c.l.b16 %v125
  %v610 = vunpack.c.h.b16 %v125
  %v611 = vunpack.c.l.b16 %v126
  %v612 = vunpack.c.h.b16 %v126
  %v613 = vunpack.c.l.b16 %v127
  %v614 = vunpack.c.h.b16 %v127
  %v615 = vunpack.c.l.b16 %v128
  %v616 = vunpack.c.h.b16 %v128
  %v617 = vunpack.c.l.b16 %v129
  %v618 = vunpack.c.h.b16 %v129
  %v619 = vunpack.c.l.b16 %v130
  %v620 = vunpack.c.h.b16 %v130
  %v621 = vunpack.c.l.b16 %v131
  %v622 = vunpack.c.h.b16 %v131
  %v623 = vunpack.c.l.b16 %v132
  %v624 = vunpack.c.h.b16 %v132
  %v625 = vunpack.c.l.b16 %v133
  %v626 = vunpack.c.h.b16 %v133
  %v627 = vunpack.c.l.b16 %v134
  %v628 = vunpack.c.h.b16 %v134
  %v629 = vunpack.c.l.b16 %v135
  %v630 = vunpack.c.h.b16 %v135
  %v631 = vunpack.c.l.b16 %v136
  %v632 = vunpack.c.h.b16 %v136
  %v633 = vunpack.c.l.b16 %v137
  %v634 = vunpack.c.h.b16 %v137
  %v635 = vunpack.c.l.b16 %v138
  %v636 = vunpack.c.h.b16 %v138
  %v637 = vunpack.c.l.b16 %v139
  %v638 = vunpack.c.h.b16 %v139
  %v639 = vunpack.c.l.b16 %v140
  %v640 = vunpack.c.h.b16 %v140
  %v641 = vunpack.c.l.b16 %v141
  %v642 = vunpack.c.h.b16 %v141
  %v643 = vunpack.c.l.b16 %v142
  %v644 = vunpack.c.h.b16 %v142
  %v645 = vunpack.c.l.b16 %v143
  %v646 = vunpack.c.h.b16 %v143
  %v647 = vunpack.c.l.b16 %v144
  %v648 = vunpack.c.h.b16 %v144
  %v649 = vunpack.c.l.b16 %v145
  %v650 = vunpack.c.h.b16 %v145
  %v651 = vunpack.c.l.b16 %v146
  %v652 = vunpack.c.h.b16 %v146
  %v653 = vunpack.c.l.b16 %v147
  %v654 = vunpack.c.h.b16 %v147
  %v655 = vunpack.c.l.b16 %v148
  %v656 = vunpack.c.h.b16 %v148
  %v657 = vunpack.c.l.b16 %v149
  %v658 = vunpack.c.h.b16 %v149
  %v659 = vunpack.c.l.b16 %v150
  %v660 = vunpack.c.h.b16 %v150
  %v661 = vunpack.c.l.b16 %v151
  %v662 = vunpack.c.h.b16 %v151
  %v663 = vunpack.c.l.b16 %v152
  %v664 = vunpack.c.h.b16 %v152
  %v665 = vunpack.c.l.b16 %v153
  %v666 = vunpack.c.h.b16 %v153
  %v667 = vunpack.c.l.b16 %v154
  %v668 = vunpack.c.h.b16 %v154
  %v669 = vunpack.c.l.b16 %v155
  %v670 = vunpack.c.h.b16 %v155
  %v671 = vunpack.c.l.b16 %v156
  %v672 = vunpack.c.h.b16 %v156
  %v673 = vunpack.c.l.b16 %v157
  %v674 = vunpack.c.h.b16 %v157
  %v675 = vunpack.c.l.b16 %v158
  %v676 = vunpack.c.h.b16 %v158
  %v677 = vunpack.c.l.b16 %v159
  %v678 = vunpack.c.h.b16 %v159
  %v679 = vunpack.c.l.b16 %v160
  %v680 = vunpack.c.h.b16 %v160
  %v681 = vunpack.c.l.b16 %v161
  %v682 = vunpack.c.h.b16 %v161
  %v683 = vunpack.c.l.b16 %v162
  %v684 = vunpack.c.h.b16 %v162
  %v685 = vunpack.c.l.b16 %v163
  %v686 = vunpack.c.h.b16 %v163
  %v687 = vunpack.c.l.b16 %v164
  %v688 = vunpack.c.h.b16 %v164
  %v689 = vunpack.c.l.b16 %v165
  %v690 = vunpack.c.h.b16 %v165
  %v691 = vunpack.c.l.b16 %v166
  %v692 = vunpack.c.h.b16 %v166
  %v693 = vunpack.c.l.b16 %v167
  %v694 = vunpack.c.h.b16 %v167
  %v695 = vunpack.c.l.b16 %v168
  %v696 = vunpack.c.h.b16 %v168
  %v697 = vunpack.c.l.b16 %v169
  %v698 = vunpack.c.h.b16 %v169
  %v699 = vunpack.c.l.b16 %v170
  %v700 = vunpack.c.h.b16 %v170
  %v701 = vunpack.c.l.b16 %v171
  %v702 = vunpack.c.h.b16 %v171
  %v703 = vunpack.c.l.b16 %v172
  %v704 = vunpack.c.h.b16 %v172
  %v705 = vunpack.c.l.b16 %v173
  %v706 = vunpack.c.h.b16 %v173
  %v707 = vunpack.c.l.b16 %v174
  %v708 = vunpack.c.h.b16 %v174
  %v709 = vunpack.c.l.b16 %v175
  %v710 = vunpack.c.h.b16 %v175
  %v711 = vunpack.c.l.b16 %v176
  %v712 = vunpack.c.h.b16 %v176
  %v713 = vunpack.c.l.b16 %v177
  %v714 = vunpack.c.h.b16 %v177
  %v715 = vunpack.c.l.b16 %v178
  %v716 = vunpack.c.h.b16 %v178
  %v717 = vunpack.c.l.b16 %v179
  %v718 = vunpack.c.h.b16 %v179
  %v719 = vunpack.c.l.b16 %v180
  %v720 = vunpack.c.h.b16 %v180
  %v721 = vunpack.c.l.b16 %v181
  %v722 = vunpack.c.h.b16 %v181
  %v723 = vunpack.c.l.b16 %v182
  %v724 = vunpack.c.h.b16 %v182
  %v725 = vunpack.c.l.b16 %v183
  %v726 = vunpack.c.h.b16 %v183
  %v727 = vunpack.c.l.b16 %v184
  %v728 = vunpack.c.h.b16 %v184
  %v729 = vunpack.c.l.b16 %v185
  %v730 = vunpack.c.h.b16 %v185
  %v731 = vunpack.c.l.b16 %v186
  %v732 = vunpack.c.h.b16 %v186
  %v733 = vunpack.c.l.b16 %v187
  %v734 = vunpack.c.h.b16 %v187
  %v735 = vunpack.c.l.b16 %v188
  %v736 = vunpack.c.h.b16 %v188
  %v737 = vunpack.c.l.b16 %v189
  %v738 = vunpack.c.h.b16 %v189
  %v739 = vunpack.c.l.b16 %v190
  %v740 = vunpack.c.h.b16 %v190
  %v741 = vunpack.c.l.b16 %v191
  %v742 = vunpack.c.h.b16 %v191
  %v743 = vunpack.c.l.b16 %v192
  %v744 = vunpack.c.h.b16 %v192
  %v745 = vunpack.c.l.b16 %v193
  %v746 = vunpack.c.h.b16 %v193
  %v747 = vunpack.c.l.b16 %v194
  %v748 = vunpack.c.h.b16 %v194
  %v749 = vunpack.c.l.b16 %v195
  %v750 = vunpack.c.h.b16 %v195
  %v751 = vunpack.c.l.b16 %v196
  %v752 = vunpack.c.h.b16 %v196
  %v753 = vunpack.c.l.b16 %v197
  %v754 = vunpack.c.h.b16 %v197
  %v755 = vunpack.c.l.b16 %v198
  %v756 = vunpack.c.h.b16 %v198
  %v757 = vunpack.c.l.b16 %v199
  %v758 = vunpack.c.h.b16 %v199
  %v759 = vunpack.c.l.b16 %v200
  %v760 = vunpack.c.h.b16 %v200
  %v761 = vunpack.c.l.b16 %v201
  %v762 = vunpack.c.h.b16 %v201
  %v763 = vunpack.c.l.b16 %v202
  %v764 = vunpack.c.h.b16 %v202
  %v765 = vunpack.c.l.b16 %v203
  %v766 = vunpack.c.h.b16 %v203
  %v767 = vunpack.c.l.b16 %v204
  %v768 = vunpack.c.h.b16 %v204
  %v769 = vunpack.c.l.b16 %v205
  %v770 = vunpack.c.h.b16 %v205
  %v771 = vunpack.c.l.b16 %v206
  %v772 = vunpack.c.h.b16 %v206
  %v773 = vunpack.c.l.b16 %v207
  %v774 = vunpack.c.h.b16 %v207
  %v775 = vunpack.c.l.b16 %v208
  %v776 = vunpack.c.h.b16 %v208
  %v777 = vunpack.c.l.b16 %v209
  %v778 = vunpack.c.h.b16 %v209
  %v779 = vunpack.c.l.b16 %v210
  %v780 = vunpack.c.h.b16 %v210
  %v781 = vunpack.c.l.b16 %v211
  %v782 = vunpack.c.h.b16 %v211
  %v783 = vunpack.c.l.b16 %v212
  %v784 = vunpack.c.h.b16 %v212
  %v785 = vunpack.c.l.b16 %v213
  %v786 = vunpack.c.h.b16 %v213
  %v787 = vunpack.c.l.b16 %v214
  %v788 = vunpack.c.h.b16 %v214
  %v789 = vunpack.c.l.b16 %v215
  %v790 = vunpack.c.h.b16 %v215
  %v791 = vunpack.c.l.b16 %v216
  %v792 = vunpack.c.h.b16 %v216
  %v793 = vunpack.c.l.b16 %v217
  %v794 = vunpack.c.h.b16 %v217
  %v795 = vunpack.c.l.b16 %v218
  %v796 = vunpack.c.h.b16 %v218
  %v797 = vunpack.c.l.b16 %v219
  %v798 = vunpack.c.h.b16 %v219
  %v799 = vunpack.c.l.b16 %v220
  %v800 = vunpack.c.h.b16 %v220
  %v801 = vunpack.c.l.b16 %v221
  %v802 = vunpack.c.h.b16 %v221
  %v803 = vunpack.c.l.b16 %v222
  %v804 = vunpack.c.h.b16 %v222
  %v805 = vunpack.c.l.b16 %v223
  %v806 = vunpack.c.h.b16 %v223
  %v807 = vunpack.c.l.b16 %v224
  %v808 = vunpack.c.h.b16 %v224
  %v809 = vunpack.c.l.b16 %v225
  %v810 = vunpack.c.h.b16 %v225
  %v811 = vunpack.c.l.b16 %v226
  %v812 = vunpack.c.h.b16 %v226
  %v813 = vunpack.c.l.b16 %v227
  %v814 = vunpack.c.h.b16 %v227
  %v815 = vunpack.c.l.b16 %v228
  %v816 = vunpack.c.h.b16 %v228
  %v817 = vunpack.c.l.b16 %v229
  %v818 = vunpack.c.h.b16 %v229
  %v819 = vunpack.c.l.b16 %v230
  %v820 = vunpack.c.h.b16 %v230
  %v821 = vunpack.c.l.b16 %v231
  %v822 = vunpack.c.h.b16 %v231
  %v823 = vunpack.c.l.b16 %v232
  %v824 = vunpack.c.h.b16 %v232
  %v825 = vunpack.c.l.b16 %v233
  %v826 = vunpack.c.h.b16 %v233
  %v827 = vunpack.c.l.b16 %v234
  %v828 = vunpack.c.h.b16 %v234
  %v829 = vunpack.c.l.b16 %v235
  %v830 = vunpack.c.h.b16 %v235
  %v831 = vunpack.c.l.b16 %v236
  %v832 = vunpack.c.h.b16 %v236
  %v833 = vunpack.c.l.b16 %v237
  %v834 = vunpack.c.h.b16 %v237
  %v835 = vunpack.c.l.b16 %v238
  %v836 = vunpack.c.h.b16 %v238
  %v837 = vunpack.c.l.b16 %v239
  %v838 = vunpack.c.h.b16 %v239
  %v839 = vunpack.c.l.b16 %v240
  %v840 = vunpack.c.h.b16 %v240
  %v841 = vunpack.c.l.b16 %v241
  %v842 = vunpack.c.h.b16 %v241
  %v843 = vunpack.c.l.b16 %v242
  %v844 = vunpack.c.h.b16 %v242
  %v845 = vunpack.c.l.b16 %v243
  %v846 = vunpack.c.h.b16 %v243
  %v847 = vunpack.c.l.b16 %v244
  %v848 = vunpack.c.h.b16 %v244
  %v849 = vunpack.c.l.b16 %v245
  %v850 = vunpack.c.h.b16 %v245
  %v851 = vunpack.c.l.b16 %v246
  %v852 = vunpack.c.h.b16 %v246
  %v853 = vpack.c.b16 %v455, %v453
  %v854 = vpack.c.b16 %v456, %v454
  %v855 = vpack.c.b16 %v459, %v457
  %v856 = vpack.c.b16 %v460, %v458
  %v857 = vpack.c.b16 %v463, %v461
  %v858 = vpack.c.b16 %v464, %v462
  %v859 = vpack.c.b16 %v467, %v465
  %v860 = vpack.c.b16 %v468, %v466
  %v861 = vpack.c.b16 %v471, %v469
  %v862 = vpack.c.b16 %v472, %v470
  %v863 = vpack.c.b16 %v475, %v473
  %v864 = vpack.c.b16 %v476, %v474
  %v865 = vpack.c.b16 %v479, %v477
  %v866 = vpack.c.b16 %v480, %v478
  %v867 = vpack.c.b16 %v483, %v481
  %v868 = vpack.c.b16 %v484, %v482
  %v869 = vpack.c.b16 %v487, %v485
  %v870 = vpack.c.b16 %v488, %v486
  %v871 = vpack.c.b16 %v491, %v489
  %v872 = vpack.c.b16 %v492, %v490
  %v873 = vpack.c.b16 %v495, %v493
  %v874 = vpack.c.b16 %v496, %v494
  %v875 = vpack.c.b16 %v499, %v497
  %v876 = vpack.c.b16 %v500, %v498
  %v877 = vpack.c.b16 %v503, %v501
  %v878 = vpack.c.b16 %v504, %v502
  %v879 = vpack.c.b16 %v507, %v505
  %v880 = vpack.c.b16 %v508, %v506
  %v881 = vpack.c.b16 %v511, %v509
  %v882 = vpack.c.b16 %v512, %v510
  %v883 = vpack.c.b16 %v515, %v513
  %v884 = vpack.c.b16 %v516, %v514
  %v885 = vpack.c.b16 %v519, %v517
  %v886 = vpack.c.b16 %v520, %v518
  %v887 = vpack.c.b16 %v523, %v521
  %v888 = vpack.c.b16 %v524, %v522
  %v889 = vpack.c.b16 %v527, %v525
  %v890 = vpack.c.b16 %v528, %v526
  %v891 = vpack.c.b16 %v531, %v529
  %v892 = vpack.c.b16 %v532, %v530
  %v893 = vpack.c.b16 %v535, %v533
  %v894 = vpack.c.b16 %v536, %v534
  %v895 = vpack.c.b16 %v539, %v537
  %v896 = vpack.c.b16 %v540, %v538
  %v897 = vpack.c.b16 %v543, %v541
  %v898 = vpack.c.b16 %v544, %v542
  %v899 = vpack.c.b16 %v547, %v545
  %v900 = vpack.c.b16 %v548, %v546
  %v901 = vpack.c.b16 %v551, %v549
  %v902 = vpack.c.b16 %v552, %v550
  %v903 = vpack.c.b16 %v555, %v553
  %v904 = vpack.c.b16 %v556, %v554
  %v905 = vpack.c.b16 %v559, %v557
  %v906 = vpack.c.b16 %v560, %v558
  %v907 = vpack.c.b16 %v563, %v561
  %v908 = vpack.c.b16 %v564, %v562
  %v909 = vpack.c.b16 %v567, %v565
  %v910 = vpack.c.b16 %v568, %v566
  %v911 = vpack.c.b16 %v571, %v569
  %v912 = vpack.c.b16 %v572, %v570
  %v913 = vpack.c.b16 %v575, %v573
  %v914 = vpack.c.b16 %v576, %v574
  %v915 = vpack.c.b16 %v579, %v577
  %v916 = vpack.c.b16 %v580, %v578
  %v917 = vpack.c.b16 %v583, %v581
  %v918 = vpack.c.b16 %v584, %v582
  %v919 = vpack.c.b16 %v587, %v585
  %v920 = vpack.c.b16 %v588, %v586
  %v921 = vpack.c.b16 %v591, %v589
  %v922 = vpack.c.b16 %v592, %v590
  %v923 = vpack.c.b16 %v595, %v593
  %v924 = vpack.c.b16 %v596, %v594
  %v925 = vpack.c.b16 %v599, %v597
  %v926 = vpack.c.b16 %v600, %v598
  %v927 = vpack.c.b16 %v603, %v601
  %v928 = vpack.c.b16 %v604, %v602
  %v929 = vpack.c.b16 %v607, %v605
  %v930 = vpack.c.b16 %v608, %v606
  %v931 = vpack.c.b16 %v611, %v609
  %v932 = vpack.c.b16 %v612, %v610
  %v933 = vpack.c.b16 %v615, %v613
  %v934 = vpack.c.b16 %v616, %v614
  %v935 = vpack.c.b16 %v619, %v617
  %v936 = vpack.c.b16 %v620, %v618
  %v937 = vpack.c.b16 %v623, %v621
  %v938 = vpack.c.b16 %v624, %v622
  %v939 = vpack.c.b16 %v627, %v625
  %v940 = vpack.c.b16 %v628, %v626
  %v941 = vpack.c.b16 %v631, %v629
  %v942 = vpack.c.b16 %v632, %v630
  %v943 = vpack.c.b16 %v635, %v633
  %v944 = vpack.c.b16 %v636, %v634
  %v945 = vpack.c.b16 %v639, %v637
  %v946 = vpack.c.b16 %v640, %v638
  %v947 = vpack.c.b16 %v643, %v641
  %v948 = vpack.c.b16 %v644, %v642
  %v949 = vpack.c.b16 %v647, %v645
  %v950 = vpack.c.b16 %v648, %v646
  %v951 = vpack.c.b16 %v651, %v649
  %v952 = vpack.c.b16 %v652, %v650
  %v953 = vpack.c.b16 %v655, %v653
  %v954 = vpack.c.b16 %v656, %v654
  %v955 = vpack.c.b16 %v659, %v657
  %v956 = vpack.c.b16 %v660, %v658
  %v957 = vpack.c.b16 %v663, %v661
  %v958 = vpack.c.b16 %v664, %v662
  %v959 = vpack.c.b16 %v667, %v665
  %v960 = vpack.c.b16 %v668, %v666
  %v961 = vpack.c.b16 %v671, %v669
  %v962 = vpack.c.b16 %v672, %v670
  %v963 = vpack.c.b16 %v675, %v673
  %v964 = vpack.c.b16 %v676, %v674
  %v965 = vpack.c.b16 %v679, %v677
  %v966 = vpack.c.b16 %v680, %v678
  %v967 = vpack.c.b16 %v683, %v681
  %v968 = vpack.c.b16 %v684, %v682
  %v969 = vpack.c.b16 %v687, %v685
  %v970 = vpack.c.b16 %v688, %v686
  %v971 = vpack.c.b16 %v691, %v689
  %v972 = vpack.c.b16 %v692, %v690
  %v973 = vpack.c.b16 %v695, %v693
  %v974 = vpack.c.b16 %v696, %v694
  %v975 = vpack.c.b16 %v699, %v697
  %v976 = vpack.c.b16 %v700, %v698
  %v977 = vpack.c.b16 %v703, %v701
  %v978 = vpack.c.b16 %v704, %v702
  %v979 = vpack.c.b16 %v707, %v705
  %v980 = vpack.c.b16 %v708, %v706
  %v981 = vpack.c.b16 %v711, %v709
  %v982 = vpack.c.b16 %v712, %v710
  %v983 = vpack.c.b16 %v715, %v713
  %v984 = vpack.c.b16 %v716, %v714
  %v985 = vpack.c.b16 %v719, %v717
  %v986 = vpack.c.b16 %v720, %v718
  %v987 = vpack.c.b16 %v723, %v721
  %v988 = vpack.c.b16 %v724, %v722
  %v989 = vpack.c.b16 %v727, %v725
  %v990 = vpack.c.b16 %v728, %v726
  %v991 = vpack.c.b16 %v731, %v729
  %v992 = vpack.c.b16 %v732, %v730
  %v993 = vpack.c.b16 %v735, %v733
  %v994 = vpack.c.b16 %v736, %v734
  %v995 = vpack.c.b16 %v739, %v737
  %v996 = vpack.c.b16 %v740, %v738
  %v997 = vpack.c.b16 %v743, %v741
  %v998 = vpack.c.b16 %v744, %v742
  %v999 = vpack.c.b16 %v747, %v745
  %v1000 = vpack.c.b16 %v748, %v746
  %v1001 = vpack.c.b16 %v751, %v749
  %v1002 = vpack.c.b16 %v752, %v750
  %v1003 = vpack.c.b16 %v755, %v753
  %v1004 = vpack.c.b16 %v756, %v754
  %v1005 = vpack.c.b16 %v759, %v757
  %v1006 = vpack.c.b16 %v760, %v758
  %v1007 = vpack.c.b16 %v763, %v761
  %v1008 = vpack.c.b16 %v764, %v762
  %v1009 = vpack.c.b16 %v767, %v765
  %v1010 = vpack.c.b16 %v768, %v766
  %v1011 = vpack.c.b16 %v771, %v769
  %v1012 = vpack.c.b16 %v772, %v770
  %v1013 = vpack.c.b16 %v775, %v773
  %v1014 = vpack.c.b16 %v776, %v774
  %v1015 = vpack.c.b16 %v779, %v777
  %v1016 = vpack.c.b16 %v780, %v778
  %v1017 = vpack.c.b16 %v783, %v781
  %v1018 = vpack.c.b16 %v784, %v782
  %v1019 = vpack.c.b16 %v787, %v785
  %v1020 = vpack.c.b16 %v788, %v786
  %v1021 = vpack.c.b16 %v791, %v789
  %v1022 = vpack.c.b16 %v792, %v790
  %v1023 = vpack.c.b16 %v795, %v793
  %v1024 = vpack.c.b16 %v796, %v794
  %v1025 = vpack.c.b16 %v799, %v797
  %v1026 = vpack.c.b16 %v800, %v798
  %v1027 = vpack.c.b16 %v803, %v801
  %v1028 = vpack.c.b16 %v804, %v802
  %v1029 = vpack.c.b16 %v807, %v805
  %v1030 = vpack.c.b16 %v808, %v806
  %v1031 = vpack.c.b16 %v811, %v809
  %v1032 = vpack.c.b16 %v812, %v810
  %v1033 = vpack.c.b16 %v815, %v813
  %v1034 = vpack.c.b16 %v816, %v814
  %v1035 = vpack.c.b16 %v819, %v817
  %v1036 = vpack.c.b16 %v820, %v818
  %v1037 = vpack.c.b16 %v823, %v821
  %v1038 = vpack.c.b16 %v824, %v822
  %v1039 = vpack.c.b16 %v827, %v825
  %v1040 = vpack.c.b16 %v828, %v826
  %v1041 = vpack.c.b16 %v831, %v829
  %v1042 = vpack.c.b16 %v832, %v830
  %v1043 = vpack.c.b16 %v835, %v833
  %v1044 = vpack.c.b16 %v836, %v834
  %v1045 = vpack.c.b16 %v839, %v837
  %v1046 = vpack.c.b16 %v840, %v838
  %v1047 = vpack.c.b16 %v843, %v841
  %v1048 = vpack.c.b16 %v844, %v842
  %v1049 = vpack.c.b16 %v847, %v845
  %v1050 = vpack.c.b16 %v848, %v846
  %v1051 = vpack.c.b16 %v851, %v849
  %v1052 = vpack.c.b16 %v852, %v850
  %vm1253 = vcmask 523264
  %v1255 = vsel %vm1253, %v46, 0
  %1257 = vmatpush.bf16.msra.mxu0 %v867
  %1258 = vmatpush.bf16.msra.mxu0 %v865
  %1259 = vmatpush.bf16.msra.mxu0 %v863
  %1260 = vmatpush.bf16.msra.mxu0 %v861
  %1261 = vmatpush.bf16.msra.mxu0 %v859
  %1262 = vmatpush.bf16.msra.mxu0 %v857
  %1263 = vmatpush.bf16.msra.mxu0 %v855
  %1264 = vmatpush.bf16.msra.mxu0 %v853
  %1265 = vmatmul.bf16.gmra.mxu0 %v34
  %v1266 = vpop.f32.mrf.mxu0
  %v1267 = vadd.f32 %v249, %v1266
  %v1268 = vpop.f32.mrf.mxu0
  %1269 = vdwg.mxu0
  %1270 = vmatpush.bf16.msra.mxu0 %v883
  %1271 = vmatpush.bf16.msra.mxu0 %v881
  %1272 = vmatpush.bf16.msra.mxu0 %v879
  %1273 = vmatpush.bf16.msra.mxu0 %v877
  %1274 = vmatpush.bf16.msra.mxu0 %v875
  %1275 = vmatpush.bf16.msra.mxu0 %v873
  %1276 = vmatpush.bf16.msra.mxu0 %v871
  %1277 = vmatpush.bf16.msra.mxu0 %v869
  %1278 = vmatmul.bf16.gmra.mxu0 %v35
  %v1279 = vpop.f32.mrf.mxu0
  %v1280 = vadd.f32 %v1267, %v1279
  %v1281 = vpop.f32.mrf.mxu0
  %1282 = vdwg.mxu0
  %1283 = vmatpush.bf16.msra.mxu0 %v899
  %1284 = vmatpush.bf16.msra.mxu0 %v897
  %1285 = vmatpush.bf16.msra.mxu0 %v895
  %1286 = vmatpush.bf16.msra.mxu0 %v893
  %1287 = vmatpush.bf16.msra.mxu0 %v891
  %1288 = vmatpush.bf16.msra.mxu0 %v889
  %1289 = vmatpush.bf16.msra.mxu0 %v887
  %1290 = vmatpush.bf16.msra.mxu0 %v885
  %1291 = vmatmul.bf16.gmra.mxu0 %v36
  %v1292 = vpop.f32.mrf.mxu0
  %v1293 = vadd.f32 %v1280, %v1292
  %v1294 = vpop.f32.mrf.mxu0
  %1295 = vdwg.mxu0
  %1296 = vmatpush.bf16.msra.mxu0 %v915
  %1297 = vmatpush.bf16.msra.mxu0 %v913
  %1298 = vmatpush.bf16.msra.mxu0 %v911
  %1299 = vmatpush.bf16.msra.mxu0 %v909
  %1300 = vmatpush.bf16.msra.mxu0 %v907
  %1301 = vmatpush.bf16.msra.mxu0 %v905
  %1302 = vmatpush.bf16.msra.mxu0 %v903
  %1303 = vmatpush.bf16.msra.mxu0 %v901
  %1304 = vmatmul.bf16.gmra.mxu0 %v37
  %v1305 = vpop.f32.mrf.mxu0
  %v1306 = vadd.f32 %v1293, %v1305
  %v1307 = vpop.f32.mrf.mxu0
  %1308 = vdwg.mxu0
  %1309 = vmatpush.bf16.msra.mxu0 %v931
  %1310 = vmatpush.bf16.msra.mxu0 %v929
  %1311 = vmatpush.bf16.msra.mxu0 %v927
  %1312 = vmatpush.bf16.msra.mxu0 %v925
  %1313 = vmatpush.bf16.msra.mxu0 %v923
  %1314 = vmatpush.bf16.msra.mxu0 %v921
  %1315 = vmatpush.bf16.msra.mxu0 %v919
  %1316 = vmatpush.bf16.msra.mxu0 %v917
  %1317 = vmatmul.bf16.gmra.mxu0 %v38
  %v1318 = vpop.f32.mrf.mxu0
  %v1319 = vadd.f32 %v1306, %v1318
  %v1320 = vpop.f32.mrf.mxu0
  %1321 = vdwg.mxu0
  %1322 = vmatpush.bf16.msra.mxu0 %v947
  %1323 = vmatpush.bf16.msra.mxu0 %v945
  %1324 = vmatpush.bf16.msra.mxu0 %v943
  %1325 = vmatpush.bf16.msra.mxu0 %v941
  %1326 = vmatpush.bf16.msra.mxu0 %v939
  %1327 = vmatpush.bf16.msra.mxu0 %v937
  %1328 = vmatpush.bf16.msra.mxu0 %v935
  %1329 = vmatpush.bf16.msra.mxu0 %v933
  %1330 = vmatmul.bf16.gmra.mxu0 %v39
  %v1331 = vpop.f32.mrf.mxu0
  %v1332 = vadd.f32 %v1319, %v1331
  %v1333 = vpop.f32.mrf.mxu0
  %1334 = vdwg.mxu0
  %1335 = vmatpush.bf16.msra.mxu0 %v963
  %1336 = vmatpush.bf16.msra.mxu0 %v961
  %1337 = vmatpush.bf16.msra.mxu0 %v959
  %1338 = vmatpush.bf16.msra.mxu0 %v957
  %1339 = vmatpush.bf16.msra.mxu0 %v955
  %1340 = vmatpush.bf16.msra.mxu0 %v953
  %1341 = vmatpush.bf16.msra.mxu0 %v951
  %1342 = vmatpush.bf16.msra.mxu0 %v949
  %1343 = vmatmul.bf16.gmra.mxu0 %v40
  %v1344 = vpop.f32.mrf.mxu0
  %v1345 = vadd.f32 %v1332, %v1344
  %v1346 = vpop.f32.mrf.mxu0
  %1347 = vdwg.mxu0
  %1348 = vmatpush.bf16.msra.mxu0 %v979
  %1349 = vmatpush.bf16.msra.mxu0 %v977
  %1350 = vmatpush.bf16.msra.mxu0 %v975
  %1351 = vmatpush.bf16.msra.mxu0 %v973
  %1352 = vmatpush.bf16.msra.mxu0 %v971
  %1353 = vmatpush.bf16.msra.mxu0 %v969
  %1354 = vmatpush.bf16.msra.mxu0 %v967
  %1355 = vmatpush.bf16.msra.mxu0 %v965
  %1356 = vmatmul.bf16.gmra.mxu0 %v41
  %v1357 = vpop.f32.mrf.mxu0
  %v1358 = vadd.f32 %v1345, %v1357
  %v1359 = vpop.f32.mrf.mxu0
  %1360 = vdwg.mxu0
  %1361 = vmatpush.bf16.msra.mxu0 %v995
  %1362 = vmatpush.bf16.msra.mxu0 %v993
  %1363 = vmatpush.bf16.msra.mxu0 %v991
  %1364 = vmatpush.bf16.msra.mxu0 %v989
  %1365 = vmatpush.bf16.msra.mxu0 %v987
  %1366 = vmatpush.bf16.msra.mxu0 %v985
  %1367 = vmatpush.bf16.msra.mxu0 %v983
  %1368 = vmatpush.bf16.msra.mxu0 %v981
  %1369 = vmatmul.bf16.gmra.mxu0 %v42
  %v1370 = vpop.f32.mrf.mxu0
  %v1371 = vadd.f32 %v1358, %v1370
  %v1372 = vpop.f32.mrf.mxu0
  %1373 = vdwg.mxu0
  %1374 = vmatpush.bf16.msra.mxu0 %v1011
  %1375 = vmatpush.bf16.msra.mxu0 %v1009
  %1376 = vmatpush.bf16.msra.mxu0 %v1007
  %1377 = vmatpush.bf16.msra.mxu0 %v1005
  %1378 = vmatpush.bf16.msra.mxu0 %v1003
  %1379 = vmatpush.bf16.msra.mxu0 %v1001
  %1380 = vmatpush.bf16.msra.mxu0 %v999
  %1381 = vmatpush.bf16.msra.mxu0 %v997
  %1382 = vmatmul.bf16.gmra.mxu0 %v43
  %v1383 = vpop.f32.mrf.mxu0
  %v1384 = vadd.f32 %v1371, %v1383
  %v1385 = vpop.f32.mrf.mxu0
  %1386 = vdwg.mxu0
  %1387 = vmatpush.bf16.msra.mxu0 %v1027
  %1388 = vmatpush.bf16.msra.mxu0 %v1025
  %1389 = vmatpush.bf16.msra.mxu0 %v1023
  %1390 = vmatpush.bf16.msra.mxu0 %v1021
  %1391 = vmatpush.bf16.msra.mxu0 %v1019
  %1392 = vmatpush.bf16.msra.mxu0 %v1017
  %1393 = vmatpush.bf16.msra.mxu0 %v1015
  %1394 = vmatpush.bf16.msra.mxu0 %v1013
  %1395 = vmatmul.bf16.gmra.mxu0 %v44
  %v1396 = vpop.f32.mrf.mxu0
  %v1397 = vadd.f32 %v1384, %v1396
  %v1398 = vpop.f32.mrf.mxu0
  %1399 = vdwg.mxu0
  %1400 = vmatpush.bf16.msra.mxu0 %v1043
  %1401 = vmatpush.bf16.msra.mxu0 %v1041
  %1402 = vmatpush.bf16.msra.mxu0 %v1039
  %1403 = vmatpush.bf16.msra.mxu0 %v1037
  %1404 = vmatpush.bf16.msra.mxu0 %v1035
  %1405 = vmatpush.bf16.msra.mxu0 %v1033
  %1406 = vmatpush.bf16.msra.mxu0 %v1031
  %1407 = vmatpush.bf16.msra.mxu0 %v1029
  %1408 = vmatmul.bf16.gmra.mxu0 %v45
  %v1409 = vpop.f32.mrf.mxu0
  %v1410 = vadd.f32 %v1397, %v1409
  %v1411 = vpop.f32.mrf.mxu0
  %1412 = vdwg.mxu0
  %1413 = vmatpush.bf16.msra.mxu0 0
  %1414 = vmatpush.bf16.msra.mxu0 0
  %1415 = vmatpush.bf16.msra.mxu0 0
  %1416 = vmatpush.bf16.msra.mxu0 0
  %1417 = vmatpush.bf16.msra.mxu0 %v1051
  %1418 = vmatpush.bf16.msra.mxu0 %v1049
  %1419 = vmatpush.bf16.msra.mxu0 %v1047
  %1420 = vmatpush.bf16.msra.mxu0 %v1045
  %1421 = vmatmul.bf16.gmra.mxu0 %v1255
  %v1422 = vpop.f32.mrf.mxu0
  %v1423 = vadd.f32 %v1410, %v1422
  %v1424 = vpop.f32.mrf.mxu0
  %1425 = vdwg.mxu0
  %1426 = vmatpush.bf16.msra.mxu0 %v868
  %1427 = vmatpush.bf16.msra.mxu0 %v866
  %1428 = vmatpush.bf16.msra.mxu0 %v864
  %1429 = vmatpush.bf16.msra.mxu0 %v862
  %1430 = vmatpush.bf16.msra.mxu0 %v860
  %1431 = vmatpush.bf16.msra.mxu0 %v858
  %1432 = vmatpush.bf16.msra.mxu0 %v856
  %1433 = vmatpush.bf16.msra.mxu0 %v854
  %1434 = vmatmul.bf16.gmra.mxu0 %v34
  %v1435 = vpop.f32.mrf.mxu0
  %v1436 = vadd.f32 %v250, %v1435
  %v1437 = vpop.f32.mrf.mxu0
  %1438 = vdwg.mxu0
  %1439 = vmatpush.bf16.msra.mxu0 %v884
  %1440 = vmatpush.bf16.msra.mxu0 %v882
  %1441 = vmatpush.bf16.msra.mxu0 %v880
  %1442 = vmatpush.bf16.msra.mxu0 %v878
  %1443 = vmatpush.bf16.msra.mxu0 %v876
  %1444 = vmatpush.bf16.msra.mxu0 %v874
  %1445 = vmatpush.bf16.msra.mxu0 %v872
  %1446 = vmatpush.bf16.msra.mxu0 %v870
  %1447 = vmatmul.bf16.gmra.mxu0 %v35
  %v1448 = vpop.f32.mrf.mxu0
  %v1449 = vadd.f32 %v1436, %v1448
  %v1450 = vpop.f32.mrf.mxu0
  %1451 = vdwg.mxu0
  %1452 = vmatpush.bf16.msra.mxu0 %v900
  %1453 = vmatpush.bf16.msra.mxu0 %v898
  %1454 = vmatpush.bf16.msra.mxu0 %v896
  %1455 = vmatpush.bf16.msra.mxu0 %v894
  %1456 = vmatpush.bf16.msra.mxu0 %v892
  %1457 = vmatpush.bf16.msra.mxu0 %v890
  %1458 = vmatpush.bf16.msra.mxu0 %v888
  %1459 = vmatpush.bf16.msra.mxu0 %v886
  %1460 = vmatmul.bf16.gmra.mxu0 %v36
  %v1461 = vpop.f32.mrf.mxu0
  %v1462 = vadd.f32 %v1449, %v1461
  %v1463 = vpop.f32.mrf.mxu0
  %1464 = vdwg.mxu0
  %1465 = vmatpush.bf16.msra.mxu0 %v916
  %1466 = vmatpush.bf16.msra.mxu0 %v914
  %1467 = vmatpush.bf16.msra.mxu0 %v912
  %1468 = vmatpush.bf16.msra.mxu0 %v910
  %1469 = vmatpush.bf16.msra.mxu0 %v908
  %1470 = vmatpush.bf16.msra.mxu0 %v906
  %1471 = vmatpush.bf16.msra.mxu0 %v904
  %1472 = vmatpush.bf16.msra.mxu0 %v902
  %1473 = vmatmul.bf16.gmra.mxu0 %v37
  %v1474 = vpop.f32.mrf.mxu0
  %v1475 = vadd.f32 %v1462, %v1474
  %v1476 = vpop.f32.mrf.mxu0
  %1477 = vdwg.mxu0
  %1478 = vmatpush.bf16.msra.mxu0 %v932
  %1479 = vmatpush.bf16.msra.mxu0 %v930
  %1480 = vmatpush.bf16.msra.mxu0 %v928
  %1481 = vmatpush.bf16.msra.mxu0 %v926
  %1482 = vmatpush.bf16.msra.mxu0 %v924
  %1483 = vmatpush.bf16.msra.mxu0 %v922
  %1484 = vmatpush.bf16.msra.mxu0 %v920
  %1485 = vmatpush.bf16.msra.mxu0 %v918
  %1486 = vmatmul.bf16.gmra.mxu0 %v38
  %v1487 = vpop.f32.mrf.mxu0
  %v1488 = vadd.f32 %v1475, %v1487
  %v1489 = vpop.f32.mrf.mxu0
  %1490 = vdwg.mxu0
  %1491 = vmatpush.bf16.msra.mxu0 %v948
  %1492 = vmatpush.bf16.msra.mxu0 %v946
  %1493 = vmatpush.bf16.msra.mxu0 %v944
  %1494 = vmatpush.bf16.msra.mxu0 %v942
  %1495 = vmatpush.bf16.msra.mxu0 %v940
  %1496 = vmatpush.bf16.msra.mxu0 %v938
  %1497 = vmatpush.bf16.msra.mxu0 %v936
  %1498 = vmatpush.bf16.msra.mxu0 %v934
  %1499 = vmatmul.bf16.gmra.mxu0 %v39
  %v1500 = vpop.f32.mrf.mxu0
  %v1501 = vadd.f32 %v1488, %v1500
  %v1502 = vpop.f32.mrf.mxu0
  %1503 = vdwg.mxu0
  %1504 = vmatpush.bf16.msra.mxu0 %v964
  %1505 = vmatpush.bf16.msra.mxu0 %v962
  %1506 = vmatpush.bf16.msra.mxu0 %v960
  %1507 = vmatpush.bf16.msra.mxu0 %v958
  %1508 = vmatpush.bf16.msra.mxu0 %v956
  %1509 = vmatpush.bf16.msra.mxu0 %v954
  %1510 = vmatpush.bf16.msra.mxu0 %v952
  %1511 = vmatpush.bf16.msra.mxu0 %v950
  %1512 = vmatmul.bf16.gmra.mxu0 %v40
  %v1513 = vpop.f32.mrf.mxu0
  %v1514 = vadd.f32 %v1501, %v1513
  %v1515 = vpop.f32.mrf.mxu0
  %1516 = vdwg.mxu0
  %1517 = vmatpush.bf16.msra.mxu0 %v980
  %1518 = vmatpush.bf16.msra.mxu0 %v978
  %1519 = vmatpush.bf16.msra.mxu0 %v976
  %1520 = vmatpush.bf16.msra.mxu0 %v974
  %1521 = vmatpush.bf16.msra.mxu0 %v972
  %1522 = vmatpush.bf16.msra.mxu0 %v970
  %1523 = vmatpush.bf16.msra.mxu0 %v968
  %1524 = vmatpush.bf16.msra.mxu0 %v966
  %1525 = vmatmul.bf16.gmra.mxu0 %v41
  %v1526 = vpop.f32.mrf.mxu0
  %v1527 = vadd.f32 %v1514, %v1526
  %v1528 = vpop.f32.mrf.mxu0
  %1529 = vdwg.mxu0
  %1530 = vmatpush.bf16.msra.mxu0 %v996
  %1531 = vmatpush.bf16.msra.mxu0 %v994
  %1532 = vmatpush.bf16.msra.mxu0 %v992
  %1533 = vmatpush.bf16.msra.mxu0 %v990
  %1534 = vmatpush.bf16.msra.mxu0 %v988
  %1535 = vmatpush.bf16.msra.mxu0 %v986
  %1536 = vmatpush.bf16.msra.mxu0 %v984
  %1537 = vmatpush.bf16.msra.mxu0 %v982
  %1538 = vmatmul.bf16.gmra.mxu0 %v42
  %v1539 = vpop.f32.mrf.mxu0
  %v1540 = vadd.f32 %v1527, %v1539
  %v1541 = vpop.f32.mrf.mxu0
  %1542 = vdwg.mxu0
  %1543 = vmatpush.bf16.msra.mxu0 %v1012
  %1544 = vmatpush.bf16.msra.mxu0 %v1010
  %1545 = vmatpush.bf16.msra.mxu0 %v1008
  %1546 = vmatpush.bf16.msra.mxu0 %v1006
  %1547 = vmatpush.bf16.msra.mxu0 %v1004
  %1548 = vmatpush.bf16.msra.mxu0 %v1002
  %1549 = vmatpush.bf16.msra.mxu0 %v1000
  %1550 = vmatpush.bf16.msra.mxu0 %v998
  %1551 = vmatmul.bf16.gmra.mxu0 %v43
  %v1552 = vpop.f32.mrf.mxu0
  %v1553 = vadd.f32 %v1540, %v1552
  %v1554 = vpop.f32.mrf.mxu0
  %1555 = vdwg.mxu0
  %1556 = vmatpush.bf16.msra.mxu0 %v1028
  %1557 = vmatpush.bf16.msra.mxu0 %v1026
  %1558 = vmatpush.bf16.msra.mxu0 %v1024
  %1559 = vmatpush.bf16.msra.mxu0 %v1022
  %1560 = vmatpush.bf16.msra.mxu0 %v1020
  %1561 = vmatpush.bf16.msra.mxu0 %v1018
  %1562 = vmatpush.bf16.msra.mxu0 %v1016
  %1563 = vmatpush.bf16.msra.mxu0 %v1014
  %1564 = vmatmul.bf16.gmra.mxu0 %v44
  %v1565 = vpop.f32.mrf.mxu0
  %v1566 = vadd.f32 %v1553, %v1565
  %v1567 = vpop.f32.mrf.mxu0
  %1568 = vdwg.mxu0
  %1569 = vmatpush.bf16.msra.mxu0 %v1044
  %1570 = vmatpush.bf16.msra.mxu0 %v1042
  %1571 = vmatpush.bf16.msra.mxu0 %v1040
  %1572 = vmatpush.bf16.msra.mxu0 %v1038
  %1573 = vmatpush.bf16.msra.mxu0 %v1036
  %1574 = vmatpush.bf16.msra.mxu0 %v1034
  %1575 = vmatpush.bf16.msra.mxu0 %v1032
  %1576 = vmatpush.bf16.msra.mxu0 %v1030
  %1577 = vmatmul.bf16.gmra.mxu0 %v45
  %v1578 = vpop.f32.mrf.mxu0
  %v1579 = vadd.f32 %v1566, %v1578
  %v1580 = vpop.f32.mrf.mxu0
  %1581 = vdwg.mxu0
  %1582 = vmatpush.bf16.msra.mxu0 0
  %1583 = vmatpush.bf16.msra.mxu0 0
  %1584 = vmatpush.bf16.msra.mxu0 0
  %1585 = vmatpush.bf16.msra.mxu0 0
  %1586 = vmatpush.bf16.msra.mxu0 %v1052
  %1587 = vmatpush.bf16.msra.mxu0 %v1050
  %1588 = vmatpush.bf16.msra.mxu0 %v1048
  %1589 = vmatpush.bf16.msra.mxu0 %v1046
  %1590 = vmatmul.bf16.gmra.mxu0 %v1255
  %v1591 = vpop.f32.mrf.mxu0
  %v1592 = vadd.f32 %v1579, %v1591
  %v1593 = vpop.f32.mrf.mxu0
  %1594 = vdwg.mxu0
  %v1595 = vmax.f32 %v1423, 0.0
  %v1596 = vmax.f32 %v1592, 0.0
  %v1597 = vpack.c.bf16 %v1595, %v1595
  %v1598 = vpack.c.bf16 %v1596, %v1596
  %v1599 = vld [vmem:[%s3] sm:$0xf]
  %v1600 = vld [vmem:[%s3 + $0x4] sm:$0xf]
  %v1601 = vld [vmem:[%s3 + $0x8] sm:$0xf]
  %v1602 = vld [vmem:[%s3 + $0xc] sm:$0xf]
  %v1603 = vld [vmem:[%s3 + $0x10] sm:$0xf]
  %v1604 = vld [vmem:[%s3 + $0x14] sm:$0xf]
  %v1605 = vld [vmem:[%s3 + $0x18] sm:$0xf]
  %v1606 = vld [vmem:[%s3 + $0x1c] sm:$0xf]
  %v1607 = vld [vmem:[%s3 + $0x20] sm:$0xf]
  %v1608 = vld [vmem:[%s3 + $0x24] sm:$0xf]
  %v1609 = vld [vmem:[%s3 + $0x28] sm:$0xf]
  %v1610 = vld [vmem:[%s3 + $0x2c] sm:$0xf]
  %v1611 = vld [vmem:[%s3 + $0x30] sm:$0xf]
  %v1612 = vld [vmem:[%s3 + $0x34] sm:$0xf]
  %v1613 = vld [vmem:[%s3 + $0x38] sm:$0xf]
  %v1614 = vld [vmem:[%s3 + $0x3c] sm:$0xf]
  %v1615 = vld [vmem:[%s3 + $0x40] sm:$0xf]
  %v1616 = vld [vmem:[%s3 + $0x44] sm:$0xf]
  %v1617 = vld [vmem:[%s3 + $0x48] sm:$0xf]
  %v1618 = vld [vmem:[%s3 + $0x4c] sm:$0xf]
  %v1619 = vld [vmem:[%s3 + $0x50] sm:$0xf]
  %v1620 = vld [vmem:[%s3 + $0x54] sm:$0xf]
  %v1621 = vld [vmem:[%s3 + $0x58] sm:$0xf]
  %v1622 = vld [vmem:[%s3 + $0x5c] sm:$0xf]
  %v1623 = vld [vmem:[%s3 + $0x60] sm:$0xf]
  %v1624 = vld [vmem:[%s3 + $0x64] sm:$0xf]
  %v1625 = vld [vmem:[%s3 + $0x68] sm:$0xf]
  %v1626 = vld [vmem:[%s3 + $0x6c] sm:$0xf]
  %v1627 = vld [vmem:[%s3 + $0x70] sm:$0xf]
  %v1628 = vld [vmem:[%s3 + $0x74] sm:$0xf]
  %v1629 = vld [vmem:[%s3 + $0x78] sm:$0xf]
  %v1630 = vld [vmem:[%s3 + $0x7c] sm:$0xf]
  %v1631 = vld [vmem:[%s4] sm:$0x1]
  %v1633 = vperm.slane %v1631, 0
  %v1667 = vunpack.c.l.b16 %v1599
  %v1668 = vunpack.c.l.b16 %v1600
  %v1669 = vunpack.c.l.b16 %v1601
  %v1670 = vunpack.c.l.b16 %v1602
  %v1671 = vunpack.c.l.b16 %v1603
  %v1672 = vunpack.c.l.b16 %v1604
  %v1673 = vunpack.c.l.b16 %v1605
  %v1674 = vunpack.c.l.b16 %v1606
  %v1675 = vunpack.c.l.b16 %v1607
  %v1676 = vunpack.c.l.b16 %v1608
  %v1677 = vunpack.c.l.b16 %v1609
  %v1678 = vunpack.c.l.b16 %v1610
  %v1679 = vunpack.c.l.b16 %v1611
  %v1680 = vunpack.c.l.b16 %v1612
  %v1681 = vunpack.c.l.b16 %v1613
  %v1682 = vunpack.c.l.b16 %v1614
  %v1683 = vunpack.c.l.b16 %v1615
  %v1684 = vunpack.c.l.b16 %v1616
  %v1685 = vunpack.c.l.b16 %v1617
  %v1686 = vunpack.c.l.b16 %v1618
  %v1687 = vunpack.c.l.b16 %v1619
  %v1688 = vunpack.c.l.b16 %v1620
  %v1689 = vunpack.c.l.b16 %v1621
  %v1690 = vunpack.c.l.b16 %v1622
  %v1691 = vunpack.c.l.b16 %v1623
  %v1692 = vunpack.c.l.b16 %v1624
  %v1693 = vunpack.c.l.b16 %v1625
  %v1694 = vunpack.c.l.b16 %v1626
  %v1695 = vunpack.c.l.b16 %v1627
  %v1696 = vunpack.c.l.b16 %v1628
  %v1697 = vunpack.c.l.b16 %v1629
  %v1698 = vunpack.c.l.b16 %v1630
  %v1699 = vpack.c.b16 %v1668, %v1667
  %v1700 = vpack.c.b16 %v1670, %v1669
  %v1701 = vpack.c.b16 %v1672, %v1671
  %v1702 = vpack.c.b16 %v1674, %v1673
  %v1703 = vpack.c.b16 %v1676, %v1675
  %v1704 = vpack.c.b16 %v1678, %v1677
  %v1705 = vpack.c.b16 %v1680, %v1679
  %v1706 = vpack.c.b16 %v1682, %v1681
  %v1707 = vpack.c.b16 %v1684, %v1683
  %v1708 = vpack.c.b16 %v1686, %v1685
  %v1709 = vpack.c.b16 %v1688, %v1687
  %v1710 = vpack.c.b16 %v1690, %v1689
  %v1711 = vpack.c.b16 %v1692, %v1691
  %v1712 = vpack.c.b16 %v1694, %v1693
  %v1713 = vpack.c.b16 %v1696, %v1695
  %v1714 = vpack.c.b16 %v1698, %v1697
  %1731 = vmatpush.bf16.msra.mxu0 %v1706
  %1732 = vmatpush.bf16.msra.mxu0 %v1705
  %1733 = vmatpush.bf16.msra.mxu0 %v1704
  %1734 = vmatpush.bf16.msra.mxu0 %v1703
  %1735 = vmatpush.bf16.msra.mxu0 %v1702
  %1736 = vmatpush.bf16.msra.mxu0 %v1701
  %1737 = vmatpush.bf16.msra.mxu0 %v1700
  %1738 = vmatpush.bf16.msra.mxu0 %v1699
  %1739 = vmatmul.bf16.gmra.mxu0 %v1597
  %v1740 = vpop.f32.mrf.mxu0
  %v1741 = vadd.f32 %v1633, %v1740
  %v1742 = vpop.f32.mrf.mxu0
  %1743 = vdwg.mxu0
  %1744 = vmatpush.bf16.msra.mxu0 %v1714
  %1745 = vmatpush.bf16.msra.mxu0 %v1713
  %1746 = vmatpush.bf16.msra.mxu0 %v1712
  %1747 = vmatpush.bf16.msra.mxu0 %v1711
  %1748 = vmatpush.bf16.msra.mxu0 %v1710
  %1749 = vmatpush.bf16.msra.mxu0 %v1709
  %1750 = vmatpush.bf16.msra.mxu0 %v1708
  %1751 = vmatpush.bf16.msra.mxu0 %v1707
  %1752 = vmatmul.bf16.gmra.mxu0 %v1598
  %v1753 = vpop.f32.mrf.mxu0
  %v1754 = vadd.f32 %v1741, %v1753
  %v1755 = vpop.f32.mrf.mxu0
  %1756 = vdwg.mxu0
  %1757 = vst [vmem:[%s5] sm:$0xff] %v1754
  // Predicated region
  $region22: #{conv_qnet_forward.3} parent=0 // pred_check
    _
  $region23: #{conv_qnet_forward.3} parent=0 // pred_check_branch
    %1759 = sbr.rel (0) target = $region25
  $region24: #{conv_qnet_forward.3} parent=0 // pred_region
    _
  $region25: #{conv_qnet_forward.3} parent=0 // pred_fallthru
    _
  // Predicated region
  $region26: #{conv_qnet_forward.3} parent=0 // pred_check
    _
  $region27: #{conv_qnet_forward.3} parent=0 // pred_check_branch
    %1761 = sbr.rel (0) target = $region29
  $region28: #{conv_qnet_forward.3} parent=0 // pred_region
    _
  $region29: #{conv_qnet_forward.3} parent=0 // pred_fallthru
    _

// kernel: conv_qnet_forward.2
$region0: #{conv_qnet_forward.2}
  #allocation0 [shape = 'u32[]', space=smem, size = 0x4, offset = 0x4, fixed_abs, tag = 'smem constant byte address 0x4 - core index']
  #allocation1 [shape = 'u32[72,128]{1,0:T(1,128)}', space=vmem, size = 0x9000, scoped, tag = 'internal scratch']
  %s0 = inlined_call_operand.vmem [shape: f32[8,50,160], index: 0, kind: input, shape index: {}]
  %s1 = inlined_call_operand.vmem [shape: bf16[32,50], index: 1, kind: input, shape index: {}]
  %s2 = inlined_call_operand.vmem [shape: f32[32,1], index: 2, kind: input, shape index: {}]
  %s3 = inlined_call_operand.vmem [shape: bf16[9,16,32], index: 3, kind: input, shape index: {}]
  %s4 = inlined_call_operand.vmem [shape: f32[16,1], index: 4, kind: input, shape index: {}]
  %s5 = inlined_call_operand.vmem [shape: f32[8,16,128], index: 5, kind: output, shape index: {}]
  %s6 = sld [smem:[#allocation0]]
  $region30: #{conv_qnet_forward.2} parent=0
    _
  %s8 = ssub.s32 1, %s6
  %s9 = scalar_select 0, %s8, %s6
  // Predicated region
  $region2: #{conv_qnet_forward.2} parent=0 // pred_check
    _
  $region3: #{conv_qnet_forward.2} parent=0 // pred_check_branch
    %11 = sbr.rel (0) target = $region5
  $region4: #{conv_qnet_forward.2} parent=0 // pred_region
    _
  $region5: #{conv_qnet_forward.2} parent=0 // pred_fallthru
    _
  // Predicated region
  $region6: #{conv_qnet_forward.2} parent=0 // pred_check
    _
  $region7: #{conv_qnet_forward.2} parent=0 // pred_check_branch
    %13 = sbr.rel (0) target = $region9
  $region8: #{conv_qnet_forward.2} parent=0 // pred_region
    _
  $region9: #{conv_qnet_forward.2} parent=0 // pred_fallthru
    _
  // Predicated region
  $region10: #{conv_qnet_forward.2} parent=0 // pred_check
    _
  $region11: #{conv_qnet_forward.2} parent=0 // pred_check_branch
    %15 = sbr.rel (0) target = $region13
  $region12: #{conv_qnet_forward.2} parent=0 // pred_region
    _
  $region13: #{conv_qnet_forward.2} parent=0 // pred_fallthru
    _
  // Predicated region
  $region14: #{conv_qnet_forward.2} parent=0 // pred_check
    _
  $region15: #{conv_qnet_forward.2} parent=0 // pred_check_branch
    %17 = sbr.rel (0) target = $region17
  $region16: #{conv_qnet_forward.2} parent=0 // pred_region
    _
  $region17: #{conv_qnet_forward.2} parent=0 // pred_fallthru
    _
  // Predicated region
  $region18: #{conv_qnet_forward.2} parent=0 // pred_check
    _
  $region19: #{conv_qnet_forward.2} parent=0 // pred_check_branch
    %19 = sbr.rel (0) target = $region21
  $region20: #{conv_qnet_forward.2} parent=0 // pred_region
    _
  $region21: #{conv_qnet_forward.2} parent=0 // pred_fallthru
    _
  %v21 = vld [vmem:[%s1] sm:$0xf]
  %v22 = vld [vmem:[%s1 + $0x4] sm:$0xf]
  %v23 = vld [vmem:[%s1 + $0x8] sm:$0xf]
  %v24 = vld [vmem:[%s1 + $0xc] sm:$0xf]
  %v25 = vld [vmem:[%s2] sm:$0xff]
  %v26 = vld [vmem:[%s2 + $0x8] sm:$0xff]
  %v27 = vld [vmem:[%s2 + $0x10] sm:$0xff]
  %v28 = vld [vmem:[%s2 + $0x18] sm:$0xff]
  %v29 = vld [vmem:[%s4] sm:$0xff]
  %v30 = vld [vmem:[%s4 + $0x8] sm:$0xff]
  %v31 = vld [vmem:[%s3] sm:$0xf]
  %v32 = vld [vmem:[%s3 + $0x4] sm:$0xf]
  %s33 = scalar_lea.vmem %s3, 8
  %v34 = vld [vmem:[%s33] sm:$0xf]
  %v35 = vld [vmem:[%s33 + $0x4] sm:$0xf]
  %s36 = scalar_lea.vmem %s3, 16
  %v37 = vld [vmem:[%s36] sm:$0xf]
  %v38 = vld [vmem:[%s36 + $0x4] sm:$0xf]
  %s39 = scalar_lea.vmem %s3, 24
  %v40 = vld [vmem:[%s39] sm:$0xf]
  %v41 = vld [vmem:[%s39 + $0x4] sm:$0xf]
  %s42 = scalar_lea.vmem %s3, 32
  %v43 = vld [vmem:[%s42] sm:$0xf]
  %v44 = vld [vmem:[%s42 + $0x4] sm:$0xf]
  %s45 = scalar_lea.vmem %s3, 40
  %v46 = vld [vmem:[%s45] sm:$0xf]
  %v47 = vld [vmem:[%s45 + $0x4] sm:$0xf]
  %s48 = scalar_lea.vmem %s3, 48
  %v49 = vld [vmem:[%s48] sm:$0xf]
  %v50 = vld [vmem:[%s48 + $0x4] sm:$0xf]
  %s51 = scalar_lea.vmem %s3, 56
  %v52 = vld [vmem:[%s51] sm:$0xf]
  %v53 = vld [vmem:[%s51 + $0x4] sm:$0xf]
  %s54 = scalar_lea.vmem %s3, 64
  %v55 = vld [vmem:[%s54] sm:$0xf]
  %v56 = vld [vmem:[%s54 + $0x4] sm:$0xf]
  %v57 = vld [vmem:[%s0] sm:$0xff]
  %v58 = vld [vmem:[%s0 + $0x8] sm:$0xff]
  %v59 = vld [vmem:[%s0 + $0x10] sm:$0xff]
  %v60 = vld [vmem:[%s0 + $0x18] sm:$0xff]
  %v61 = vld [vmem:[%s0 + $0x20] sm:$0xff]
  %v62 = vld [vmem:[%s0 + $0x28] sm:$0xff]
  %v63 = vld [vmem:[%s0 + $0x30] sm:$0xff]
  %v64 = vld [vmem:[%s0 + $0x38] sm:$0xff]
  %v65 = vld [vmem:[%s0 + $0x40] sm:$0xff]
  %v66 = vld [vmem:[%s0 + $0x48] sm:$0xff]
  %v67 = vld [vmem:[%s0 + $0x50] sm:$0xff]
  %v68 = vld [vmem:[%s0 + $0x58] sm:$0xff]
  %v69 = vld [vmem:[%s0 + $0x60] sm:$0x3]
  %v70 = vld [vmem:[%s0 + $0x68] sm:$0x3]
  %v71 = vpack.c.bf16 %v59, %v57
  %v72 = vpack.c.bf16 %v60, %v58
  %v73 = vpack.c.bf16 %v63, %v61
  %v74 = vpack.c.bf16 %v64, %v62
  %v75 = vpack.c.bf16 %v67, %v65
  %v76 = vpack.c.bf16 %v68, %v66
  %v77 = vpack.c.bf16 %v69, %v69
  %v78 = vpack.c.bf16 %v70, %v70
  %80 = vset.pattern.permute.xlu0 0
  %81 = vperm.xlu0 %80, %v25
  %v82 = vpop.permute.xlu0 %81
  %85 = vset.pattern.permute.xlu0 0
  %86 = vperm.xlu0 %85, %v26
  %v87 = vpop.permute.xlu0 %86
  %90 = vset.pattern.permute.xlu0 0
  %91 = vperm.xlu0 %90, %v27
  %v92 = vpop.permute.xlu0 %91
  %95 = vset.pattern.permute.xlu0 0
  %96 = vperm.xlu0 %95, %v28
  %v97 = vpop.permute.xlu0 %96
  %v103 = vunpack.c.l.b16 %v21
  %v104 = vunpack.c.l.b16 %v22
  %v105 = vunpack.c.l.b16 %v23
  %v106 = vunpack.c.l.b16 %v24
  %v107 = vpack.c.b16 %v104, %v103
  %v108 = vpack.c.b16 %v106, %v105
  %vm109 = vcmask 408576
  %v111 = vsel %vm109, %v107, 0
  %v114 = vsel %vm109, %v108, 0
  %vm116 = vcmask 1040384
  %v118 = vsel %vm116, %v77, 0
  %v121 = vsel %vm116, %v78, 0
  %123 = vmatpush.bf16.msra.mxu0 0
  %124 = vmatpush.bf16.msra.mxu0 0
  %125 = vmatpush.bf16.msra.mxu0 0
  %126 = vmatpush.bf16.msra.mxu0 0
  %127 = vmatpush.bf16.msra.mxu0 %v118
  %128 = vmatpush.bf16.msra.mxu0 %v75
  %129 = vmatpush.bf16.msra.mxu0 %v73
  %130 = vmatpush.bf16.msra.mxu0 %v71
  %131 = vmatmul.bf16.gmra.mxu0 %v111
  %v132 = vpop.f32.mrf.mxu0
  %v133 = vadd.f32 %v82, %v132
  %v134 = vpop.f32.mrf.mxu0
  %v135 = vadd.f32 %v87, %v134
  %136 = vmatmul.bf16.gmra.mxu0 %v114
  %v137 = vpop.f32.mrf.mxu0
  %v138 = vadd.f32 %v92, %v137
  %v139 = vpop.f32.mrf.mxu0
  %v140 = vadd.f32 %v97, %v139
  %141 = vdwg.mxu0
  %142 = vmatpush.bf16.msra.mxu0 0
  %143 = vmatpush.bf16.msra.mxu0 0
  %144 = vmatpush.bf16.msra.mxu0 0
  %145 = vmatpush.bf16.msra.mxu0 0
  %146 = vmatpush.bf16.msra.mxu0 %v121
  %147 = vmatpush.bf16.msra.mxu0 %v76
  %148 = vmatpush.bf16.msra.mxu0 %v74
  %149 = vmatpush.bf16.msra.mxu0 %v72
  %150 = vmatmul.bf16.gmra.mxu0 %v111
  %v151 = vpop.f32.mrf.mxu0
  %v152 = vadd.f32 %v82, %v151
  %v153 = vpop.f32.mrf.mxu0
  %v154 = vadd.f32 %v87, %v153
  %155 = vmatmul.bf16.gmra.mxu0 %v114
  %v156 = vpop.f32.mrf.mxu0
  %v157 = vadd.f32 %v92, %v156
  %v158 = vpop.f32.mrf.mxu0
  %v159 = vadd.f32 %v97, %v158
  %160 = vdwg.mxu0
  %v161 = vmax.f32 %v133, 0.0
  %v162 = vmax.f32 %v152, 0.0
  %v163 = vmax.f32 %v135, 0.0
  %v164 = vmax.f32 %v154, 0.0
  %v165 = vmax.f32 %v138, 0.0
  %v166 = vmax.f32 %v157, 0.0
  %v167 = vmax.f32 %v140, 0.0
  %v168 = vmax.f32 %v159, 0.0
  %v169 = vpack.c.bf16 %v163, %v161
  %v170 = vpack.c.bf16 %v167, %v165
  %v171 = vpack.c.bf16 %v164, %v162
  %v172 = vpack.c.bf16 %v168, %v166
  %v175 = vunpack.c.l.b16 %v34
  %v176 = vunpack.c.l.b16 %v35
  %v177 = vpack.c.b16 %v176, %v175
  %182 = vrot.lane.b32.xlu0 %v169, 127
  %v183 = vpop.permute.xlu0 %182
  %184 = vrot.lane.b32.xlu0 %v171, 127
  %v185 = vpop.permute.xlu0 %184
  %186 = vrot.lane.b32.xlu0 %v170, 127
  %v187 = vpop.permute.xlu0 %186
  %188 = vrot.lane.b32.xlu0 %v172, 127
  %v189 = vpop.permute.xlu0 %188
  %vm190 = vcmask 1039360
  %v191 = vsel %vm190, %v183, %v185
  %v192 = vsel %vm190, %v187, %v189
  %vm195 = vcmask 261120
  %v197 = vsel %vm195, %v177, 0
  %199 = vmatpush.bf16.msra.mxu0 0
  %200 = vmatpush.bf16.msra.mxu0 0
  %201 = vmatpush.bf16.msra.mxu0 0
  %202 = vmatpush.bf16.msra.mxu0 0
  %203 = vmatpush.bf16.msra.mxu0 0
  %204 = vmatpush.bf16.msra.mxu0 0
  %205 = vmatpush.bf16.msra.mxu0 %v192
  %206 = vmatpush.bf16.msra.mxu0 %v191
  %207 = vmatmul.bf16.gmra.mxu0 %v197
  %v208 = vpop.f32.mrf.mxu0
  %v209 = vadd.f32 0.0, %v208
  %v210 = vpop.f32.mrf.mxu0
  %v211 = vadd.f32 0.0, %v210
  %212 = vdwg.mxu0
  %v215 = vunpack.c.l.b16 %v31
  %v216 = vunpack.c.l.b16 %v32
  %v217 = vpack.c.b16 %v216, %v215
  %v219 = vsel %vm195, %v217, 0
  %221 = vmatpush.bf16.msra.mxu0 0
  %222 = vmatpush.bf16.msra.mxu0 0
  %223 = vmatpush.bf16.msra.mxu0 0
  %224 = vmatpush.bf16.msra.mxu0 0
  %225 = vmatpush.bf16.msra.mxu0 0
  %226 = vmatpush.bf16.msra.mxu0 0
  %227 = vmatpush.bf16.msra.mxu0 %v170
  %228 = vmatpush.bf16.msra.mxu0 %v169
  %229 = vmatmul.bf16.gmra.mxu0 %v219
  %v230 = vpop.f32.mrf.mxu0
  %v231 = vadd.f32 %v209, %v230
  %v232 = vpop.f32.mrf.mxu0
  %v233 = vadd.f32 %v211, %v232
  %234 = vdwg.mxu0
  %v237 = vunpack.c.l.b16 %v37
  %v238 = vunpack.c.l.b16 %v38
  %v239 = vpack.c.b16 %v238, %v237
  %240 = vrot.lane.b32.xlu0 %v169, 126
  %v241 = vpop.permute.xlu0 %240
  %242 = vrot.lane.b32.xlu0 %v171, 126
  %v243 = vpop.permute.xlu0 %242
  %244 = vrot.lane.b32.xlu0 %v170, 126
  %v245 = vpop.permute.xlu0 %244
  %246 = vrot.lane.b32.xlu0 %v172, 126
  %v247 = vpop.permute.xlu0 %246
  %vm248 = vcmask 1031168
  %v249 = vsel %vm248, %v241, %v243
  %v250 = vsel %vm248, %v245, %v247
  %v254 = vsel %vm195, %v239, 0
  %256 = vmatpush.bf16.msra.mxu0 0
  %257 = vmatpush.bf16.msra.mxu0 0
  %258 = vmatpush.bf16.msra.mxu0 0
  %259 = vmatpush.bf16.msra.mxu0 0
  %260 = vmatpush.bf16.msra.mxu0 0
  %261 = vmatpush.bf16.msra.mxu0 0
  %262 = vmatpush.bf16.msra.mxu0 %v250
  %263 = vmatpush.bf16.msra.mxu0 %v249
  %264 = vmatmul.bf16.gmra.mxu0 %v254
  %v265 = vpop.f32.mrf.mxu0
  %v266 = vadd.f32 0.0, %v265
  %v267 = vpop.f32.mrf.mxu0
  %v268 = vadd.f32 0.0, %v267
  %269 = vdwg.mxu0
  %v270 = vadd.f32 %v231, %v266
  %v271 = vadd.f32 %v233, %v268
  %v274 = vunpack.c.l.b16 %v40
  %v275 = vunpack.c.l.b16 %v41
  %v276 = vpack.c.b16 %v275, %v274
  %277 = vrot.lane.b32.xlu0 %v169, 116
  %v278 = vpop.permute.xlu0 %277
  %279 = vrot.lane.b32.xlu0 %v171, 116
  %v280 = vpop.permute.xlu0 %279
  %281 = vrot.lane.b32.xlu0 %v170, 116
  %v282 = vpop.permute.xlu0 %281
  %283 = vrot.lane.b32.xlu0 %v172, 116
  %v284 = vpop.permute.xlu0 %283
  %vm285 = vcmask 949248
  %v286 = vsel %vm285, %v278, %v280
  %v287 = vsel %vm285, %v282, %v284
  %v291 = vsel %vm195, %v276, 0
  %293 = vmatpush.bf16.msra.mxu0 0
  %294 = vmatpush.bf16.msra.mxu0 0
  %295 = vmatpush.bf16.msra.mxu0 0
  %296 = vmatpush.bf16.msra.mxu0 0
  %297 = vmatpush.bf16.msra.mxu0 0
  %298 = vmatpush.bf16.msra.mxu0 0
  %299 = vmatpush.bf16.msra.mxu0 %v287
  %300 = vmatpush.bf16.msra.mxu0 %v286
  %301 = vmatmul.bf16.gmra.mxu0 %v291
  %v302 = vpop.f32.mrf.mxu0
  %v303 = vadd.f32 0.0, %v302
  %v304 = vpop.f32.mrf.mxu0
  %v305 = vadd.f32 0.0, %v304
  %306 = vdwg.mxu0
  %v307 = vadd.f32 %v270, %v303
  %v308 = vadd.f32 %v271, %v305
  %v311 = vunpack.c.l.b16 %v43
  %v312 = vunpack.c.l.b16 %v44
  %v313 = vpack.c.b16 %v312, %v311
  %314 = vrot.lane.b32.xlu0 %v169, 115
  %v315 = vpop.permute.xlu0 %314
  %316 = vrot.lane.b32.xlu0 %v171, 115
  %v317 = vpop.permute.xlu0 %316
  %318 = vrot.lane.b32.xlu0 %v170, 115
  %v319 = vpop.permute.xlu0 %318
  %320 = vrot.lane.b32.xlu0 %v172, 115
  %v321 = vpop.permute.xlu0 %320
  %vm322 = vcmask 941056
  %v323 = vsel %vm322, %v315, %v317
  %v324 = vsel %vm322, %v319, %v321
  %v328 = vsel %vm195, %v313, 0
  %330 = vmatpush.bf16.msra.mxu0 0
  %331 = vmatpush.bf16.msra.mxu0 0
  %332 = vmatpush.bf16.msra.mxu0 0
  %333 = vmatpush.bf16.msra.mxu0 0
  %334 = vmatpush.bf16.msra.mxu0 0
  %335 = vmatpush.bf16.msra.mxu0 0
  %336 = vmatpush.bf16.msra.mxu0 %v324
  %337 = vmatpush.bf16.msra.mxu0 %v323
  %338 = vmatmul.bf16.gmra.mxu0 %v328
  %v339 = vpop.f32.mrf.mxu0
  %v340 = vadd.f32 0.0, %v339
  %v341 = vpop.f32.mrf.mxu0
  %v342 = vadd.f32 0.0, %v341
  %343 = vdwg.mxu0
  %v344 = vadd.f32 %v307, %v340
  %v345 = vadd.f32 %v308, %v342
  %v348 = vunpack.c.l.b16 %v46
  %v349 = vunpack.c.l.b16 %v47
  %v350 = vpack.c.b16 %v349, %v348
  %351 = vrot.lane.b32.xlu0 %v169, 114
  %v352 = vpop.permute.xlu0 %351
  %353 = vrot.lane.b32.xlu0 %v171, 114
  %v354 = vpop.permute.xlu0 %353
  %355 = vrot.lane.b32.xlu0 %v170, 114
  %v356 = vpop.permute.xlu0 %355
  %357 = vrot.lane.b32.xlu0 %v172, 114
  %v358 = vpop.permute.xlu0 %357
  %vm359 = vcmask 932864
  %v360 = vsel %vm359, %v352, %v354
  %v361 = vsel %vm359, %v356, %v358
  %v365 = vsel %vm195, %v350, 0
  %367 = vmatpush.bf16.msra.mxu0 0
  %368 = vmatpush.bf16.msra.mxu0 0
  %369 = vmatpush.bf16.msra.mxu0 0
  %370 = vmatpush.bf16.msra.mxu0 0
  %371 = vmatpush.bf16.msra.mxu0 0
  %372 = vmatpush.bf16.msra.mxu0 0
  %373 = vmatpush.bf16.msra.mxu0 %v361
  %374 = vmatpush.bf16.msra.mxu0 %v360
  %375 = vmatmul.bf16.gmra.mxu0 %v365
  %v376 = vpop.f32.mrf.mxu0
  %v377 = vadd.f32 0.0, %v376
  %v378 = vpop.f32.mrf.mxu0
  %v379 = vadd.f32 0.0, %v378
  %380 = vdwg.mxu0
  %v381 = vadd.f32 %v344, %v377
  %v382 = vadd.f32 %v345, %v379
  %v385 = vunpack.c.l.b16 %v49
  %v386 = vunpack.c.l.b16 %v50
  %v387 = vpack.c.b16 %v386, %v385
  %388 = vrot.lane.b32.xlu0 %v169, 104
  %v389 = vpop.permute.xlu0 %388
  %390 = vrot.lane.b32.xlu0 %v171, 104
  %v391 = vpop.permute.xlu0 %390
  %392 = vrot.lane.b32.xlu0 %v170, 104
  %v393 = vpop.permute.xlu0 %392
  %394 = vrot.lane.b32.xlu0 %v172, 104
  %v395 = vpop.permute.xlu0 %394
  %vm396 = vcmask 850944
  %v397 = vsel %vm396, %v389, %v391
  %v398 = vsel %vm396, %v393, %v395
  %v402 = vsel %vm195, %v387, 0
  %404 = vmatpush.bf16.msra.mxu0 0
  %405 = vmatpush.bf16.msra.mxu0 0
  %406 = vmatpush.bf16.msra.mxu0 0
  %407 = vmatpush.bf16.msra.mxu0 0
  %408 = vmatpush.bf16.msra.mxu0 0
  %409 = vmatpush.bf16.msra.mxu0 0
  %410 = vmatpush.bf16.msra.mxu0 %v398
  %411 = vmatpush.bf16.msra.mxu0 %v397
  %412 = vmatmul.bf16.gmra.mxu0 %v402
  %v413 = vpop.f32.mrf.mxu0
  %v414 = vadd.f32 0.0, %v413
  %v415 = vpop.f32.mrf.mxu0
  %v416 = vadd.f32 0.0, %v415
  %417 = vdwg.mxu0
  %v418 = vadd.f32 %v381, %v414
  %v419 = vadd.f32 %v382, %v416
  %v422 = vunpack.c.l.b16 %v52
  %v423 = vunpack.c.l.b16 %v53
  %v424 = vpack.c.b16 %v423, %v422
  %425 = vrot.lane.b32.xlu0 %v169, 103
  %v426 = vpop.permute.xlu0 %425
  %427 = vrot.lane.b32.xlu0 %v171, 103
  %v428 = vpop.permute.xlu0 %427
  %429 = vrot.lane.b32.xlu0 %v170, 103
  %v430 = vpop.permute.xlu0 %429
  %431 = vrot.lane.b32.xlu0 %v172, 103
  %v432 = vpop.permute.xlu0 %431
  %vm433 = vcmask 842752
  %v434 = vsel %vm433, %v426, %v428
  %v435 = vsel %vm433, %v430, %v432
  %v439 = vsel %vm195, %v424, 0
  %441 = vmatpush.bf16.msra.mxu0 0
  %442 = vmatpush.bf16.msra.mxu0 0
  %443 = vmatpush.bf16.msra.mxu0 0
  %444 = vmatpush.bf16.msra.mxu0 0
  %445 = vmatpush.bf16.msra.mxu0 0
  %446 = vmatpush.bf16.msra.mxu0 0
  %447 = vmatpush.bf16.msra.mxu0 %v435
  %448 = vmatpush.bf16.msra.mxu0 %v434
  %449 = vmatmul.bf16.gmra.mxu0 %v439
  %v450 = vpop.f32.mrf.mxu0
  %v451 = vadd.f32 0.0, %v450
  %v452 = vpop.f32.mrf.mxu0
  %v453 = vadd.f32 0.0, %v452
  %454 = vdwg.mxu0
  %v455 = vadd.f32 %v418, %v451
  %v456 = vadd.f32 %v419, %v453
  %v459 = vunpack.c.l.b16 %v55
  %v460 = vunpack.c.l.b16 %v56
  %v461 = vpack.c.b16 %v460, %v459
  %462 = vrot.lane.b32.xlu0 %v169, 102
  %v463 = vpop.permute.xlu0 %462
  %464 = vrot.lane.b32.xlu0 %v171, 102
  %v465 = vpop.permute.xlu0 %464
  %466 = vrot.lane.b32.xlu0 %v170, 102
  %v467 = vpop.permute.xlu0 %466
  %468 = vrot.lane.b32.xlu0 %v172, 102
  %v469 = vpop.permute.xlu0 %468
  %vm470 = vcmask 834560
  %v471 = vsel %vm470, %v463, %v465
  %v472 = vsel %vm470, %v467, %v469
  %v476 = vsel %vm195, %v461, 0
  %478 = vmatpush.bf16.msra.mxu0 0
  %479 = vmatpush.bf16.msra.mxu0 0
  %480 = vmatpush.bf16.msra.mxu0 0
  %481 = vmatpush.bf16.msra.mxu0 0
  %482 = vmatpush.bf16.msra.mxu0 0
  %483 = vmatpush.bf16.msra.mxu0 0
  %484 = vmatpush.bf16.msra.mxu0 %v472
  %485 = vmatpush.bf16.msra.mxu0 %v471
  %486 = vmatmul.bf16.gmra.mxu0 %v476
  %v487 = vpop.f32.mrf.mxu0
  %v488 = vadd.f32 0.0, %v487
  %v489 = vpop.f32.mrf.mxu0
  %v490 = vadd.f32 0.0, %v489
  %491 = vdwg.mxu0
  %v492 = vadd.f32 %v455, %v488
  %v493 = vadd.f32 %v456, %v490
  %495 = vset.pattern.permute.xlu0 0
  %496 = vperm.xlu0 %495, %v29
  %v497 = vpop.permute.xlu0 %496
  %500 = vset.pattern.permute.xlu0 0
  %501 = vperm.xlu0 %500, %v30
  %v502 = vpop.permute.xlu0 %501
  %v504 = vadd.f32 %v492, %v497
  %v505 = vadd.f32 %v493, %v502
  %v506 = vmax.f32 %v504, 0.0
  %v507 = vmax.f32 %v505, 0.0
  %508 = vst [vmem:[%s5] sm:$0xff] %v506
  %509 = vst [vmem:[%s5 + $0x8] sm:$0xff] %v507
  %s510 = scalar_lea.vmem %s0, 112
  %v511 = vld [vmem:[%s510] sm:$0xff]
  %v512 = vld [vmem:[%s510 + $0x8] sm:$0xff]
  %v513 = vld [vmem:[%s510 + $0x10] sm:$0xff]
  %v514 = vld [vmem:[%s510 + $0x18] sm:$0xff]
  %v515 = vld [vmem:[%s510 + $0x20] sm:$0xff]
  %v516 = vld [vmem:[%s510 + $0x28] sm:$0xff]
  %v517 = vld [vmem:[%s510 + $0x30] sm:$0xff]
  %v518 = vld [vmem:[%s510 + $0x38] sm:$0xff]
  %v519 = vld [vmem:[%s510 + $0x40] sm:$0xff]
  %v520 = vld [vmem:[%s510 + $0x48] sm:$0xff]
  %v521 = vld [vmem:[%s510 + $0x50] sm:$0xff]
  %v522 = vld [vmem:[%s510 + $0x58] sm:$0xff]
  %v523 = vld [vmem:[%s510 + $0x60] sm:$0x3]
  %v524 = vld [vmem:[%s510 + $0x68] sm:$0x3]
  %v525 = vpack.c.bf16 %v513, %v511
  %v526 = vpack.c.bf16 %v514, %v512
  %v527 = vpack.c.bf16 %v517, %v515
  %v528 = vpack.c.bf16 %v518, %v516
  %v529 = vpack.c.bf16 %v521, %v519
  %v530 = vpack.c.bf16 %v522, %v520
  %v531 = vpack.c.bf16 %v523, %v523
  %v532 = vpack.c.bf16 %v524, %v524
  %v534 = vsel %vm116, %v531, 0
  %v537 = vsel %vm116, %v532, 0
  %539 = vmatpush.bf16.msra.mxu0 0
  %540 = vmatpush.bf16.msra.mxu0 0
  %541 = vmatpush.bf16.msra.mxu0 0
  %542 = vmatpush.bf16.msra.mxu0 0
  %543 = vmatpush.bf16.msra.mxu0 %v534
  %544 = vmatpush.bf16.msra.mxu0 %v529
  %545 = vmatpush.bf16.msra.mxu0 %v527
  %546 = vmatpush.bf16.msra.mxu0 %v525
  %547 = vmatmul.bf16.gmra.mxu0 %v111
  %v548 = vpop.f32.mrf.mxu0
  %v549 = vadd.f32 %v82, %v548
  %v550 = vpop.f32.mrf.mxu0
  %v551 = vadd.f32 %v87, %v550
  %552 = vmatmul.bf16.gmra.mxu0 %v114
  %v553 = vpop.f32.mrf.mxu0
  %v554 = vadd.f32 %v92, %v553
  %v555 = vpop.f32.mrf.mxu0
  %v556 = vadd.f32 %v97, %v555
  %557 = vdwg.mxu0
  %558 = vmatpush.bf16.msra.mxu0 0
  %559 = vmatpush.bf16.msra.mxu0 0
  %560 = vmatpush.bf16.msra.mxu0 0
  %561 = vmatpush.bf16.msra.mxu0 0
  %562 = vmatpush.bf16.msra.mxu0 %v537
  %563 = vmatpush.bf16.msra.mxu0 %v530
  %564 = vmatpush.bf16.msra.mxu0 %v528
  %565 = vmatpush.bf16.msra.mxu0 %v526
  %566 = vmatmul.bf16.gmra.mxu0 %v111
  %v567 = vpop.f32.mrf.mxu0
  %v568 = vadd.f32 %v82, %v567
  %v569 = vpop.f32.mrf.mxu0
  %v570 = vadd.f32 %v87, %v569
  %571 = vmatmul.bf16.gmra.mxu0 %v114
  %v572 = vpop.f32.mrf.mxu0
  %v573 = vadd.f32 %v92, %v572
  %v574 = vpop.f32.mrf.mxu0
  %v575 = vadd.f32 %v97, %v574
  %576 = vdwg.mxu0
  %v577 = vmax.f32 %v549, 0.0
  %v578 = vmax.f32 %v568, 0.0
  %v579 = vmax.f32 %v551, 0.0
  %v580 = vmax.f32 %v570, 0.0
  %v581 = vmax.f32 %v554, 0.0
  %v582 = vmax.f32 %v573, 0.0
  %v583 = vmax.f32 %v556, 0.0
  %v584 = vmax.f32 %v575, 0.0
  %v585 = vpack.c.bf16 %v579, %v577
  %v586 = vpack.c.bf16 %v583, %v581
  %v587 = vpack.c.bf16 %v580, %v578
  %v588 = vpack.c.bf16 %v584, %v582
  %593 = vrot.lane.b32.xlu0 %v585, 127
  %v594 = vpop.permute.xlu0 %593
  %595 = vrot.lane.b32.xlu0 %v587, 127
  %v596 = vpop.permute.xlu0 %595
  %597 = vrot.lane.b32.xlu0 %v586, 127
  %v598 = vpop.permute.xlu0 %597
  %599 = vrot.lane.b32.xlu0 %v588, 127
  %v600 = vpop.permute.xlu0 %599
  %v601 = vsel %vm190, %v594, %v596
  %v602 = vsel %vm190, %v598, %v600
  %605 = vmatpush.bf16.msra.mxu0 0
  %606 = vmatpush.bf16.msra.mxu0 0
  %607 = vmatpush.bf16.msra.mxu0 0
  %608 = vmatpush.bf16.msra.mxu0 0
  %609 = vmatpush.bf16.msra.mxu0 0
  %610 = vmatpush.bf16.msra.mxu0 0
  %611 = vmatpush.bf16.msra.mxu0 %v602
  %612 = vmatpush.bf16.msra.mxu0 %v601
  %613 = vmatmul.bf16.gmra.mxu0 %v197
  %v614 = vpop.f32.mrf.mxu0
  %v615 = vadd.f32 0.0, %v614
  %v616 = vpop.f32.mrf.mxu0
  %v617 = vadd.f32 0.0, %v616
  %618 = vdwg.mxu0
  %619 = vmatpush.bf16.msra.mxu0 0
  %620 = vmatpush.bf16.msra.mxu0 0
  %621 = vmatpush.bf16.msra.mxu0 0
  %622 = vmatpush.bf16.msra.mxu0 0
  %623 = vmatpush.bf16.msra.mxu0 0
  %624 = vmatpush.bf16.msra.mxu0 0
  %625 = vmatpush.bf16.msra.mxu0 %v586
  %626 = vmatpush.bf16.msra.mxu0 %v585
  %627 = vmatmul.bf16.gmra.mxu0 %v219
  %v628 = vpop.f32.mrf.mxu0
  %v629 = vadd.f32 %v615, %v628
  %v630 = vpop.f32.mrf.mxu0
  %v631 = vadd.f32 %v617, %v630
  %632 = vdwg.mxu0
  %633 = vrot.lane.b32.xlu0 %v585, 126
  %v634 = vpop.permute.xlu0 %633
  %635 = vrot.lane.b32.xlu0 %v587, 126
  %v636 = vpop.permute.xlu0 %635
  %637 = vrot.lane.b32.xlu0 %v586, 126
  %v638 = vpop.permute.xlu0 %637
  %639 = vrot.lane.b32.xlu0 %v588, 126
  %v640 = vpop.permute.xlu0 %639
  %v641 = vsel %vm248, %v634, %v636
  %v642 = vsel %vm248, %v638, %v640
  %645 = vmatpush.bf16.msra.mxu0 0
  %646 = vmatpush.bf16.msra.mxu0 0
  %647 = vmatpush.bf16.msra.mxu0 0
  %648 = vmatpush.bf16.msra.mxu0 0
  %649 = vmatpush.bf16.msra.mxu0 0
  %650 = vmatpush.bf16.msra.mxu0 0
  %651 = vmatpush.bf16.msra.mxu0 %v642
  %652 = vmatpush.bf16.msra.mxu0 %v641
  %653 = vmatmul.bf16.gmra.mxu0 %v254
  %v654 = vpop.f32.mrf.mxu0
  %v655 = vadd.f32 0.0, %v654
  %v656 = vpop.f32.mrf.mxu0
  %v657 = vadd.f32 0.0, %v656
  %658 = vdwg.mxu0
  %v659 = vadd.f32 %v629, %v655
  %v660 = vadd.f32 %v631, %v657
  %661 = vrot.lane.b32.xlu0 %v585, 116
  %v662 = vpop.permute.xlu0 %661
  %663 = vrot.lane.b32.xlu0 %v587, 116
  %v664 = vpop.permute.xlu0 %663
  %665 = vrot.lane.b32.xlu0 %v586, 116
  %v666 = vpop.permute.xlu0 %665
  %667 = vrot.lane.b32.xlu0 %v588, 116
  %v668 = vpop.permute.xlu0 %667
  %v669 = vsel %vm285, %v662, %v664
  %v670 = vsel %vm285, %v666, %v668
  %673 = vmatpush.bf16.msra.mxu0 0
  %674 = vmatpush.bf16.msra.mxu0 0
  %675 = vmatpush.bf16.msra.mxu0 0
  %676 = vmatpush.bf16.msra.mxu0 0
  %677 = vmatpush.bf16.msra.mxu0 0
  %678 = vmatpush.bf16.msra.mxu0 0
  %679 = vmatpush.bf16.msra.mxu0 %v670
  %680 = vmatpush.bf16.msra.mxu0 %v669
  %681 = vmatmul.bf16.gmra.mxu0 %v291
  %v682 = vpop.f32.mrf.mxu0
  %v683 = vadd.f32 0.0, %v682
  %v684 = vpop.f32.mrf.mxu0
  %v685 = vadd.f32 0.0, %v684
  %686 = vdwg.mxu0
  %v687 = vadd.f32 %v659, %v683
  %v688 = vadd.f32 %v660, %v685
  %689 = vrot.lane.b32.xlu0 %v585, 115
  %v690 = vpop.permute.xlu0 %689
  %691 = vrot.lane.b32.xlu0 %v587, 115
  %v692 = vpop.permute.xlu0 %691
  %693 = vrot.lane.b32.xlu0 %v586, 115
  %v694 = vpop.permute.xlu0 %693
  %695 = vrot.lane.b32.xlu0 %v588, 115
  %v696 = vpop.permute.xlu0 %695
  %v697 = vsel %vm322, %v690, %v692
  %v698 = vsel %vm322, %v694, %v696
  %701 = vmatpush.bf16.msra.mxu0 0
  %702 = vmatpush.bf16.msra.mxu0 0
  %703 = vmatpush.bf16.msra.mxu0 0
  %704 = vmatpush.bf16.msra.mxu0 0
  %705 = vmatpush.bf16.msra.mxu0 0
  %706 = vmatpush.bf16.msra.mxu0 0
  %707 = vmatpush.bf16.msra.mxu0 %v698
  %708 = vmatpush.bf16.msra.mxu0 %v697
  %709 = vmatmul.bf16.gmra.mxu0 %v328
  %v710 = vpop.f32.mrf.mxu0
  %v711 = vadd.f32 0.0, %v710
  %v712 = vpop.f32.mrf.mxu0
  %v713 = vadd.f32 0.0, %v712
  %714 = vdwg.mxu0
  %v715 = vadd.f32 %v687, %v711
  %v716 = vadd.f32 %v688, %v713
  %717 = vrot.lane.b32.xlu0 %v585, 114
  %v718 = vpop.permute.xlu0 %717
  %719 = vrot.lane.b32.xlu0 %v587, 114
  %v720 = vpop.permute.xlu0 %719
  %721 = vrot.lane.b32.xlu0 %v586, 114
  %v722 = vpop.permute.xlu0 %721
  %723 = vrot.lane.b32.xlu0 %v588, 114
  %v724 = vpop.permute.xlu0 %723
  %v725 = vsel %vm359, %v718, %v720
  %v726 = vsel %vm359, %v722, %v724
  %729 = vmatpush.bf16.msra.mxu0 0
  %730 = vmatpush.bf16.msra.mxu0 0
  %731 = vmatpush.bf16.msra.mxu0 0
  %732 = vmatpush.bf16.msra.mxu0 0
  %733 = vmatpush.bf16.msra.mxu0 0
  %734 = vmatpush.bf16.msra.mxu0 0
  %735 = vmatpush.bf16.msra.mxu0 %v726
  %736 = vmatpush.bf16.msra.mxu0 %v725
  %737 = vmatmul.bf16.gmra.mxu0 %v365
  %v738 = vpop.f32.mrf.mxu0
  %v739 = vadd.f32 0.0, %v738
  %v740 = vpop.f32.mrf.mxu0
  %v741 = vadd.f32 0.0, %v740
  %742 = vdwg.mxu0
  %v743 = vadd.f32 %v715, %v739
  %v744 = vadd.f32 %v716, %v741
  %745 = vrot.lane.b32.xlu0 %v585, 104
  %v746 = vpop.permute.xlu0 %745
  %747 = vrot.lane.b32.xlu0 %v587, 104
  %v748 = vpop.permute.xlu0 %747
  %749 = vrot.lane.b32.xlu0 %v586, 104
  %v750 = vpop.permute.xlu0 %749
  %751 = vrot.lane.b32.xlu0 %v588, 104
  %v752 = vpop.permute.xlu0 %751
  %v753 = vsel %vm396, %v746, %v748
  %v754 = vsel %vm396, %v750, %v752
  %757 = vmatpush.bf16.msra.mxu0 0
  %758 = vmatpush.bf16.msra.mxu0 0
  %759 = vmatpush.bf16.msra.mxu0 0
  %760 = vmatpush.bf16.msra.mxu0 0
  %761 = vmatpush.bf16.msra.mxu0 0
  %762 = vmatpush.bf16.msra.mxu0 0
  %763 = vmatpush.bf16.msra.mxu0 %v754
  %764 = vmatpush.bf16.msra.mxu0 %v753
  %765 = vmatmul.bf16.gmra.mxu0 %v402
  %v766 = vpop.f32.mrf.mxu0
  %v767 = vadd.f32 0.0, %v766
  %v768 = vpop.f32.mrf.mxu0
  %v769 = vadd.f32 0.0, %v768
  %770 = vdwg.mxu0
  %v771 = vadd.f32 %v743, %v767
  %v772 = vadd.f32 %v744, %v769
  %773 = vrot.lane.b32.xlu0 %v585, 103
  %v774 = vpop.permute.xlu0 %773
  %775 = vrot.lane.b32.xlu0 %v587, 103
  %v776 = vpop.permute.xlu0 %775
  %777 = vrot.lane.b32.xlu0 %v586, 103
  %v778 = vpop.permute.xlu0 %777
  %779 = vrot.lane.b32.xlu0 %v588, 103
  %v780 = vpop.permute.xlu0 %779
  %v781 = vsel %vm433, %v774, %v776
  %v782 = vsel %vm433, %v778, %v780
  %785 = vmatpush.bf16.msra.mxu0 0
  %786 = vmatpush.bf16.msra.mxu0 0
  %787 = vmatpush.bf16.msra.mxu0 0
  %788 = vmatpush.bf16.msra.mxu0 0
  %789 = vmatpush.bf16.msra.mxu0 0
  %790 = vmatpush.bf16.msra.mxu0 0
  %791 = vmatpush.bf16.msra.mxu0 %v782
  %792 = vmatpush.bf16.msra.mxu0 %v781
  %793 = vmatmul.bf16.gmra.mxu0 %v439
  %v794 = vpop.f32.mrf.mxu0
  %v795 = vadd.f32 0.0, %v794
  %v796 = vpop.f32.mrf.mxu0
  %v797 = vadd.f32 0.0, %v796
  %798 = vdwg.mxu0
  %v799 = vadd.f32 %v771, %v795
  %v800 = vadd.f32 %v772, %v797
  %801 = vrot.lane.b32.xlu0 %v585, 102
  %v802 = vpop.permute.xlu0 %801
  %803 = vrot.lane.b32.xlu0 %v587, 102
  %v804 = vpop.permute.xlu0 %803
  %805 = vrot.lane.b32.xlu0 %v586, 102
  %v806 = vpop.permute.xlu0 %805
  %807 = vrot.lane.b32.xlu0 %v588, 102
  %v808 = vpop.permute.xlu0 %807
  %v809 = vsel %vm470, %v802, %v804
  %v810 = vsel %vm470, %v806, %v808
  %813 = vmatpush.bf16.msra.mxu0 0
  %814 = vmatpush.bf16.msra.mxu0 0
  %815 = vmatpush.bf16.msra.mxu0 0
  %816 = vmatpush.bf16.msra.mxu0 0
  %817 = vmatpush.bf16.msra.mxu0 0
  %818 = vmatpush.bf16.msra.mxu0 0
  %819 = vmatpush.bf16.msra.mxu0 %v810
  %820 = vmatpush.bf16.msra.mxu0 %v809
  %821 = vmatmul.bf16.gmra.mxu0 %v476
  %v822 = vpop.f32.mrf.mxu0
  %v823 = vadd.f32 0.0, %v822
  %v824 = vpop.f32.mrf.mxu0
  %v825 = vadd.f32 0.0, %v824
  %826 = vdwg.mxu0
  %v827 = vadd.f32 %v799, %v823
  %v828 = vadd.f32 %v800, %v825
  %v829 = vadd.f32 %v827, %v497
  %v830 = vadd.f32 %v828, %v502
  %v831 = vmax.f32 %v829, 0.0
  %v832 = vmax.f32 %v830, 0.0
  %s833 = scalar_lea.vmem %s5, 16
  %834 = vst [vmem:[%s833] sm:$0xff] %v831
  %835 = vst [vmem:[%s833 + $0x8] sm:$0xff] %v832
  %s836 = scalar_lea.vmem %s0, 224
  %v837 = vld [vmem:[%s836] sm:$0xff]
  %v838 = vld [vmem:[%s836 + $0x8] sm:$0xff]
  %v839 = vld [vmem:[%s836 + $0x10] sm:$0xff]
  %v840 = vld [vmem:[%s836 + $0x18] sm:$0xff]
  %v841 = vld [vmem:[%s836 + $0x20] sm:$0xff]
  %v842 = vld [vmem:[%s836 + $0x28] sm:$0xff]
  %v843 = vld [vmem:[%s836 + $0x30] sm:$0xff]
  %v844 = vld [vmem:[%s836 + $0x38] sm:$0xff]
  %v845 = vld [vmem:[%s836 + $0x40] sm:$0xff]
  %v846 = vld [vmem:[%s836 + $0x48] sm:$0xff]
  %v847 = vld [vmem:[%s836 + $0x50] sm:$0xff]
  %v848 = vld [vmem:[%s836 + $0x58] sm:$0xff]
  %v849 = vld [vmem:[%s836 + $0x60] sm:$0x3]
  %v850 = vld [vmem:[%s836 + $0x68] sm:$0x3]
  %v851 = vpack.c.bf16 %v839, %v837
  %v852 = vpack.c.bf16 %v840, %v838
  %v853 = vpack.c.bf16 %v843, %v841
  %v854 = vpack.c.bf16 %v844, %v842
  %v855 = vpack.c.bf16 %v847, %v845
  %v856 = vpack.c.bf16 %v848, %v846
  %v857 = vpack.c.bf16 %v849, %v849
  %v858 = vpack.c.bf16 %v850, %v850
  %v860 = vsel %vm116, %v857, 0
  %v863 = vsel %vm116, %v858, 0
  %865 = vmatpush.bf16.msra.mxu0 0
  %866 = vmatpush.bf16.msra.mxu0 0
  %867 = vmatpush.bf16.msra.mxu0 0
  %868 = vmatpush.bf16.msra.mxu0 0
  %869 = vmatpush.bf16.msra.mxu0 %v860
  %870 = vmatpush.bf16.msra.mxu0 %v855
  %871 = vmatpush.bf16.msra.mxu0 %v853
  %872 = vmatpush.bf16.msra.mxu0 %v851
  %873 = vmatmul.bf16.gmra.mxu0 %v111
  %v874 = vpop.f32.mrf.mxu0
  %v875 = vadd.f32 %v82, %v874
  %v876 = vpop.f32.mrf.mxu0
  %v877 = vadd.f32 %v87, %v876
  %878 = vmatmul.bf16.gmra.mxu0 %v114
  %v879 = vpop.f32.mrf.mxu0
  %v880 = vadd.f32 %v92, %v879
  %v881 = vpop.f32.mrf.mxu0
  %v882 = vadd.f32 %v97, %v881
  %883 = vdwg.mxu0
  %884 = vmatpush.bf16.msra.mxu0 0
  %885 = vmatpush.bf16.msra.mxu0 0
  %886 = vmatpush.bf16.msra.mxu0 0
  %887 = vmatpush.bf16.msra.mxu0 0
  %888 = vmatpush.bf16.msra.mxu0 %v863
  %889 = vmatpush.bf16.msra.mxu0 %v856
  %890 = vmatpush.bf16.msra.mxu0 %v854
  %891 = vmatpush.bf16.msra.mxu0 %v852
  %892 = vmatmul.bf16.gmra.mxu0 %v111
  %v893 = vpop.f32.mrf.mxu0
  %v894 = vadd.f32 %v82, %v893
  %v895 = vpop.f32.mrf.mxu0
  %v896 = vadd.f32 %v87, %v895
  %897 = vmatmul.bf16.gmra.mxu0 %v114
  %v898 = vpop.f32.mrf.mxu0
  %v899 = vadd.f32 %v92, %v898
  %v900 = vpop.f32.mrf.mxu0
  %v901 = vadd.f32 %v97, %v900
  %902 = vdwg.mxu0
  %v903 = vmax.f32 %v875, 0.0
  %v904 = vmax.f32 %v894, 0.0
  %v905 = vmax.f32 %v877, 0.0
  %v906 = vmax.f32 %v896, 0.0
  %v907 = vmax.f32 %v880, 0.0
  %v908 = vmax.f32 %v899, 0.0
  %v909 = vmax.f32 %v882, 0.0
  %v910 = vmax.f32 %v901, 0.0
  %v911 = vpack.c.bf16 %v905, %v903
  %v912 = vpack.c.bf16 %v909, %v907
  %v913 = vpack.c.bf16 %v906, %v904
  %v914 = vpack.c.bf16 %v910, %v908
  %919 = vrot.lane.b32.xlu0 %v911, 127
  %v920 = vpop.permute.xlu0 %919
  %921 = vrot.lane.b32.xlu0 %v913, 127
  %v922 = vpop.permute.xlu0 %921
  %923 = vrot.lane.b32.xlu0 %v912, 127
  %v924 = vpop.permute.xlu0 %923
  %925 = vrot.lane.b32.xlu0 %v914, 127
  %v926 = vpop.permute.xlu0 %925
  %v927 = vsel %vm190, %v920, %v922
  %v928 = vsel %vm190, %v924, %v926
  %931 = vmatpush.bf16.msra.mxu0 0
  %932 = vmatpush.bf16.msra.mxu0 0
  %933 = vmatpush.bf16.msra.mxu0 0
  %934 = vmatpush.bf16.msra.mxu0 0
  %935 = vmatpush.bf16.msra.mxu0 0
  %936 = vmatpush.bf16.msra.mxu0 0
  %937 = vmatpush.bf16.msra.mxu0 %v928
  %938 = vmatpush.bf16.msra.mxu0 %v927
  %939 = vmatmul.bf16.gmra.mxu0 %v197
  %v940 = vpop.f32.mrf.mxu0
  %v941 = vadd.f32 0.0, %v940
  %v942 = vpop.f32.mrf.mxu0
  %v943 = vadd.f32 0.0, %v942
  %944 = vdwg.mxu0
  %945 = vmatpush.bf16.msra.mxu0 0
  %946 = vmatpush.bf16.msra.mxu0 0
  %947 = vmatpush.bf16.msra.mxu0 0
  %948 = vmatpush.bf16.msra.mxu0 0
  %949 = vmatpush.bf16.msra.mxu0 0
  %950 = vmatpush.bf16.msra.mxu0 0
  %951 = vmatpush.bf16.msra.mxu0 %v912
  %952 = vmatpush.bf16.msra.mxu0 %v911
  %953 = vmatmul.bf16.gmra.mxu0 %v219
  %v954 = vpop.f32.mrf.mxu0
  %v955 = vadd.f32 %v941, %v954
  %v956 = vpop.f32.mrf.mxu0
  %v957 = vadd.f32 %v943, %v956
  %958 = vdwg.mxu0
  %959 = vrot.lane.b32.xlu0 %v911, 126
  %v960 = vpop.permute.xlu0 %959
  %961 = vrot.lane.b32.xlu0 %v913, 126
  %v962 = vpop.permute.xlu0 %961
  %963 = vrot.lane.b32.xlu0 %v912, 126
  %v964 = vpop.permute.xlu0 %963
  %965 = vrot.lane.b32.xlu0 %v914, 126
  %v966 = vpop.permute.xlu0 %965
  %v967 = vsel %vm248, %v960, %v962
  %v968 = vsel %vm248, %v964, %v966
  %971 = vmatpush.bf16.msra.mxu0 0
  %972 = vmatpush.bf16.msra.mxu0 0
  %973 = vmatpush.bf16.msra.mxu0 0
  %974 = vmatpush.bf16.msra.mxu0 0
  %975 = vmatpush.bf16.msra.mxu0 0
  %976 = vmatpush.bf16.msra.mxu0 0
  %977 = vmatpush.bf16.msra.mxu0 %v968
  %978 = vmatpush.bf16.msra.mxu0 %v967
  %979 = vmatmul.bf16.gmra.mxu0 %v254
  %v980 = vpop.f32.mrf.mxu0
  %v981 = vadd.f32 0.0, %v980
  %v982 = vpop.f32.mrf.mxu0
  %v983 = vadd.f32 0.0, %v982
  %984 = vdwg.mxu0
  %v985 = vadd.f32 %v955, %v981
  %v986 = vadd.f32 %v957, %v983
  %987 = vrot.lane.b32.xlu0 %v911, 116
  %v988 = vpop.permute.xlu0 %987
  %989 = vrot.lane.b32.xlu0 %v913, 116
  %v990 = vpop.permute.xlu0 %989
  %991 = vrot.lane.b32.xlu0 %v912, 116
  %v992 = vpop.permute.xlu0 %991
  %993 = vrot.lane.b32.xlu0 %v914, 116
  %v994 = vpop.permute.xlu0 %993
  %v995 = vsel %vm285, %v988, %v990
  %v996 = vsel %vm285, %v992, %v994
  %999 = vmatpush.bf16.msra.mxu0 0
  %1000 = vmatpush.bf16.msra.mxu0 0
  %1001 = vmatpush.bf16.msra.mxu0 0
  %1002 = vmatpush.bf16.msra.mxu0 0
  %1003 = vmatpush.bf16.msra.mxu0 0
  %1004 = vmatpush.bf16.msra.mxu0 0
  %1005 = vmatpush.bf16.msra.mxu0 %v996
  %1006 = vmatpush.bf16.msra.mxu0 %v995
  %1007 = vmatmul.bf16.gmra.mxu0 %v291
  %v1008 = vpop.f32.mrf.mxu0
  %v1009 = vadd.f32 0.0, %v1008
  %v1010 = vpop.f32.mrf.mxu0
  %v1011 = vadd.f32 0.0, %v1010
  %1012 = vdwg.mxu0
  %v1013 = vadd.f32 %v985, %v1009
  %v1014 = vadd.f32 %v986, %v1011
  %1015 = vrot.lane.b32.xlu0 %v911, 115
  %v1016 = vpop.permute.xlu0 %1015
  %1017 = vrot.lane.b32.xlu0 %v913, 115
  %v1018 = vpop.permute.xlu0 %1017
  %1019 = vrot.lane.b32.xlu0 %v912, 115
  %v1020 = vpop.permute.xlu0 %1019
  %1021 = vrot.lane.b32.xlu0 %v914, 115
  %v1022 = vpop.permute.xlu0 %1021
  %v1023 = vsel %vm322, %v1016, %v1018
  %v1024 = vsel %vm322, %v1020, %v1022
  %1027 = vmatpush.bf16.msra.mxu0 0
  %1028 = vmatpush.bf16.msra.mxu0 0
  %1029 = vmatpush.bf16.msra.mxu0 0
  %1030 = vmatpush.bf16.msra.mxu0 0
  %1031 = vmatpush.bf16.msra.mxu0 0
  %1032 = vmatpush.bf16.msra.mxu0 0
  %1033 = vmatpush.bf16.msra.mxu0 %v1024
  %1034 = vmatpush.bf16.msra.mxu0 %v1023
  %1035 = vmatmul.bf16.gmra.mxu0 %v328
  %v1036 = vpop.f32.mrf.mxu0
  %v1037 = vadd.f32 0.0, %v1036
  %v1038 = vpop.f32.mrf.mxu0
  %v1039 = vadd.f32 0.0, %v1038
  %1040 = vdwg.mxu0
  %v1041 = vadd.f32 %v1013, %v1037
  %v1042 = vadd.f32 %v1014, %v1039
  %1043 = vrot.lane.b32.xlu0 %v911, 114
  %v1044 = vpop.permute.xlu0 %1043
  %1045 = vrot.lane.b32.xlu0 %v913, 114
  %v1046 = vpop.permute.xlu0 %1045
  %1047 = vrot.lane.b32.xlu0 %v912, 114
  %v1048 = vpop.permute.xlu0 %1047
  %1049 = vrot.lane.b32.xlu0 %v914, 114
  %v1050 = vpop.permute.xlu0 %1049
  %v1051 = vsel %vm359, %v1044, %v1046
  %v1052 = vsel %vm359, %v1048, %v1050
  %1055 = vmatpush.bf16.msra.mxu0 0
  %1056 = vmatpush.bf16.msra.mxu0 0
  %1057 = vmatpush.bf16.msra.mxu0 0
  %1058 = vmatpush.bf16.msra.mxu0 0
  %1059 = vmatpush.bf16.msra.mxu0 0
  %1060 = vmatpush.bf16.msra.mxu0 0
  %1061 = vmatpush.bf16.msra.mxu0 %v1052
  %1062 = vmatpush.bf16.msra.mxu0 %v1051
  %1063 = vmatmul.bf16.gmra.mxu0 %v365
  %v1064 = vpop.f32.mrf.mxu0
  %v1065 = vadd.f32 0.0, %v1064
  %v1066 = vpop.f32.mrf.mxu0
  %v1067 = vadd.f32 0.0, %v1066
  %1068 = vdwg.mxu0
  %v1069 = vadd.f32 %v1041, %v1065
  %v1070 = vadd.f32 %v1042, %v1067
  %1071 = vrot.lane.b32.xlu0 %v911, 104
  %v1072 = vpop.permute.xlu0 %1071
  %1073 = vrot.lane.b32.xlu0 %v913, 104
  %v1074 = vpop.permute.xlu0 %1073
  %1075 = vrot.lane.b32.xlu0 %v912, 104
  %v1076 = vpop.permute.xlu0 %1075
  %1077 = vrot.lane.b32.xlu0 %v914, 104
  %v1078 = vpop.permute.xlu0 %1077
  %v1079 = vsel %vm396, %v1072, %v1074
  %v1080 = vsel %vm396, %v1076, %v1078
  %1083 = vmatpush.bf16.msra.mxu0 0
  %1084 = vmatpush.bf16.msra.mxu0 0
  %1085 = vmatpush.bf16.msra.mxu0 0
  %1086 = vmatpush.bf16.msra.mxu0 0
  %1087 = vmatpush.bf16.msra.mxu0 0
  %1088 = vmatpush.bf16.msra.mxu0 0
  %1089 = vmatpush.bf16.msra.mxu0 %v1080
  %1090 = vmatpush.bf16.msra.mxu0 %v1079
  %1091 = vmatmul.bf16.gmra.mxu0 %v402
  %v1092 = vpop.f32.mrf.mxu0
  %v1093 = vadd.f32 0.0, %v1092
  %v1094 = vpop.f32.mrf.mxu0
  %v1095 = vadd.f32 0.0, %v1094
  %1096 = vdwg.mxu0
  %v1097 = vadd.f32 %v1069, %v1093
  %v1098 = vadd.f32 %v1070, %v1095
  %1099 = vrot.lane.b32.xlu0 %v911, 103
  %v1100 = vpop.permute.xlu0 %1099
  %1101 = vrot.lane.b32.xlu0 %v913, 103
  %v1102 = vpop.permute.xlu0 %1101
  %1103 = vrot.lane.b32.xlu0 %v912, 103
  %v1104 = vpop.permute.xlu0 %1103
  %1105 = vrot.lane.b32.xlu0 %v914, 103
  %v1106 = vpop.permute.xlu0 %1105
  %v1107 = vsel %vm433, %v1100, %v1102
  %v1108 = vsel %vm433, %v1104, %v1106
  %1111 = vmatpush.bf16.msra.mxu0 0
  %1112 = vmatpush.bf16.msra.mxu0 0
  %1113 = vmatpush.bf16.msra.mxu0 0
  %1114 = vmatpush.bf16.msra.mxu0 0
  %1115 = vmatpush.bf16.msra.mxu0 0
  %1116 = vmatpush.bf16.msra.mxu0 0
  %1117 = vmatpush.bf16.msra.mxu0 %v1108
  %1118 = vmatpush.bf16.msra.mxu0 %v1107
  %1119 = vmatmul.bf16.gmra.mxu0 %v439
  %v1120 = vpop.f32.mrf.mxu0
  %v1121 = vadd.f32 0.0, %v1120
  %v1122 = vpop.f32.mrf.mxu0
  %v1123 = vadd.f32 0.0, %v1122
  %1124 = vdwg.mxu0
  %v1125 = vadd.f32 %v1097, %v1121
  %v1126 = vadd.f32 %v1098, %v1123
  %1127 = vrot.lane.b32.xlu0 %v911, 102
  %v1128 = vpop.permute.xlu0 %1127
  %1129 = vrot.lane.b32.xlu0 %v913, 102
  %v1130 = vpop.permute.xlu0 %1129
  %1131 = vrot.lane.b32.xlu0 %v912, 102
  %v1132 = vpop.permute.xlu0 %1131
  %1133 = vrot.lane.b32.xlu0 %v914, 102
  %v1134 = vpop.permute.xlu0 %1133
  %v1135 = vsel %vm470, %v1128, %v1130
  %v1136 = vsel %vm470, %v1132, %v1134
  %1139 = vmatpush.bf16.msra.mxu0 0
  %1140 = vmatpush.bf16.msra.mxu0 0
  %1141 = vmatpush.bf16.msra.mxu0 0
  %1142 = vmatpush.bf16.msra.mxu0 0
  %1143 = vmatpush.bf16.msra.mxu0 0
  %1144 = vmatpush.bf16.msra.mxu0 0
  %1145 = vmatpush.bf16.msra.mxu0 %v1136
  %1146 = vmatpush.bf16.msra.mxu0 %v1135
  %1147 = vmatmul.bf16.gmra.mxu0 %v476
  %v1148 = vpop.f32.mrf.mxu0
  %v1149 = vadd.f32 0.0, %v1148
  %v1150 = vpop.f32.mrf.mxu0
  %v1151 = vadd.f32 0.0, %v1150
  %1152 = vdwg.mxu0
  %v1153 = vadd.f32 %v1125, %v1149
  %v1154 = vadd.f32 %v1126, %v1151
  %v1155 = vadd.f32 %v1153, %v497
  %v1156 = vadd.f32 %v1154, %v502
  %v1157 = vmax.f32 %v1155, 0.0
  %v1158 = vmax.f32 %v1156, 0.0
  %s1159 = scalar_lea.vmem %s5, 32
  %1160 = vst [vmem:[%s1159] sm:$0xff] %v1157
  %1161 = vst [vmem:[%s1159 + $0x8] sm:$0xff] %v1158
  %s1162 = scalar_lea.vmem %s0, 336
  %v1163 = vld [vmem:[%s1162] sm:$0xff]
  %v1164 = vld [vmem:[%s1162 + $0x8] sm:$0xff]
  %v1165 = vld [vmem:[%s1162 + $0x10] sm:$0xff]
  %v1166 = vld [vmem:[%s1162 + $0x18] sm:$0xff]
  %v1167 = vld [vmem:[%s1162 + $0x20] sm:$0xff]
  %v1168 = vld [vmem:[%s1162 + $0x28] sm:$0xff]
  %v1169 = vld [vmem:[%s1162 + $0x30] sm:$0xff]
  %v1170 = vld [vmem:[%s1162 + $0x38] sm:$0xff]
  %v1171 = vld [vmem:[%s1162 + $0x40] sm:$0xff]
  %v1172 = vld [vmem:[%s1162 + $0x48] sm:$0xff]
  %v1173 = vld [vmem:[%s1162 + $0x50] sm:$0xff]
  %v1174 = vld [vmem:[%s1162 + $0x58] sm:$0xff]
  %v1175 = vld [vmem:[%s1162 + $0x60] sm:$0x3]
  %v1176 = vld [vmem:[%s1162 + $0x68] sm:$0x3]
  %v1177 = vpack.c.bf16 %v1165, %v1163
  %v1178 = vpack.c.bf16 %v1166, %v1164
  %v1179 = vpack.c.bf16 %v1169, %v1167
  %v1180 = vpack.c.bf16 %v1170, %v1168
  %v1181 = vpack.c.bf16 %v1173, %v1171
  %v1182 = vpack.c.bf16 %v1174, %v1172
  %v1183 = vpack.c.bf16 %v1175, %v1175
  %v1184 = vpack.c.bf16 %v1176, %v1176
  %v1186 = vsel %vm116, %v1183, 0
  %v1189 = vsel %vm116, %v1184, 0
  %1191 = vmatpush.bf16.msra.mxu0 0
  %1192 = vmatpush.bf16.msra.mxu0 0
  %1193 = vmatpush.bf16.msra.mxu0 0
  %1194 = vmatpush.bf16.msra.mxu0 0
  %1195 = vmatpush.bf16.msra.mxu0 %v1186
  %1196 = vmatpush.bf16.msra.mxu0 %v1181
  %1197 = vmatpush.bf16.msra.mxu0 %v1179
  %1198 = vmatpush.bf16.msra.mxu0 %v1177
  %1199 = vmatmul.bf16.gmra.mxu0 %v111
  %v1200 = vpop.f32.mrf.mxu0
  %v1201 = vadd.f32 %v82, %v1200
  %v1202 = vpop.f32.mrf.mxu0
  %v1203 = vadd.f32 %v87, %v1202
  %1204 = vmatmul.bf16.gmra.mxu0 %v114
  %v1205 = vpop.f32.mrf.mxu0
  %v1206 = vadd.f32 %v92, %v1205
  %v1207 = vpop.f32.mrf.mxu0
  %v1208 = vadd.f32 %v97, %v1207
  %1209 = vdwg.mxu0
  %1210 = vmatpush.bf16.msra.mxu0 0
  %1211 = vmatpush.bf16.msra.mxu0 0
  %1212 = vmatpush.bf16.msra.mxu0 0
  %1213 = vmatpush.bf16.msra.mxu0 0
  %1214 = vmatpush.bf16.msra.mxu0 %v1189
  %1215 = vmatpush.bf16.msra.mxu0 %v1182
  %1216 = vmatpush.bf16.msra.mxu0 %v1180
  %1217 = vmatpush.bf16.msra.mxu0 %v1178
  %1218 = vmatmul.bf16.gmra.mxu0 %v111
  %v1219 = vpop.f32.mrf.mxu0
  %v1220 = vadd.f32 %v82, %v1219
  %v1221 = vpop.f32.mrf.mxu0
  %v1222 = vadd.f32 %v87, %v1221
  %1223 = vmatmul.bf16.gmra.mxu0 %v114
  %v1224 = vpop.f32.mrf.mxu0
  %v1225 = vadd.f32 %v92, %v1224
  %v1226 = vpop.f32.mrf.mxu0
  %v1227 = vadd.f32 %v97, %v1226
  %1228 = vdwg.mxu0
  %v1229 = vmax.f32 %v1201, 0.0
  %v1230 = vmax.f32 %v1220, 0.0
  %v1231 = vmax.f32 %v1203, 0.0
  %v1232 = vmax.f32 %v1222, 0.0
  %v1233 = vmax.f32 %v1206, 0.0
  %v1234 = vmax.f32 %v1225, 0.0
  %v1235 = vmax.f32 %v1208, 0.0
  %v1236 = vmax.f32 %v1227, 0.0
  %v1237 = vpack.c.bf16 %v1231, %v1229
  %v1238 = vpack.c.bf16 %v1235, %v1233
  %v1239 = vpack.c.bf16 %v1232, %v1230
  %v1240 = vpack.c.bf16 %v1236, %v1234
  %1245 = vrot.lane.b32.xlu0 %v1237, 127
  %v1246 = vpop.permute.xlu0 %1245
  %1247 = vrot.lane.b32.xlu0 %v1239, 127
  %v1248 = vpop.permute.xlu0 %1247
  %1249 = vrot.lane.b32.xlu0 %v1238, 127
  %v1250 = vpop.permute.xlu0 %1249
  %1251 = vrot.lane.b32.xlu0 %v1240, 127
  %v1252 = vpop.permute.xlu0 %1251
  %v1253 = vsel %vm190, %v1246, %v1248
  %v1254 = vsel %vm190, %v1250, %v1252
  %1257 = vmatpush.bf16.msra.mxu0 0
  %1258 = vmatpush.bf16.msra.mxu0 0
  %1259 = vmatpush.bf16.msra.mxu0 0
  %1260 = vmatpush.bf16.msra.mxu0 0
  %1261 = vmatpush.bf16.msra.mxu0 0
  %1262 = vmatpush.bf16.msra.mxu0 0
  %1263 = vmatpush.bf16.msra.mxu0 %v1254
  %1264 = vmatpush.bf16.msra.mxu0 %v1253
  %1265 = vmatmul.bf16.gmra.mxu0 %v197
  %v1266 = vpop.f32.mrf.mxu0
  %v1267 = vadd.f32 0.0, %v1266
  %v1268 = vpop.f32.mrf.mxu0
  %v1269 = vadd.f32 0.0, %v1268
  %1270 = vdwg.mxu0
  %1271 = vmatpush.bf16.msra.mxu0 0
  %1272 = vmatpush.bf16.msra.mxu0 0
  %1273 = vmatpush.bf16.msra.mxu0 0
  %1274 = vmatpush.bf16.msra.mxu0 0
  %1275 = vmatpush.bf16.msra.mxu0 0
  %1276 = vmatpush.bf16.msra.mxu0 0
  %1277 = vmatpush.bf16.msra.mxu0 %v1238
  %1278 = vmatpush.bf16.msra.mxu0 %v1237
  %1279 = vmatmul.bf16.gmra.mxu0 %v219
  %v1280 = vpop.f32.mrf.mxu0
  %v1281 = vadd.f32 %v1267, %v1280
  %v1282 = vpop.f32.mrf.mxu0
  %v1283 = vadd.f32 %v1269, %v1282
  %1284 = vdwg.mxu0
  %1285 = vrot.lane.b32.xlu0 %v1237, 126
  %v1286 = vpop.permute.xlu0 %1285
  %1287 = vrot.lane.b32.xlu0 %v1239, 126
  %v1288 = vpop.permute.xlu0 %1287
  %1289 = vrot.lane.b32.xlu0 %v1238, 126
  %v1290 = vpop.permute.xlu0 %1289
  %1291 = vrot.lane.b32.xlu0 %v1240, 126
  %v1292 = vpop.permute.xlu0 %1291
  %v1293 = vsel %vm248, %v1286, %v1288
  %v1294 = vsel %vm248, %v1290, %v1292
  %1297 = vmatpush.bf16.msra.mxu0 0
  %1298 = vmatpush.bf16.msra.mxu0 0
  %1299 = vmatpush.bf16.msra.mxu0 0
  %1300 = vmatpush.bf16.msra.mxu0 0
  %1301 = vmatpush.bf16.msra.mxu0 0
  %1302 = vmatpush.bf16.msra.mxu0 0
  %1303 = vmatpush.bf16.msra.mxu0 %v1294
  %1304 = vmatpush.bf16.msra.mxu0 %v1293
  %1305 = vmatmul.bf16.gmra.mxu0 %v254
  %v1306 = vpop.f32.mrf.mxu0
  %v1307 = vadd.f32 0.0, %v1306
  %v1308 = vpop.f32.mrf.mxu0
  %v1309 = vadd.f32 0.0, %v1308
  %1310 = vdwg.mxu0
  %v1311 = vadd.f32 %v1281, %v1307
  %v1312 = vadd.f32 %v1283, %v1309
  %1313 = vrot.lane.b32.xlu0 %v1237, 116
  %v1314 = vpop.permute.xlu0 %1313
  %1315 = vrot.lane.b32.xlu0 %v1239, 116
  %v1316 = vpop.permute.xlu0 %1315
  %1317 = vrot.lane.b32.xlu0 %v1238, 116
  %v1318 = vpop.permute.xlu0 %1317
  %1319 = vrot.lane.b32.xlu0 %v1240, 116
  %v1320 = vpop.permute.xlu0 %1319
  %v1321 = vsel %vm285, %v1314, %v1316
  %v1322 = vsel %vm285, %v1318, %v1320
  %1325 = vmatpush.bf16.msra.mxu0 0
  %1326 = vmatpush.bf16.msra.mxu0 0
  %1327 = vmatpush.bf16.msra.mxu0 0
  %1328 = vmatpush.bf16.msra.mxu0 0
  %1329 = vmatpush.bf16.msra.mxu0 0
  %1330 = vmatpush.bf16.msra.mxu0 0
  %1331 = vmatpush.bf16.msra.mxu0 %v1322
  %1332 = vmatpush.bf16.msra.mxu0 %v1321
  %1333 = vmatmul.bf16.gmra.mxu0 %v291
  %v1334 = vpop.f32.mrf.mxu0
  %v1335 = vadd.f32 0.0, %v1334
  %v1336 = vpop.f32.mrf.mxu0
  %v1337 = vadd.f32 0.0, %v1336
  %1338 = vdwg.mxu0
  %v1339 = vadd.f32 %v1311, %v1335
  %v1340 = vadd.f32 %v1312, %v1337
  %1341 = vrot.lane.b32.xlu0 %v1237, 115
  %v1342 = vpop.permute.xlu0 %1341
  %1343 = vrot.lane.b32.xlu0 %v1239, 115
  %v1344 = vpop.permute.xlu0 %1343
  %1345 = vrot.lane.b32.xlu0 %v1238, 115
  %v1346 = vpop.permute.xlu0 %1345
  %1347 = vrot.lane.b32.xlu0 %v1240, 115
  %v1348 = vpop.permute.xlu0 %1347
  %v1349 = vsel %vm322, %v1342, %v1344
  %v1350 = vsel %vm322, %v1346, %v1348
  %1353 = vmatpush.bf16.msra.mxu0 0
  %1354 = vmatpush.bf16.msra.mxu0 0
  %1355 = vmatpush.bf16.msra.mxu0 0
  %1356 = vmatpush.bf16.msra.mxu0 0
  %1357 = vmatpush.bf16.msra.mxu0 0
  %1358 = vmatpush.bf16.msra.mxu0 0
  %1359 = vmatpush.bf16.msra.mxu0 %v1350
  %1360 = vmatpush.bf16.msra.mxu0 %v1349
  %1361 = vmatmul.bf16.gmra.mxu0 %v328
  %v1362 = vpop.f32.mrf.mxu0
  %v1363 = vadd.f32 0.0, %v1362
  %v1364 = vpop.f32.mrf.mxu0
  %v1365 = vadd.f32 0.0, %v1364
  %1366 = vdwg.mxu0
  %v1367 = vadd.f32 %v1339, %v1363
  %v1368 = vadd.f32 %v1340, %v1365
  %1369 = vrot.lane.b32.xlu0 %v1237, 114
  %v1370 = vpop.permute.xlu0 %1369
  %1371 = vrot.lane.b32.xlu0 %v1239, 114
  %v1372 = vpop.permute.xlu0 %1371
  %1373 = vrot.lane.b32.xlu0 %v1238, 114
  %v1374 = vpop.permute.xlu0 %1373
  %1375 = vrot.lane.b32.xlu0 %v1240, 114
  %v1376 = vpop.permute.xlu0 %1375
  %v1377 = vsel %vm359, %v1370, %v1372
  %v1378 = vsel %vm359, %v1374, %v1376
  %1381 = vmatpush.bf16.msra.mxu0 0
  %1382 = vmatpush.bf16.msra.mxu0 0
  %1383 = vmatpush.bf16.msra.mxu0 0
  %1384 = vmatpush.bf16.msra.mxu0 0
  %1385 = vmatpush.bf16.msra.mxu0 0
  %1386 = vmatpush.bf16.msra.mxu0 0
  %1387 = vmatpush.bf16.msra.mxu0 %v1378
  %1388 = vmatpush.bf16.msra.mxu0 %v1377
  %1389 = vmatmul.bf16.gmra.mxu0 %v365
  %v1390 = vpop.f32.mrf.mxu0
  %v1391 = vadd.f32 0.0, %v1390
  %v1392 = vpop.f32.mrf.mxu0
  %v1393 = vadd.f32 0.0, %v1392
  %1394 = vdwg.mxu0
  %v1395 = vadd.f32 %v1367, %v1391
  %v1396 = vadd.f32 %v1368, %v1393
  %1397 = vrot.lane.b32.xlu0 %v1237, 104
  %v1398 = vpop.permute.xlu0 %1397
  %1399 = vrot.lane.b32.xlu0 %v1239, 104
  %v1400 = vpop.permute.xlu0 %1399
  %1401 = vrot.lane.b32.xlu0 %v1238, 104
  %v1402 = vpop.permute.xlu0 %1401
  %1403 = vrot.lane.b32.xlu0 %v1240, 104
  %v1404 = vpop.permute.xlu0 %1403
  %v1405 = vsel %vm396, %v1398, %v1400
  %v1406 = vsel %vm396, %v1402, %v1404
  %1409 = vmatpush.bf16.msra.mxu0 0
  %1410 = vmatpush.bf16.msra.mxu0 0
  %1411 = vmatpush.bf16.msra.mxu0 0
  %1412 = vmatpush.bf16.msra.mxu0 0
  %1413 = vmatpush.bf16.msra.mxu0 0
  %1414 = vmatpush.bf16.msra.mxu0 0
  %1415 = vmatpush.bf16.msra.mxu0 %v1406
  %1416 = vmatpush.bf16.msra.mxu0 %v1405
  %1417 = vmatmul.bf16.gmra.mxu0 %v402
  %v1418 = vpop.f32.mrf.mxu0
  %v1419 = vadd.f32 0.0, %v1418
  %v1420 = vpop.f32.mrf.mxu0
  %v1421 = vadd.f32 0.0, %v1420
  %1422 = vdwg.mxu0
  %v1423 = vadd.f32 %v1395, %v1419
  %v1424 = vadd.f32 %v1396, %v1421
  %1425 = vrot.lane.b32.xlu0 %v1237, 103
  %v1426 = vpop.permute.xlu0 %1425
  %1427 = vrot.lane.b32.xlu0 %v1239, 103
  %v1428 = vpop.permute.xlu0 %1427
  %1429 = vrot.lane.b32.xlu0 %v1238, 103
  %v1430 = vpop.permute.xlu0 %1429
  %1431 = vrot.lane.b32.xlu0 %v1240, 103
  %v1432 = vpop.permute.xlu0 %1431
  %v1433 = vsel %vm433, %v1426, %v1428
  %v1434 = vsel %vm433, %v1430, %v1432
  %1437 = vmatpush.bf16.msra.mxu0 0
  %1438 = vmatpush.bf16.msra.mxu0 0
  %1439 = vmatpush.bf16.msra.mxu0 0
  %1440 = vmatpush.bf16.msra.mxu0 0
  %1441 = vmatpush.bf16.msra.mxu0 0
  %1442 = vmatpush.bf16.msra.mxu0 0
  %1443 = vmatpush.bf16.msra.mxu0 %v1434
  %1444 = vmatpush.bf16.msra.mxu0 %v1433
  %1445 = vmatmul.bf16.gmra.mxu0 %v439
  %v1446 = vpop.f32.mrf.mxu0
  %v1447 = vadd.f32 0.0, %v1446
  %v1448 = vpop.f32.mrf.mxu0
  %v1449 = vadd.f32 0.0, %v1448
  %1450 = vdwg.mxu0
  %v1451 = vadd.f32 %v1423, %v1447
  %v1452 = vadd.f32 %v1424, %v1449
  %1453 = vrot.lane.b32.xlu0 %v1237, 102
  %v1454 = vpop.permute.xlu0 %1453
  %1455 = vrot.lane.b32.xlu0 %v1239, 102
  %v1456 = vpop.permute.xlu0 %1455
  %1457 = vrot.lane.b32.xlu0 %v1238, 102
  %v1458 = vpop.permute.xlu0 %1457
  %1459 = vrot.lane.b32.xlu0 %v1240, 102
  %v1460 = vpop.permute.xlu0 %1459
  %v1461 = vsel %vm470, %v1454, %v1456
  %v1462 = vsel %vm470, %v1458, %v1460
  %1465 = vmatpush.bf16.msra.mxu0 0
  %1466 = vmatpush.bf16.msra.mxu0 0
  %1467 = vmatpush.bf16.msra.mxu0 0
  %1468 = vmatpush.bf16.msra.mxu0 0
  %1469 = vmatpush.bf16.msra.mxu0 0
  %1470 = vmatpush.bf16.msra.mxu0 0
  %1471 = vmatpush.bf16.msra.mxu0 %v1462
  %1472 = vmatpush.bf16.msra.mxu0 %v1461
  %1473 = vmatmul.bf16.gmra.mxu0 %v476
  %v1474 = vpop.f32.mrf.mxu0
  %v1475 = vadd.f32 0.0, %v1474
  %v1476 = vpop.f32.mrf.mxu0
  %v1477 = vadd.f32 0.0, %v1476
  %1478 = vdwg.mxu0
  %v1479 = vadd.f32 %v1451, %v1475
  %v1480 = vadd.f32 %v1452, %v1477
  %v1481 = vadd.f32 %v1479, %v497
  %v1482 = vadd.f32 %v1480, %v502
  %v1483 = vmax.f32 %v1481, 0.0
  %v1484 = vmax.f32 %v1482, 0.0
  %s1485 = scalar_lea.vmem %s5, 48
  %1486 = vst [vmem:[%s1485] sm:$0xff] %v1483
  %1487 = vst [vmem:[%s1485 + $0x8] sm:$0xff] %v1484
  %s1488 = scalar_lea.vmem %s0, 448
  %v1489 = vld [vmem:[%s1488] sm:$0xff]
  %v1490 = vld [vmem:[%s1488 + $0x8] sm:$0xff]
  %v1491 = vld [vmem:[%s1488 + $0x10] sm:$0xff]
  %v1492 = vld [vmem:[%s1488 + $0x18] sm:$0xff]
  %v1493 = vld [vmem:[%s1488 + $0x20] sm:$0xff]
  %v1494 = vld [vmem:[%s1488 + $0x28] sm:$0xff]
  %v1495 = vld [vmem:[%s1488 + $0x30] sm:$0xff]
  %v1496 = vld [vmem:[%s1488 + $0x38] sm:$0xff]
  %v1497 = vld [vmem:[%s1488 + $0x40] sm:$0xff]
  %v1498 = vld [vmem:[%s1488 + $0x48] sm:$0xff]
  %v1499 = vld [vmem:[%s1488 + $0x50] sm:$0xff]
  %v1500 = vld [vmem:[%s1488 + $0x58] sm:$0xff]
  %v1501 = vld [vmem:[%s1488 + $0x60] sm:$0x3]
  %v1502 = vld [vmem:[%s1488 + $0x68] sm:$0x3]
  %v1503 = vpack.c.bf16 %v1491, %v1489
  %v1504 = vpack.c.bf16 %v1492, %v1490
  %v1505 = vpack.c.bf16 %v1495, %v1493
  %v1506 = vpack.c.bf16 %v1496, %v1494
  %v1507 = vpack.c.bf16 %v1499, %v1497
  %v1508 = vpack.c.bf16 %v1500, %v1498
  %v1509 = vpack.c.bf16 %v1501, %v1501
  %v1510 = vpack.c.bf16 %v1502, %v1502
  %v1512 = vsel %vm116, %v1509, 0
  %v1515 = vsel %vm116, %v1510, 0
  %1517 = vmatpush.bf16.msra.mxu0 0
  %1518 = vmatpush.bf16.msra.mxu0 0
  %1519 = vmatpush.bf16.msra.mxu0 0
  %1520 = vmatpush.bf16.msra.mxu0 0
  %1521 = vmatpush.bf16.msra.mxu0 %v1512
  %1522 = vmatpush.bf16.msra.mxu0 %v1507
  %1523 = vmatpush.bf16.msra.mxu0 %v1505
  %1524 = vmatpush.bf16.msra.mxu0 %v1503
  %1525 = vmatmul.bf16.gmra.mxu0 %v111
  %v1526 = vpop.f32.mrf.mxu0
  %v1527 = vadd.f32 %v82, %v1526
  %v1528 = vpop.f32.mrf.mxu0
  %v1529 = vadd.f32 %v87, %v1528
  %1530 = vmatmul.bf16.gmra.mxu0 %v114
  %v1531 = vpop.f32.mrf.mxu0
  %v1532 = vadd.f32 %v92, %v1531
  %v1533 = vpop.f32.mrf.mxu0
  %v1534 = vadd.f32 %v97, %v1533
  %1535 = vdwg.mxu0
  %1536 = vmatpush.bf16.msra.mxu0 0
  %1537 = vmatpush.bf16.msra.mxu0 0
  %1538 = vmatpush.bf16.msra.mxu0 0
  %1539 = vmatpush.bf16.msra.mxu0 0
  %1540 = vmatpush.bf16.msra.mxu0 %v1515
  %1541 = vmatpush.bf16.msra.mxu0 %v1508
  %1542 = vmatpush.bf16.msra.mxu0 %v1506
  %1543 = vmatpush.bf16.msra.mxu0 %v1504
  %1544 = vmatmul.bf16.gmra.mxu0 %v111
  %v1545 = vpop.f32.mrf.mxu0
  %v1546 = vadd.f32 %v82, %v1545
  %v1547 = vpop.f32.mrf.mxu0
  %v1548 = vadd.f32 %v87, %v1547
  %1549 = vmatmul.bf16.gmra.mxu0 %v114
  %v1550 = vpop.f32.mrf.mxu0
  %v1551 = vadd.f32 %v92, %v1550
  %v1552 = vpop.f32.mrf.mxu0
  %v1553 = vadd.f32 %v97, %v1552
  %1554 = vdwg.mxu0
  %v1555 = vmax.f32 %v1527, 0.0
  %v1556 = vmax.f32 %v1546, 0.0
  %v1557 = vmax.f32 %v1529, 0.0
  %v1558 = vmax.f32 %v1548, 0.0
  %v1559 = vmax.f32 %v1532, 0.0
  %v1560 = vmax.f32 %v1551, 0.0
  %v1561 = vmax.f32 %v1534, 0.0
  %v1562 = vmax.f32 %v1553, 0.0
  %v1563 = vpack.c.bf16 %v1557, %v1555
  %v1564 = vpack.c.bf16 %v1561, %v1559
  %v1565 = vpack.c.bf16 %v1558, %v1556
  %v1566 = vpack.c.bf16 %v1562, %v1560
  %1571 = vrot.lane.b32.xlu0 %v1563, 127
  %v1572 = vpop.permute.xlu0 %1571
  %1573 = vrot.lane.b32.xlu0 %v1565, 127
  %v1574 = vpop.permute.xlu0 %1573
  %1575 = vrot.lane.b32.xlu0 %v1564, 127
  %v1576 = vpop.permute.xlu0 %1575
  %1577 = vrot.lane.b32.xlu0 %v1566, 127
  %v1578 = vpop.permute.xlu0 %1577
  %v1579 = vsel %vm190, %v1572, %v1574
  %v1580 = vsel %vm190, %v1576, %v1578
  %1583 = vmatpush.bf16.msra.mxu0 0
  %1584 = vmatpush.bf16.msra.mxu0 0
  %1585 = vmatpush.bf16.msra.mxu0 0
  %1586 = vmatpush.bf16.msra.mxu0 0
  %1587 = vmatpush.bf16.msra.mxu0 0
  %1588 = vmatpush.bf16.msra.mxu0 0
  %1589 = vmatpush.bf16.msra.mxu0 %v1580
  %1590 = vmatpush.bf16.msra.mxu0 %v1579
  %1591 = vmatmul.bf16.gmra.mxu0 %v197
  %v1592 = vpop.f32.mrf.mxu0
  %v1593 = vadd.f32 0.0, %v1592
  %v1594 = vpop.f32.mrf.mxu0
  %v1595 = vadd.f32 0.0, %v1594
  %1596 = vdwg.mxu0
  %1597 = vmatpush.bf16.msra.mxu0 0
  %1598 = vmatpush.bf16.msra.mxu0 0
  %1599 = vmatpush.bf16.msra.mxu0 0
  %1600 = vmatpush.bf16.msra.mxu0 0
  %1601 = vmatpush.bf16.msra.mxu0 0
  %1602 = vmatpush.bf16.msra.mxu0 0
  %1603 = vmatpush.bf16.msra.mxu0 %v1564
  %1604 = vmatpush.bf16.msra.mxu0 %v1563
  %1605 = vmatmul.bf16.gmra.mxu0 %v219
  %v1606 = vpop.f32.mrf.mxu0
  %v1607 = vadd.f32 %v1593, %v1606
  %v1608 = vpop.f32.mrf.mxu0
  %v1609 = vadd.f32 %v1595, %v1608
  %1610 = vdwg.mxu0
  %1611 = vrot.lane.b32.xlu0 %v1563, 126
  %v1612 = vpop.permute.xlu0 %1611
  %1613 = vrot.lane.b32.xlu0 %v1565, 126
  %v1614 = vpop.permute.xlu0 %1613
  %1615 = vrot.lane.b32.xlu0 %v1564, 126
  %v1616 = vpop.permute.xlu0 %1615
  %1617 = vrot.lane.b32.xlu0 %v1566, 126
  %v1618 = vpop.permute.xlu0 %1617
  %v1619 = vsel %vm248, %v1612, %v1614
  %v1620 = vsel %vm248, %v1616, %v1618
  %1623 = vmatpush.bf16.msra.mxu0 0
  %1624 = vmatpush.bf16.msra.mxu0 0
  %1625 = vmatpush.bf16.msra.mxu0 0
  %1626 = vmatpush.bf16.msra.mxu0 0
  %1627 = vmatpush.bf16.msra.mxu0 0
  %1628 = vmatpush.bf16.msra.mxu0 0
  %1629 = vmatpush.bf16.msra.mxu0 %v1620
  %1630 = vmatpush.bf16.msra.mxu0 %v1619
  %1631 = vmatmul.bf16.gmra.mxu0 %v254
  %v1632 = vpop.f32.mrf.mxu0
  %v1633 = vadd.f32 0.0, %v1632
  %v1634 = vpop.f32.mrf.mxu0
  %v1635 = vadd.f32 0.0, %v1634
  %1636 = vdwg.mxu0
  %v1637 = vadd.f32 %v1607, %v1633
  %v1638 = vadd.f32 %v1609, %v1635
  %1639 = vrot.lane.b32.xlu0 %v1563, 116
  %v1640 = vpop.permute.xlu0 %1639
  %1641 = vrot.lane.b32.xlu0 %v1565, 116
  %v1642 = vpop.permute.xlu0 %1641
  %1643 = vrot.lane.b32.xlu0 %v1564, 116
  %v1644 = vpop.permute.xlu0 %1643
  %1645 = vrot.lane.b32.xlu0 %v1566, 116
  %v1646 = vpop.permute.xlu0 %1645
  %v1647 = vsel %vm285, %v1640, %v1642
  %v1648 = vsel %vm285, %v1644, %v1646
  %1651 = vmatpush.bf16.msra.mxu0 0
  %1652 = vmatpush.bf16.msra.mxu0 0
  %1653 = vmatpush.bf16.msra.mxu0 0
  %1654 = vmatpush.bf16.msra.mxu0 0
  %1655 = vmatpush.bf16.msra.mxu0 0
  %1656 = vmatpush.bf16.msra.mxu0 0
  %1657 = vmatpush.bf16.msra.mxu0 %v1648
  %1658 = vmatpush.bf16.msra.mxu0 %v1647
  %1659 = vmatmul.bf16.gmra.mxu0 %v291
  %v1660 = vpop.f32.mrf.mxu0
  %v1661 = vadd.f32 0.0, %v1660
  %v1662 = vpop.f32.mrf.mxu0
  %v1663 = vadd.f32 0.0, %v1662
  %1664 = vdwg.mxu0
  %v1665 = vadd.f32 %v1637, %v1661
  %v1666 = vadd.f32 %v1638, %v1663
  %1667 = vrot.lane.b32.xlu0 %v1563, 115
  %v1668 = vpop.permute.xlu0 %1667
  %1669 = vrot.lane.b32.xlu0 %v1565, 115
  %v1670 = vpop.permute.xlu0 %1669
  %1671 = vrot.lane.b32.xlu0 %v1564, 115
  %v1672 = vpop.permute.xlu0 %1671
  %1673 = vrot.lane.b32.xlu0 %v1566, 115
  %v1674 = vpop.permute.xlu0 %1673
  %v1675 = vsel %vm322, %v1668, %v1670
  %v1676 = vsel %vm322, %v1672, %v1674
  %1679 = vmatpush.bf16.msra.mxu0 0
  %1680 = vmatpush.bf16.msra.mxu0 0
  %1681 = vmatpush.bf16.msra.mxu0 0
  %1682 = vmatpush.bf16.msra.mxu0 0
  %1683 = vmatpush.bf16.msra.mxu0 0
  %1684 = vmatpush.bf16.msra.mxu0 0
  %1685 = vmatpush.bf16.msra.mxu0 %v1676
  %1686 = vmatpush.bf16.msra.mxu0 %v1675
  %1687 = vmatmul.bf16.gmra.mxu0 %v328
  %v1688 = vpop.f32.mrf.mxu0
  %v1689 = vadd.f32 0.0, %v1688
  %v1690 = vpop.f32.mrf.mxu0
  %v1691 = vadd.f32 0.0, %v1690
  %1692 = vdwg.mxu0
  %v1693 = vadd.f32 %v1665, %v1689
  %v1694 = vadd.f32 %v1666, %v1691
  %1695 = vrot.lane.b32.xlu0 %v1563, 114
  %v1696 = vpop.permute.xlu0 %1695
  %1697 = vrot.lane.b32.xlu0 %v1565, 114
  %v1698 = vpop.permute.xlu0 %1697
  %1699 = vrot.lane.b32.xlu0 %v1564, 114
  %v1700 = vpop.permute.xlu0 %1699
  %1701 = vrot.lane.b32.xlu0 %v1566, 114
  %v1702 = vpop.permute.xlu0 %1701
  %v1703 = vsel %vm359, %v1696, %v1698
  %v1704 = vsel %vm359, %v1700, %v1702
  %1707 = vmatpush.bf16.msra.mxu0 0
  %1708 = vmatpush.bf16.msra.mxu0 0
  %1709 = vmatpush.bf16.msra.mxu0 0
  %1710 = vmatpush.bf16.msra.mxu0 0
  %1711 = vmatpush.bf16.msra.mxu0 0
  %1712 = vmatpush.bf16.msra.mxu0 0
  %1713 = vmatpush.bf16.msra.mxu0 %v1704
  %1714 = vmatpush.bf16.msra.mxu0 %v1703
  %1715 = vmatmul.bf16.gmra.mxu0 %v365
  %v1716 = vpop.f32.mrf.mxu0
  %v1717 = vadd.f32 0.0, %v1716
  %v1718 = vpop.f32.mrf.mxu0
  %v1719 = vadd.f32 0.0, %v1718
  %1720 = vdwg.mxu0
  %v1721 = vadd.f32 %v1693, %v1717
  %v1722 = vadd.f32 %v1694, %v1719
  %1723 = vrot.lane.b32.xlu0 %v1563, 104
  %v1724 = vpop.permute.xlu0 %1723
  %1725 = vrot.lane.b32.xlu0 %v1565, 104
  %v1726 = vpop.permute.xlu0 %1725
  %1727 = vrot.lane.b32.xlu0 %v1564, 104
  %v1728 = vpop.permute.xlu0 %1727
  %1729 = vrot.lane.b32.xlu0 %v1566, 104
  %v1730 = vpop.permute.xlu0 %1729
  %v1731 = vsel %vm396, %v1724, %v1726
  %v1732 = vsel %vm396, %v1728, %v1730
  %1735 = vmatpush.bf16.msra.mxu0 0
  %1736 = vmatpush.bf16.msra.mxu0 0
  %1737 = vmatpush.bf16.msra.mxu0 0
  %1738 = vmatpush.bf16.msra.mxu0 0
  %1739 = vmatpush.bf16.msra.mxu0 0
  %1740 = vmatpush.bf16.msra.mxu0 0
  %1741 = vmatpush.bf16.msra.mxu0 %v1732
  %1742 = vmatpush.bf16.msra.mxu0 %v1731
  %1743 = vmatmul.bf16.gmra.mxu0 %v402
  %v1744 = vpop.f32.mrf.mxu0
  %v1745 = vadd.f32 0.0, %v1744
  %v1746 = vpop.f32.mrf.mxu0
  %v1747 = vadd.f32 0.0, %v1746
  %1748 = vdwg.mxu0
  %v1749 = vadd.f32 %v1721, %v1745
  %v1750 = vadd.f32 %v1722, %v1747
  %1751 = vrot.lane.b32.xlu0 %v1563, 103
  %v1752 = vpop.permute.xlu0 %1751
  %1753 = vrot.lane.b32.xlu0 %v1565, 103
  %v1754 = vpop.permute.xlu0 %1753
  %1755 = vrot.lane.b32.xlu0 %v1564, 103
  %v1756 = vpop.permute.xlu0 %1755
  %1757 = vrot.lane.b32.xlu0 %v1566, 103
  %v1758 = vpop.permute.xlu0 %1757
  %v1759 = vsel %vm433, %v1752, %v1754
  %v1760 = vsel %vm433, %v1756, %v1758
  %1763 = vmatpush.bf16.msra.mxu0 0
  %1764 = vmatpush.bf16.msra.mxu0 0
  %1765 = vmatpush.bf16.msra.mxu0 0
  %1766 = vmatpush.bf16.msra.mxu0 0
  %1767 = vmatpush.bf16.msra.mxu0 0
  %1768 = vmatpush.bf16.msra.mxu0 0
  %1769 = vmatpush.bf16.msra.mxu0 %v1760
  %1770 = vmatpush.bf16.msra.mxu0 %v1759
  %1771 = vmatmul.bf16.gmra.mxu0 %v439
  %v1772 = vpop.f32.mrf.mxu0
  %v1773 = vadd.f32 0.0, %v1772
  %v1774 = vpop.f32.mrf.mxu0
  %v1775 = vadd.f32 0.0, %v1774
  %1776 = vdwg.mxu0
  %v1777 = vadd.f32 %v1749, %v1773
  %v1778 = vadd.f32 %v1750, %v1775
  %1779 = vrot.lane.b32.xlu0 %v1563, 102
  %v1780 = vpop.permute.xlu0 %1779
  %1781 = vrot.lane.b32.xlu0 %v1565, 102
  %v1782 = vpop.permute.xlu0 %1781
  %1783 = vrot.lane.b32.xlu0 %v1564, 102
  %v1784 = vpop.permute.xlu0 %1783
  %1785 = vrot.lane.b32.xlu0 %v1566, 102
  %v1786 = vpop.permute.xlu0 %1785
  %v1787 = vsel %vm470, %v1780, %v1782
  %v1788 = vsel %vm470, %v1784, %v1786
  %1791 = vmatpush.bf16.msra.mxu0 0
  %1792 = vmatpush.bf16.msra.mxu0 0
  %1793 = vmatpush.bf16.msra.mxu0 0
  %1794 = vmatpush.bf16.msra.mxu0 0
  %1795 = vmatpush.bf16.msra.mxu0 0
  %1796 = vmatpush.bf16.msra.mxu0 0
  %1797 = vmatpush.bf16.msra.mxu0 %v1788
  %1798 = vmatpush.bf16.msra.mxu0 %v1787
  %1799 = vmatmul.bf16.gmra.mxu0 %v476
  %v1800 = vpop.f32.mrf.mxu0
  %v1801 = vadd.f32 0.0, %v1800
  %v1802 = vpop.f32.mrf.mxu0
  %v1803 = vadd.f32 0.0, %v1802
  %1804 = vdwg.mxu0
  %v1805 = vadd.f32 %v1777, %v1801
  %v1806 = vadd.f32 %v1778, %v1803
  %v1807 = vadd.f32 %v1805, %v497
  %v1808 = vadd.f32 %v1806, %v502
  %v1809 = vmax.f32 %v1807, 0.0
  %v1810 = vmax.f32 %v1808, 0.0
  %s1811 = scalar_lea.vmem %s5, 64
  %1812 = vst [vmem:[%s1811] sm:$0xff] %v1809
  %1813 = vst [vmem:[%s1811 + $0x8] sm:$0xff] %v1810
  %s1814 = scalar_lea.vmem %s0, 560
  %v1815 = vld [vmem:[%s1814] sm:$0xff]
  %v1816 = vld [vmem:[%s1814 + $0x8] sm:$0xff]
  %v1817 = vld [vmem:[%s1814 + $0x10] sm:$0xff]
  %v1818 = vld [vmem:[%s1814 + $0x18] sm:$0xff]
  %v1819 = vld [vmem:[%s1814 + $0x20] sm:$0xff]
  %v1820 = vld [vmem:[%s1814 + $0x28] sm:$0xff]
  %v1821 = vld [vmem:[%s1814 + $0x30] sm:$0xff]
  %v1822 = vld [vmem:[%s1814 + $0x38] sm:$0xff]
  %v1823 = vld [vmem:[%s1814 + $0x40] sm:$0xff]
  %v1824 = vld [vmem:[%s1814 + $0x48] sm:$0xff]
  %v1825 = vld [vmem:[%s1814 + $0x50] sm:$0xff]
  %v1826 = vld [vmem:[%s1814 + $0x58] sm:$0xff]
  %v1827 = vld [vmem:[%s1814 + $0x60] sm:$0x3]
  %v1828 = vld [vmem:[%s1814 + $0x68] sm:$0x3]
  %v1829 = vpack.c.bf16 %v1817, %v1815
  %v1830 = vpack.c.bf16 %v1818, %v1816
  %v1831 = vpack.c.bf16 %v1821, %v1819
  %v1832 = vpack.c.bf16 %v1822, %v1820
  %v1833 = vpack.c.bf16 %v1825, %v1823
  %v1834 = vpack.c.bf16 %v1826, %v1824
  %v1835 = vpack.c.bf16 %v1827, %v1827
  %v1836 = vpack.c.bf16 %v1828, %v1828
  %v1838 = vsel %vm116, %v1835, 0
  %v1841 = vsel %vm116, %v1836, 0
  %1843 = vmatpush.bf16.msra.mxu0 0
  %1844 = vmatpush.bf16.msra.mxu0 0
  %1845 = vmatpush.bf16.msra.mxu0 0
  %1846 = vmatpush.bf16.msra.mxu0 0
  %1847 = vmatpush.bf16.msra.mxu0 %v1838
  %1848 = vmatpush.bf16.msra.mxu0 %v1833
  %1849 = vmatpush.bf16.msra.mxu0 %v1831
  %1850 = vmatpush.bf16.msra.mxu0 %v1829
  %1851 = vmatmul.bf16.gmra.mxu0 %v111
  %v1852 = vpop.f32.mrf.mxu0
  %v1853 = vadd.f32 %v82, %v1852
  %v1854 = vpop.f32.mrf.mxu0
  %v1855 = vadd.f32 %v87, %v1854
  %1856 = vmatmul.bf16.gmra.mxu0 %v114
  %v1857 = vpop.f32.mrf.mxu0
  %v1858 = vadd.f32 %v92, %v1857
  %v1859 = vpop.f32.mrf.mxu0
  %v1860 = vadd.f32 %v97, %v1859
  %1861 = vdwg.mxu0
  %1862 = vmatpush.bf16.msra.mxu0 0
  %1863 = vmatpush.bf16.msra.mxu0 0
  %1864 = vmatpush.bf16.msra.mxu0 0
  %1865 = vmatpush.bf16.msra.mxu0 0
  %1866 = vmatpush.bf16.msra.mxu0 %v1841
  %1867 = vmatpush.bf16.msra.mxu0 %v1834
  %1868 = vmatpush.bf16.msra.mxu0 %v1832
  %1869 = vmatpush.bf16.msra.mxu0 %v1830
  %1870 = vmatmul.bf16.gmra.mxu0 %v111
  %v1871 = vpop.f32.mrf.mxu0
  %v1872 = vadd.f32 %v82, %v1871
  %v1873 = vpop.f32.mrf.mxu0
  %v1874 = vadd.f32 %v87, %v1873
  %1875 = vmatmul.bf16.gmra.mxu0 %v114
  %v1876 = vpop.f32.mrf.mxu0
  %v1877 = vadd.f32 %v92, %v1876
  %v1878 = vpop.f32.mrf.mxu0
  %v1879 = vadd.f32 %v97, %v1878
  %1880 = vdwg.mxu0
  %v1881 = vmax.f32 %v1853, 0.0
  %v1882 = vmax.f32 %v1872, 0.0
  %v1883 = vmax.f32 %v1855, 0.0
  %v1884 = vmax.f32 %v1874, 0.0
  %v1885 = vmax.f32 %v1858, 0.0
  %v1886 = vmax.f32 %v1877, 0.0
  %v1887 = vmax.f32 %v1860, 0.0
  %v1888 = vmax.f32 %v1879, 0.0
  %v1889 = vpack.c.bf16 %v1883, %v1881
  %v1890 = vpack.c.bf16 %v1887, %v1885
  %v1891 = vpack.c.bf16 %v1884, %v1882
  %v1892 = vpack.c.bf16 %v1888, %v1886
  %1897 = vrot.lane.b32.xlu0 %v1889, 127
  %v1898 = vpop.permute.xlu0 %1897
  %1899 = vrot.lane.b32.xlu0 %v1891, 127
  %v1900 = vpop.permute.xlu0 %1899
  %1901 = vrot.lane.b32.xlu0 %v1890, 127
  %v1902 = vpop.permute.xlu0 %1901
  %1903 = vrot.lane.b32.xlu0 %v1892, 127
  %v1904 = vpop.permute.xlu0 %1903
  %v1905 = vsel %vm190, %v1898, %v1900
  %v1906 = vsel %vm190, %v1902, %v1904
  %1909 = vmatpush.bf16.msra.mxu0 0
  %1910 = vmatpush.bf16.msra.mxu0 0
  %1911 = vmatpush.bf16.msra.mxu0 0
  %1912 = vmatpush.bf16.msra.mxu0 0
  %1913 = vmatpush.bf16.msra.mxu0 0
  %1914 = vmatpush.bf16.msra.mxu0 0
  %1915 = vmatpush.bf16.msra.mxu0 %v1906
  %1916 = vmatpush.bf16.msra.mxu0 %v1905
  %1917 = vmatmul.bf16.gmra.mxu0 %v197
  %v1918 = vpop.f32.mrf.mxu0
  %v1919 = vadd.f32 0.0, %v1918
  %v1920 = vpop.f32.mrf.mxu0
  %v1921 = vadd.f32 0.0, %v1920
  %1922 = vdwg.mxu0
  %1923 = vmatpush.bf16.msra.mxu0 0
  %1924 = vmatpush.bf16.msra.mxu0 0
  %1925 = vmatpush.bf16.msra.mxu0 0
  %1926 = vmatpush.bf16.msra.mxu0 0
  %1927 = vmatpush.bf16.msra.mxu0 0
  %1928 = vmatpush.bf16.msra.mxu0 0
  %1929 = vmatpush.bf16.msra.mxu0 %v1890
  %1930 = vmatpush.bf16.msra.mxu0 %v1889
  %1931 = vmatmul.bf16.gmra.mxu0 %v219
  %v1932 = vpop.f32.mrf.mxu0
  %v1933 = vadd.f32 %v1919, %v1932
  %v1934 = vpop.f32.mrf.mxu0
  %v1935 = vadd.f32 %v1921, %v1934
  %1936 = vdwg.mxu0
  %1937 = vrot.lane.b32.xlu0 %v1889, 126
  %v1938 = vpop.permute.xlu0 %1937
  %1939 = vrot.lane.b32.xlu0 %v1891, 126
  %v1940 = vpop.permute.xlu0 %1939
  %1941 = vrot.lane.b32.xlu0 %v1890, 126
  %v1942 = vpop.permute.xlu0 %1941
  %1943 = vrot.lane.b32.xlu0 %v1892, 126
  %v1944 = vpop.permute.xlu0 %1943
  %v1945 = vsel %vm248, %v1938, %v1940
  %v1946 = vsel %vm248, %v1942, %v1944
  %1949 = vmatpush.bf16.msra.mxu0 0
  %1950 = vmatpush.bf16.msra.mxu0 0
  %1951 = vmatpush.bf16.msra.mxu0 0
  %1952 = vmatpush.bf16.msra.mxu0 0
  %1953 = vmatpush.bf16.msra.mxu0 0
  %1954 = vmatpush.bf16.msra.mxu0 0
  %1955 = vmatpush.bf16.msra.mxu0 %v1946
  %1956 = vmatpush.bf16.msra.mxu0 %v1945
  %1957 = vmatmul.bf16.gmra.mxu0 %v254
  %v1958 = vpop.f32.mrf.mxu0
  %v1959 = vadd.f32 0.0, %v1958
  %v1960 = vpop.f32.mrf.mxu0
  %v1961 = vadd.f32 0.0, %v1960
  %1962 = vdwg.mxu0
  %v1963 = vadd.f32 %v1933, %v1959
  %v1964 = vadd.f32 %v1935, %v1961
  %1965 = vrot.lane.b32.xlu0 %v1889, 116
  %v1966 = vpop.permute.xlu0 %1965
  %1967 = vrot.lane.b32.xlu0 %v1891, 116
  %v1968 = vpop.permute.xlu0 %1967
  %1969 = vrot.lane.b32.xlu0 %v1890, 116
  %v1970 = vpop.permute.xlu0 %1969
  %1971 = vrot.lane.b32.xlu0 %v1892, 116
  %v1972 = vpop.permute.xlu0 %1971
  %v1973 = vsel %vm285, %v1966, %v1968
  %v1974 = vsel %vm285, %v1970, %v1972
  %1977 = vmatpush.bf16.msra.mxu0 0
  %1978 = vmatpush.bf16.msra.mxu0 0
  %1979 = vmatpush.bf16.msra.mxu0 0
  %1980 = vmatpush.bf16.msra.mxu0 0
  %1981 = vmatpush.bf16.msra.mxu0 0
  %1982 = vmatpush.bf16.msra.mxu0 0
  %1983 = vmatpush.bf16.msra.mxu0 %v1974
  %1984 = vmatpush.bf16.msra.mxu0 %v1973
  %1985 = vmatmul.bf16.gmra.mxu0 %v291
  %v1986 = vpop.f32.mrf.mxu0
  %v1987 = vadd.f32 0.0, %v1986
  %v1988 = vpop.f32.mrf.mxu0
  %v1989 = vadd.f32 0.0, %v1988
  %1990 = vdwg.mxu0
  %v1991 = vadd.f32 %v1963, %v1987
  %v1992 = vadd.f32 %v1964, %v1989
  %1993 = vrot.lane.b32.xlu0 %v1889, 115
  %v1994 = vpop.permute.xlu0 %1993
  %1995 = vrot.lane.b32.xlu0 %v1891, 115
  %v1996 = vpop.permute.xlu0 %1995
  %1997 = vrot.lane.b32.xlu0 %v1890, 115
  %v1998 = vpop.permute.xlu0 %1997
  %1999 = vrot.lane.b32.xlu0 %v1892, 115
  %v2000 = vpop.permute.xlu0 %1999
  %v2001 = vsel %vm322, %v1994, %v1996
  %v2002 = vsel %vm322, %v1998, %v2000
  %2005 = vmatpush.bf16.msra.mxu0 0
  %2006 = vmatpush.bf16.msra.mxu0 0
  %2007 = vmatpush.bf16.msra.mxu0 0
  %2008 = vmatpush.bf16.msra.mxu0 0
  %2009 = vmatpush.bf16.msra.mxu0 0
  %2010 = vmatpush.bf16.msra.mxu0 0
  %2011 = vmatpush.bf16.msra.mxu0 %v2002
  %2012 = vmatpush.bf16.msra.mxu0 %v2001
  %2013 = vmatmul.bf16.gmra.mxu0 %v328
  %v2014 = vpop.f32.mrf.mxu0
  %v2015 = vadd.f32 0.0, %v2014
  %v2016 = vpop.f32.mrf.mxu0
  %v2017 = vadd.f32 0.0, %v2016
  %2018 = vdwg.mxu0
  %v2019 = vadd.f32 %v1991, %v2015
  %v2020 = vadd.f32 %v1992, %v2017
  %2021 = vrot.lane.b32.xlu0 %v1889, 114
  %v2022 = vpop.permute.xlu0 %2021
  %2023 = vrot.lane.b32.xlu0 %v1891, 114
  %v2024 = vpop.permute.xlu0 %2023
  %2025 = vrot.lane.b32.xlu0 %v1890, 114
  %v2026 = vpop.permute.xlu0 %2025
  %2027 = vrot.lane.b32.xlu0 %v1892, 114
  %v2028 = vpop.permute.xlu0 %2027
  %v2029 = vsel %vm359, %v2022, %v2024
  %v2030 = vsel %vm359, %v2026, %v2028
  %2033 = vmatpush.bf16.msra.mxu0 0
  %2034 = vmatpush.bf16.msra.mxu0 0
  %2035 = vmatpush.bf16.msra.mxu0 0
  %2036 = vmatpush.bf16.msra.mxu0 0
  %2037 = vmatpush.bf16.msra.mxu0 0
  %2038 = vmatpush.bf16.msra.mxu0 0
  %2039 = vmatpush.bf16.msra.mxu0 %v2030
  %2040 = vmatpush.bf16.msra.mxu0 %v2029
  %2041 = vmatmul.bf16.gmra.mxu0 %v365
  %v2042 = vpop.f32.mrf.mxu0
  %v2043 = vadd.f32 0.0, %v2042
  %v2044 = vpop.f32.mrf.mxu0
  %v2045 = vadd.f32 0.0, %v2044
  %2046 = vdwg.mxu0
  %v2047 = vadd.f32 %v2019, %v2043
  %v2048 = vadd.f32 %v2020, %v2045
  %2049 = vrot.lane.b32.xlu0 %v1889, 104
  %v2050 = vpop.permute.xlu0 %2049
  %2051 = vrot.lane.b32.xlu0 %v1891, 104
  %v2052 = vpop.permute.xlu0 %2051
  %2053 = vrot.lane.b32.xlu0 %v1890, 104
  %v2054 = vpop.permute.xlu0 %2053
  %2055 = vrot.lane.b32.xlu0 %v1892, 104
  %v2056 = vpop.permute.xlu0 %2055
  %v2057 = vsel %vm396, %v2050, %v2052
  %v2058 = vsel %vm396, %v2054, %v2056
  %2061 = vmatpush.bf16.msra.mxu0 0
  %2062 = vmatpush.bf16.msra.mxu0 0
  %2063 = vmatpush.bf16.msra.mxu0 0
  %2064 = vmatpush.bf16.msra.mxu0 0
  %2065 = vmatpush.bf16.msra.mxu0 0
  %2066 = vmatpush.bf16.msra.mxu0 0
  %2067 = vmatpush.bf16.msra.mxu0 %v2058
  %2068 = vmatpush.bf16.msra.mxu0 %v2057
  %2069 = vmatmul.bf16.gmra.mxu0 %v402
  %v2070 = vpop.f32.mrf.mxu0
  %v2071 = vadd.f32 0.0, %v2070
  %v2072 = vpop.f32.mrf.mxu0
  %v2073 = vadd.f32 0.0, %v2072
  %2074 = vdwg.mxu0
  %v2075 = vadd.f32 %v2047, %v2071
  %v2076 = vadd.f32 %v2048, %v2073
  %2077 = vrot.lane.b32.xlu0 %v1889, 103
  %v2078 = vpop.permute.xlu0 %2077
  %2079 = vrot.lane.b32.xlu0 %v1891, 103
  %v2080 = vpop.permute.xlu0 %2079
  %2081 = vrot.lane.b32.xlu0 %v1890, 103
  %v2082 = vpop.permute.xlu0 %2081
  %2083 = vrot.lane.b32.xlu0 %v1892, 103
  %v2084 = vpop.permute.xlu0 %2083
  %v2085 = vsel %vm433, %v2078, %v2080
  %v2086 = vsel %vm433, %v2082, %v2084
  %2089 = vmatpush.bf16.msra.mxu0 0
  %2090 = vmatpush.bf16.msra.mxu0 0
  %2091 = vmatpush.bf16.msra.mxu0 0
  %2092 = vmatpush.bf16.msra.mxu0 0
  %2093 = vmatpush.bf16.msra.mxu0 0
  %2094 = vmatpush.bf16.msra.mxu0 0
  %2095 = vmatpush.bf16.msra.mxu0 %v2086
  %2096 = vmatpush.bf16.msra.mxu0 %v2085
  %2097 = vmatmul.bf16.gmra.mxu0 %v439
  %v2098 = vpop.f32.mrf.mxu0
  %v2099 = vadd.f32 0.0, %v2098
  %v2100 = vpop.f32.mrf.mxu0
  %v2101 = vadd.f32 0.0, %v2100
  %2102 = vdwg.mxu0
  %v2103 = vadd.f32 %v2075, %v2099
  %v2104 = vadd.f32 %v2076, %v2101
  %2105 = vrot.lane.b32.xlu0 %v1889, 102
  %v2106 = vpop.permute.xlu0 %2105
  %2107 = vrot.lane.b32.xlu0 %v1891, 102
  %v2108 = vpop.permute.xlu0 %2107
  %2109 = vrot.lane.b32.xlu0 %v1890, 102
  %v2110 = vpop.permute.xlu0 %2109
  %2111 = vrot.lane.b32.xlu0 %v1892, 102
  %v2112 = vpop.permute.xlu0 %2111
  %v2113 = vsel %vm470, %v2106, %v2108
  %v2114 = vsel %vm470, %v2110, %v2112
  %2117 = vmatpush.bf16.msra.mxu0 0
  %2118 = vmatpush.bf16.msra.mxu0 0
  %2119 = vmatpush.bf16.msra.mxu0 0
  %2120 = vmatpush.bf16.msra.mxu0 0
  %2121 = vmatpush.bf16.msra.mxu0 0
  %2122 = vmatpush.bf16.msra.mxu0 0
  %2123 = vmatpush.bf16.msra.mxu0 %v2114
  %2124 = vmatpush.bf16.msra.mxu0 %v2113
  %2125 = vmatmul.bf16.gmra.mxu0 %v476
  %v2126 = vpop.f32.mrf.mxu0
  %v2127 = vadd.f32 0.0, %v2126
  %v2128 = vpop.f32.mrf.mxu0
  %v2129 = vadd.f32 0.0, %v2128
  %2130 = vdwg.mxu0
  %v2131 = vadd.f32 %v2103, %v2127
  %v2132 = vadd.f32 %v2104, %v2129
  %v2133 = vadd.f32 %v2131, %v497
  %v2134 = vadd.f32 %v2132, %v502
  %v2135 = vmax.f32 %v2133, 0.0
  %v2136 = vmax.f32 %v2134, 0.0
  %s2137 = scalar_lea.vmem %s5, 80
  %2138 = vst [vmem:[%s2137] sm:$0xff] %v2135
  %2139 = vst [vmem:[%s2137 + $0x8] sm:$0xff] %v2136
  %s2140 = scalar_lea.vmem %s0, 672
  %v2141 = vld [vmem:[%s2140] sm:$0xff]
  %v2142 = vld [vmem:[%s2140 + $0x8] sm:$0xff]
  %v2143 = vld [vmem:[%s2140 + $0x10] sm:$0xff]
  %v2144 = vld [vmem:[%s2140 + $0x18] sm:$0xff]
  %v2145 = vld [vmem:[%s2140 + $0x20] sm:$0xff]
  %v2146 = vld [vmem:[%s2140 + $0x28] sm:$0xff]
  %v2147 = vld [vmem:[%s2140 + $0x30] sm:$0xff]
  %v2148 = vld [vmem:[%s2140 + $0x38] sm:$0xff]
  %v2149 = vld [vmem:[%s2140 + $0x40] sm:$0xff]
  %v2150 = vld [vmem:[%s2140 + $0x48] sm:$0xff]
  %v2151 = vld [vmem:[%s2140 + $0x50] sm:$0xff]
  %v2152 = vld [vmem:[%s2140 + $0x58] sm:$0xff]
  %v2153 = vld [vmem:[%s2140 + $0x60] sm:$0x3]
  %v2154 = vld [vmem:[%s2140 + $0x68] sm:$0x3]
  %v2155 = vpack.c.bf16 %v2143, %v2141
  %v2156 = vpack.c.bf16 %v2144, %v2142
  %v2157 = vpack.c.bf16 %v2147, %v2145
  %v2158 = vpack.c.bf16 %v2148, %v2146
  %v2159 = vpack.c.bf16 %v2151, %v2149
  %v2160 = vpack.c.bf16 %v2152, %v2150
  %v2161 = vpack.c.bf16 %v2153, %v2153
  %v2162 = vpack.c.bf16 %v2154, %v2154
  %v2164 = vsel %vm116, %v2161, 0
  %v2167 = vsel %vm116, %v2162, 0
  %2169 = vmatpush.bf16.msra.mxu0 0
  %2170 = vmatpush.bf16.msra.mxu0 0
  %2171 = vmatpush.bf16.msra.mxu0 0
  %2172 = vmatpush.bf16.msra.mxu0 0
  %2173 = vmatpush.bf16.msra.mxu0 %v2164
  %2174 = vmatpush.bf16.msra.mxu0 %v2159
  %2175 = vmatpush.bf16.msra.mxu0 %v2157
  %2176 = vmatpush.bf16.msra.mxu0 %v2155
  %2177 = vmatmul.bf16.gmra.mxu0 %v111
  %v2178 = vpop.f32.mrf.mxu0
  %v2179 = vadd.f32 %v82, %v2178
  %v2180 = vpop.f32.mrf.mxu0
  %v2181 = vadd.f32 %v87, %v2180
  %2182 = vmatmul.bf16.gmra.mxu0 %v114
  %v2183 = vpop.f32.mrf.mxu0
  %v2184 = vadd.f32 %v92, %v2183
  %v2185 = vpop.f32.mrf.mxu0
  %v2186 = vadd.f32 %v97, %v2185
  %2187 = vdwg.mxu0
  %2188 = vmatpush.bf16.msra.mxu0 0
  %2189 = vmatpush.bf16.msra.mxu0 0
  %2190 = vmatpush.bf16.msra.mxu0 0
  %2191 = vmatpush.bf16.msra.mxu0 0
  %2192 = vmatpush.bf16.msra.mxu0 %v2167
  %2193 = vmatpush.bf16.msra.mxu0 %v2160
  %2194 = vmatpush.bf16.msra.mxu0 %v2158
  %2195 = vmatpush.bf16.msra.mxu0 %v2156
  %2196 = vmatmul.bf16.gmra.mxu0 %v111
  %v2197 = vpop.f32.mrf.mxu0
  %v2198 = vadd.f32 %v82, %v2197
  %v2199 = vpop.f32.mrf.mxu0
  %v2200 = vadd.f32 %v87, %v2199
  %2201 = vmatmul.bf16.gmra.mxu0 %v114
  %v2202 = vpop.f32.mrf.mxu0
  %v2203 = vadd.f32 %v92, %v2202
  %v2204 = vpop.f32.mrf.mxu0
  %v2205 = vadd.f32 %v97, %v2204
  %2206 = vdwg.mxu0
  %v2207 = vmax.f32 %v2179, 0.0
  %v2208 = vmax.f32 %v2198, 0.0
  %v2209 = vmax.f32 %v2181, 0.0
  %v2210 = vmax.f32 %v2200, 0.0
  %v2211 = vmax.f32 %v2184, 0.0
  %v2212 = vmax.f32 %v2203, 0.0
  %v2213 = vmax.f32 %v2186, 0.0
  %v2214 = vmax.f32 %v2205, 0.0
  %v2215 = vpack.c.bf16 %v2209, %v2207
  %v2216 = vpack.c.bf16 %v2213, %v2211
  %v2217 = vpack.c.bf16 %v2210, %v2208
  %v2218 = vpack.c.bf16 %v2214, %v2212
  %2223 = vrot.lane.b32.xlu0 %v2215, 127
  %v2224 = vpop.permute.xlu0 %2223
  %2225 = vrot.lane.b32.xlu0 %v2217, 127
  %v2226 = vpop.permute.xlu0 %2225
  %2227 = vrot.lane.b32.xlu0 %v2216, 127
  %v2228 = vpop.permute.xlu0 %2227
  %2229 = vrot.lane.b32.xlu0 %v2218, 127
  %v2230 = vpop.permute.xlu0 %2229
  %v2231 = vsel %vm190, %v2224, %v2226
  %v2232 = vsel %vm190, %v2228, %v2230
  %2235 = vmatpush.bf16.msra.mxu0 0
  %2236 = vmatpush.bf16.msra.mxu0 0
  %2237 = vmatpush.bf16.msra.mxu0 0
  %2238 = vmatpush.bf16.msra.mxu0 0
  %2239 = vmatpush.bf16.msra.mxu0 0
  %2240 = vmatpush.bf16.msra.mxu0 0
  %2241 = vmatpush.bf16.msra.mxu0 %v2232
  %2242 = vmatpush.bf16.msra.mxu0 %v2231
  %2243 = vmatmul.bf16.gmra.mxu0 %v197
  %v2244 = vpop.f32.mrf.mxu0
  %v2245 = vadd.f32 0.0, %v2244
  %v2246 = vpop.f32.mrf.mxu0
  %v2247 = vadd.f32 0.0, %v2246
  %2248 = vdwg.mxu0
  %2249 = vmatpush.bf16.msra.mxu0 0
  %2250 = vmatpush.bf16.msra.mxu0 0
  %2251 = vmatpush.bf16.msra.mxu0 0
  %2252 = vmatpush.bf16.msra.mxu0 0
  %2253 = vmatpush.bf16.msra.mxu0 0
  %2254 = vmatpush.bf16.msra.mxu0 0
  %2255 = vmatpush.bf16.msra.mxu0 %v2216
  %2256 = vmatpush.bf16.msra.mxu0 %v2215
  %2257 = vmatmul.bf16.gmra.mxu0 %v219
  %v2258 = vpop.f32.mrf.mxu0
  %v2259 = vadd.f32 %v2245, %v2258
  %v2260 = vpop.f32.mrf.mxu0
  %v2261 = vadd.f32 %v2247, %v2260
  %2262 = vdwg.mxu0
  %2263 = vrot.lane.b32.xlu0 %v2215, 126
  %v2264 = vpop.permute.xlu0 %2263
  %2265 = vrot.lane.b32.xlu0 %v2217, 126
  %v2266 = vpop.permute.xlu0 %2265
  %2267 = vrot.lane.b32.xlu0 %v2216, 126
  %v2268 = vpop.permute.xlu0 %2267
  %2269 = vrot.lane.b32.xlu0 %v2218, 126
  %v2270 = vpop.permute.xlu0 %2269
  %v2271 = vsel %vm248, %v2264, %v2266
  %v2272 = vsel %vm248, %v2268, %v2270
  %2275 = vmatpush.bf16.msra.mxu0 0
  %2276 = vmatpush.bf16.msra.mxu0 0
  %2277 = vmatpush.bf16.msra.mxu0 0
  %2278 = vmatpush.bf16.msra.mxu0 0
  %2279 = vmatpush.bf16.msra.mxu0 0
  %2280 = vmatpush.bf16.msra.mxu0 0
  %2281 = vmatpush.bf16.msra.mxu0 %v2272
  %2282 = vmatpush.bf16.msra.mxu0 %v2271
  %2283 = vmatmul.bf16.gmra.mxu0 %v254
  %v2284 = vpop.f32.mrf.mxu0
  %v2285 = vadd.f32 0.0, %v2284
  %v2286 = vpop.f32.mrf.mxu0
  %v2287 = vadd.f32 0.0, %v2286
  %2288 = vdwg.mxu0
  %v2289 = vadd.f32 %v2259, %v2285
  %v2290 = vadd.f32 %v2261, %v2287
  %2291 = vrot.lane.b32.xlu0 %v2215, 116
  %v2292 = vpop.permute.xlu0 %2291
  %2293 = vrot.lane.b32.xlu0 %v2217, 116
  %v2294 = vpop.permute.xlu0 %2293
  %2295 = vrot.lane.b32.xlu0 %v2216, 116
  %v2296 = vpop.permute.xlu0 %2295
  %2297 = vrot.lane.b32.xlu0 %v2218, 116
  %v2298 = vpop.permute.xlu0 %2297
  %v2299 = vsel %vm285, %v2292, %v2294
  %v2300 = vsel %vm285, %v2296, %v2298
  %2303 = vmatpush.bf16.msra.mxu0 0
  %2304 = vmatpush.bf16.msra.mxu0 0
  %2305 = vmatpush.bf16.msra.mxu0 0
  %2306 = vmatpush.bf16.msra.mxu0 0
  %2307 = vmatpush.bf16.msra.mxu0 0
  %2308 = vmatpush.bf16.msra.mxu0 0
  %2309 = vmatpush.bf16.msra.mxu0 %v2300
  %2310 = vmatpush.bf16.msra.mxu0 %v2299
  %2311 = vmatmul.bf16.gmra.mxu0 %v291
  %v2312 = vpop.f32.mrf.mxu0
  %v2313 = vadd.f32 0.0, %v2312
  %v2314 = vpop.f32.mrf.mxu0
  %v2315 = vadd.f32 0.0, %v2314
  %2316 = vdwg.mxu0
  %v2317 = vadd.f32 %v2289, %v2313
  %v2318 = vadd.f32 %v2290, %v2315
  %2319 = vrot.lane.b32.xlu0 %v2215, 115
  %v2320 = vpop.permute.xlu0 %2319
  %2321 = vrot.lane.b32.xlu0 %v2217, 115
  %v2322 = vpop.permute.xlu0 %2321
  %2323 = vrot.lane.b32.xlu0 %v2216, 115
  %v2324 = vpop.permute.xlu0 %2323
  %2325 = vrot.lane.b32.xlu0 %v2218, 115
  %v2326 = vpop.permute.xlu0 %2325
  %v2327 = vsel %vm322, %v2320, %v2322
  %v2328 = vsel %vm322, %v2324, %v2326
  %2331 = vmatpush.bf16.msra.mxu0 0
  %2332 = vmatpush.bf16.msra.mxu0 0
  %2333 = vmatpush.bf16.msra.mxu0 0
  %2334 = vmatpush.bf16.msra.mxu0 0
  %2335 = vmatpush.bf16.msra.mxu0 0
  %2336 = vmatpush.bf16.msra.mxu0 0
  %2337 = vmatpush.bf16.msra.mxu0 %v2328
  %2338 = vmatpush.bf16.msra.mxu0 %v2327
  %2339 = vmatmul.bf16.gmra.mxu0 %v328
  %v2340 = vpop.f32.mrf.mxu0
  %v2341 = vadd.f32 0.0, %v2340
  %v2342 = vpop.f32.mrf.mxu0
  %v2343 = vadd.f32 0.0, %v2342
  %2344 = vdwg.mxu0
  %v2345 = vadd.f32 %v2317, %v2341
  %v2346 = vadd.f32 %v2318, %v2343
  %2347 = vrot.lane.b32.xlu0 %v2215, 114
  %v2348 = vpop.permute.xlu0 %2347
  %2349 = vrot.lane.b32.xlu0 %v2217, 114
  %v2350 = vpop.permute.xlu0 %2349
  %2351 = vrot.lane.b32.xlu0 %v2216, 114
  %v2352 = vpop.permute.xlu0 %2351
  %2353 = vrot.lane.b32.xlu0 %v2218, 114
  %v2354 = vpop.permute.xlu0 %2353
  %v2355 = vsel %vm359, %v2348, %v2350
  %v2356 = vsel %vm359, %v2352, %v2354
  %2359 = vmatpush.bf16.msra.mxu0 0
  %2360 = vmatpush.bf16.msra.mxu0 0
  %2361 = vmatpush.bf16.msra.mxu0 0
  %2362 = vmatpush.bf16.msra.mxu0 0
  %2363 = vmatpush.bf16.msra.mxu0 0
  %2364 = vmatpush.bf16.msra.mxu0 0
  %2365 = vmatpush.bf16.msra.mxu0 %v2356
  %2366 = vmatpush.bf16.msra.mxu0 %v2355
  %2367 = vmatmul.bf16.gmra.mxu0 %v365
  %v2368 = vpop.f32.mrf.mxu0
  %v2369 = vadd.f32 0.0, %v2368
  %v2370 = vpop.f32.mrf.mxu0
  %v2371 = vadd.f32 0.0, %v2370
  %2372 = vdwg.mxu0
  %v2373 = vadd.f32 %v2345, %v2369
  %v2374 = vadd.f32 %v2346, %v2371
  %2375 = vrot.lane.b32.xlu0 %v2215, 104
  %v2376 = vpop.permute.xlu0 %2375
  %2377 = vrot.lane.b32.xlu0 %v2217, 104
  %v2378 = vpop.permute.xlu0 %2377
  %2379 = vrot.lane.b32.xlu0 %v2216, 104
  %v2380 = vpop.permute.xlu0 %2379
  %2381 = vrot.lane.b32.xlu0 %v2218, 104
  %v2382 = vpop.permute.xlu0 %2381
  %v2383 = vsel %vm396, %v2376, %v2378
  %v2384 = vsel %vm396, %v2380, %v2382
  %2387 = vmatpush.bf16.msra.mxu0 0
  %2388 = vmatpush.bf16.msra.mxu0 0
  %2389 = vmatpush.bf16.msra.mxu0 0
  %2390 = vmatpush.bf16.msra.mxu0 0
  %2391 = vmatpush.bf16.msra.mxu0 0
  %2392 = vmatpush.bf16.msra.mxu0 0
  %2393 = vmatpush.bf16.msra.mxu0 %v2384
  %2394 = vmatpush.bf16.msra.mxu0 %v2383
  %2395 = vmatmul.bf16.gmra.mxu0 %v402
  %v2396 = vpop.f32.mrf.mxu0
  %v2397 = vadd.f32 0.0, %v2396
  %v2398 = vpop.f32.mrf.mxu0
  %v2399 = vadd.f32 0.0, %v2398
  %2400 = vdwg.mxu0
  %v2401 = vadd.f32 %v2373, %v2397
  %v2402 = vadd.f32 %v2374, %v2399
  %2403 = vrot.lane.b32.xlu0 %v2215, 103
  %v2404 = vpop.permute.xlu0 %2403
  %2405 = vrot.lane.b32.xlu0 %v2217, 103
  %v2406 = vpop.permute.xlu0 %2405
  %2407 = vrot.lane.b32.xlu0 %v2216, 103
  %v2408 = vpop.permute.xlu0 %2407
  %2409 = vrot.lane.b32.xlu0 %v2218, 103
  %v2410 = vpop.permute.xlu0 %2409
  %v2411 = vsel %vm433, %v2404, %v2406
  %v2412 = vsel %vm433, %v2408, %v2410
  %2415 = vmatpush.bf16.msra.mxu0 0
  %2416 = vmatpush.bf16.msra.mxu0 0
  %2417 = vmatpush.bf16.msra.mxu0 0
  %2418 = vmatpush.bf16.msra.mxu0 0
  %2419 = vmatpush.bf16.msra.mxu0 0
  %2420 = vmatpush.bf16.msra.mxu0 0
  %2421 = vmatpush.bf16.msra.mxu0 %v2412
  %2422 = vmatpush.bf16.msra.mxu0 %v2411
  %2423 = vmatmul.bf16.gmra.mxu0 %v439
  %v2424 = vpop.f32.mrf.mxu0
  %v2425 = vadd.f32 0.0, %v2424
  %v2426 = vpop.f32.mrf.mxu0
  %v2427 = vadd.f32 0.0, %v2426
  %2428 = vdwg.mxu0
  %v2429 = vadd.f32 %v2401, %v2425
  %v2430 = vadd.f32 %v2402, %v2427
  %2431 = vrot.lane.b32.xlu0 %v2215, 102
  %v2432 = vpop.permute.xlu0 %2431
  %2433 = vrot.lane.b32.xlu0 %v2217, 102
  %v2434 = vpop.permute.xlu0 %2433
  %2435 = vrot.lane.b32.xlu0 %v2216, 102
  %v2436 = vpop.permute.xlu0 %2435
  %2437 = vrot.lane.b32.xlu0 %v2218, 102
  %v2438 = vpop.permute.xlu0 %2437
  %v2439 = vsel %vm470, %v2432, %v2434
  %v2440 = vsel %vm470, %v2436, %v2438
  %2443 = vmatpush.bf16.msra.mxu0 0
  %2444 = vmatpush.bf16.msra.mxu0 0
  %2445 = vmatpush.bf16.msra.mxu0 0
  %2446 = vmatpush.bf16.msra.mxu0 0
  %2447 = vmatpush.bf16.msra.mxu0 0
  %2448 = vmatpush.bf16.msra.mxu0 0
  %2449 = vmatpush.bf16.msra.mxu0 %v2440
  %2450 = vmatpush.bf16.msra.mxu0 %v2439
  %2451 = vmatmul.bf16.gmra.mxu0 %v476
  %v2452 = vpop.f32.mrf.mxu0
  %v2453 = vadd.f32 0.0, %v2452
  %v2454 = vpop.f32.mrf.mxu0
  %v2455 = vadd.f32 0.0, %v2454
  %2456 = vdwg.mxu0
  %v2457 = vadd.f32 %v2429, %v2453
  %v2458 = vadd.f32 %v2430, %v2455
  %v2459 = vadd.f32 %v2457, %v497
  %v2460 = vadd.f32 %v2458, %v502
  %v2461 = vmax.f32 %v2459, 0.0
  %v2462 = vmax.f32 %v2460, 0.0
  %s2463 = scalar_lea.vmem %s5, 96
  %2464 = vst [vmem:[%s2463] sm:$0xff] %v2461
  %2465 = vst [vmem:[%s2463 + $0x8] sm:$0xff] %v2462
  %s2466 = scalar_lea.vmem %s0, 784
  %v2467 = vld [vmem:[%s2466] sm:$0xff]
  %v2468 = vld [vmem:[%s2466 + $0x8] sm:$0xff]
  %v2469 = vld [vmem:[%s2466 + $0x10] sm:$0xff]
  %v2470 = vld [vmem:[%s2466 + $0x18] sm:$0xff]
  %v2471 = vld [vmem:[%s2466 + $0x20] sm:$0xff]
  %v2472 = vld [vmem:[%s2466 + $0x28] sm:$0xff]
  %v2473 = vld [vmem:[%s2466 + $0x30] sm:$0xff]
  %v2474 = vld [vmem:[%s2466 + $0x38] sm:$0xff]
  %v2475 = vld [vmem:[%s2466 + $0x40] sm:$0xff]
  %v2476 = vld [vmem:[%s2466 + $0x48] sm:$0xff]
  %v2477 = vld [vmem:[%s2466 + $0x50] sm:$0xff]
  %v2478 = vld [vmem:[%s2466 + $0x58] sm:$0xff]
  %v2479 = vld [vmem:[%s2466 + $0x60] sm:$0x3]
  %v2480 = vld [vmem:[%s2466 + $0x68] sm:$0x3]
  %v2481 = vpack.c.bf16 %v2469, %v2467
  %v2482 = vpack.c.bf16 %v2470, %v2468
  %v2483 = vpack.c.bf16 %v2473, %v2471
  %v2484 = vpack.c.bf16 %v2474, %v2472
  %v2485 = vpack.c.bf16 %v2477, %v2475
  %v2486 = vpack.c.bf16 %v2478, %v2476
  %v2487 = vpack.c.bf16 %v2479, %v2479
  %v2488 = vpack.c.bf16 %v2480, %v2480
  %v2490 = vsel %vm116, %v2487, 0
  %v2493 = vsel %vm116, %v2488, 0
  %2495 = vmatpush.bf16.msra.mxu0 0
  %2496 = vmatpush.bf16.msra.mxu0 0
  %2497 = vmatpush.bf16.msra.mxu0 0
  %2498 = vmatpush.bf16.msra.mxu0 0
  %2499 = vmatpush.bf16.msra.mxu0 %v2490
  %2500 = vmatpush.bf16.msra.mxu0 %v2485
  %2501 = vmatpush.bf16.msra.mxu0 %v2483
  %2502 = vmatpush.bf16.msra.mxu0 %v2481
  %2503 = vmatmul.bf16.gmra.mxu0 %v111
  %v2504 = vpop.f32.mrf.mxu0
  %v2505 = vadd.f32 %v82, %v2504
  %v2506 = vpop.f32.mrf.mxu0
  %v2507 = vadd.f32 %v87, %v2506
  %2508 = vmatmul.bf16.gmra.mxu0 %v114
  %v2509 = vpop.f32.mrf.mxu0
  %v2510 = vadd.f32 %v92, %v2509
  %v2511 = vpop.f32.mrf.mxu0
  %v2512 = vadd.f32 %v97, %v2511
  %2513 = vdwg.mxu0
  %2514 = vmatpush.bf16.msra.mxu0 0
  %2515 = vmatpush.bf16.msra.mxu0 0
  %2516 = vmatpush.bf16.msra.mxu0 0
  %2517 = vmatpush.bf16.msra.mxu0 0
  %2518 = vmatpush.bf16.msra.mxu0 %v2493
  %2519 = vmatpush.bf16.msra.mxu0 %v2486
  %2520 = vmatpush.bf16.msra.mxu0 %v2484
  %2521 = vmatpush.bf16.msra.mxu0 %v2482
  %2522 = vmatmul.bf16.gmra.mxu0 %v111
  %v2523 = vpop.f32.mrf.mxu0
  %v2524 = vadd.f32 %v82, %v2523
  %v2525 = vpop.f32.mrf.mxu0
  %v2526 = vadd.f32 %v87, %v2525
  %2527 = vmatmul.bf16.gmra.mxu0 %v114
  %v2528 = vpop.f32.mrf.mxu0
  %v2529 = vadd.f32 %v92, %v2528
  %v2530 = vpop.f32.mrf.mxu0
  %v2531 = vadd.f32 %v97, %v2530
  %2532 = vdwg.mxu0
  %v2533 = vmax.f32 %v2505, 0.0
  %v2534 = vmax.f32 %v2524, 0.0
  %v2535 = vmax.f32 %v2507, 0.0
  %v2536 = vmax.f32 %v2526, 0.0
  %v2537 = vmax.f32 %v2510, 0.0
  %v2538 = vmax.f32 %v2529, 0.0
  %v2539 = vmax.f32 %v2512, 0.0
  %v2540 = vmax.f32 %v2531, 0.0
  %v2541 = vpack.c.bf16 %v2535, %v2533
  %v2542 = vpack.c.bf16 %v2539, %v2537
  %v2543 = vpack.c.bf16 %v2536, %v2534
  %v2544 = vpack.c.bf16 %v2540, %v2538
  %2549 = vrot.lane.b32.xlu0 %v2541, 127
  %v2550 = vpop.permute.xlu0 %2549
  %2551 = vrot.lane.b32.xlu0 %v2543, 127
  %v2552 = vpop.permute.xlu0 %2551
  %2553 = vrot.lane.b32.xlu0 %v2542, 127
  %v2554 = vpop.permute.xlu0 %2553
  %2555 = vrot.lane.b32.xlu0 %v2544, 127
  %v2556 = vpop.permute.xlu0 %2555
  %v2557 = vsel %vm190, %v2550, %v2552
  %v2558 = vsel %vm190, %v2554, %v2556
  %2561 = vmatpush.bf16.msra.mxu0 0
  %2562 = vmatpush.bf16.msra.mxu0 0
  %2563 = vmatpush.bf16.msra.mxu0 0
  %2564 = vmatpush.bf16.msra.mxu0 0
  %2565 = vmatpush.bf16.msra.mxu0 0
  %2566 = vmatpush.bf16.msra.mxu0 0
  %2567 = vmatpush.bf16.msra.mxu0 %v2558
  %2568 = vmatpush.bf16.msra.mxu0 %v2557
  %2569 = vmatmul.bf16.gmra.mxu0 %v197
  %v2570 = vpop.f32.mrf.mxu0
  %v2571 = vadd.f32 0.0, %v2570
  %v2572 = vpop.f32.mrf.mxu0
  %v2573 = vadd.f32 0.0, %v2572
  %2574 = vdwg.mxu0
  %2575 = vmatpush.bf16.msra.mxu0 0
  %2576 = vmatpush.bf16.msra.mxu0 0
  %2577 = vmatpush.bf16.msra.mxu0 0
  %2578 = vmatpush.bf16.msra.mxu0 0
  %2579 = vmatpush.bf16.msra.mxu0 0
  %2580 = vmatpush.bf16.msra.mxu0 0
  %2581 = vmatpush.bf16.msra.mxu0 %v2542
  %2582 = vmatpush.bf16.msra.mxu0 %v2541
  %2583 = vmatmul.bf16.gmra.mxu0 %v219
  %v2584 = vpop.f32.mrf.mxu0
  %v2585 = vadd.f32 %v2571, %v2584
  %v2586 = vpop.f32.mrf.mxu0
  %v2587 = vadd.f32 %v2573, %v2586
  %2588 = vdwg.mxu0
  %2589 = vrot.lane.b32.xlu0 %v2541, 126
  %v2590 = vpop.permute.xlu0 %2589
  %2591 = vrot.lane.b32.xlu0 %v2543, 126
  %v2592 = vpop.permute.xlu0 %2591
  %2593 = vrot.lane.b32.xlu0 %v2542, 126
  %v2594 = vpop.permute.xlu0 %2593
  %2595 = vrot.lane.b32.xlu0 %v2544, 126
  %v2596 = vpop.permute.xlu0 %2595
  %v2597 = vsel %vm248, %v2590, %v2592
  %v2598 = vsel %vm248, %v2594, %v2596
  %2601 = vmatpush.bf16.msra.mxu0 0
  %2602 = vmatpush.bf16.msra.mxu0 0
  %2603 = vmatpush.bf16.msra.mxu0 0
  %2604 = vmatpush.bf16.msra.mxu0 0
  %2605 = vmatpush.bf16.msra.mxu0 0
  %2606 = vmatpush.bf16.msra.mxu0 0
  %2607 = vmatpush.bf16.msra.mxu0 %v2598
  %2608 = vmatpush.bf16.msra.mxu0 %v2597
  %2609 = vmatmul.bf16.gmra.mxu0 %v254
  %v2610 = vpop.f32.mrf.mxu0
  %v2611 = vadd.f32 0.0, %v2610
  %v2612 = vpop.f32.mrf.mxu0
  %v2613 = vadd.f32 0.0, %v2612
  %2614 = vdwg.mxu0
  %v2615 = vadd.f32 %v2585, %v2611
  %v2616 = vadd.f32 %v2587, %v2613
  %2617 = vrot.lane.b32.xlu0 %v2541, 116
  %v2618 = vpop.permute.xlu0 %2617
  %2619 = vrot.lane.b32.xlu0 %v2543, 116
  %v2620 = vpop.permute.xlu0 %2619
  %2621 = vrot.lane.b32.xlu0 %v2542, 116
  %v2622 = vpop.permute.xlu0 %2621
  %2623 = vrot.lane.b32.xlu0 %v2544, 116
  %v2624 = vpop.permute.xlu0 %2623
  %v2625 = vsel %vm285, %v2618, %v2620
  %v2626 = vsel %vm285, %v2622, %v2624
  %2629 = vmatpush.bf16.msra.mxu0 0
  %2630 = vmatpush.bf16.msra.mxu0 0
  %2631 = vmatpush.bf16.msra.mxu0 0
  %2632 = vmatpush.bf16.msra.mxu0 0
  %2633 = vmatpush.bf16.msra.mxu0 0
  %2634 = vmatpush.bf16.msra.mxu0 0
  %2635 = vmatpush.bf16.msra.mxu0 %v2626
  %2636 = vmatpush.bf16.msra.mxu0 %v2625
  %2637 = vmatmul.bf16.gmra.mxu0 %v291
  %v2638 = vpop.f32.mrf.mxu0
  %v2639 = vadd.f32 0.0, %v2638
  %v2640 = vpop.f32.mrf.mxu0
  %v2641 = vadd.f32 0.0, %v2640
  %2642 = vdwg.mxu0
  %v2643 = vadd.f32 %v2615, %v2639
  %v2644 = vadd.f32 %v2616, %v2641
  %2645 = vrot.lane.b32.xlu0 %v2541, 115
  %v2646 = vpop.permute.xlu0 %2645
  %2647 = vrot.lane.b32.xlu0 %v2543, 115
  %v2648 = vpop.permute.xlu0 %2647
  %2649 = vrot.lane.b32.xlu0 %v2542, 115
  %v2650 = vpop.permute.xlu0 %2649
  %2651 = vrot.lane.b32.xlu0 %v2544, 115
  %v2652 = vpop.permute.xlu0 %2651
  %v2653 = vsel %vm322, %v2646, %v2648
  %v2654 = vsel %vm322, %v2650, %v2652
  %2657 = vmatpush.bf16.msra.mxu0 0
  %2658 = vmatpush.bf16.msra.mxu0 0
  %2659 = vmatpush.bf16.msra.mxu0 0
  %2660 = vmatpush.bf16.msra.mxu0 0
  %2661 = vmatpush.bf16.msra.mxu0 0
  %2662 = vmatpush.bf16.msra.mxu0 0
  %2663 = vmatpush.bf16.msra.mxu0 %v2654
  %2664 = vmatpush.bf16.msra.mxu0 %v2653
  %2665 = vmatmul.bf16.gmra.mxu0 %v328
  %v2666 = vpop.f32.mrf.mxu0
  %v2667 = vadd.f32 0.0, %v2666
  %v2668 = vpop.f32.mrf.mxu0
  %v2669 = vadd.f32 0.0, %v2668
  %2670 = vdwg.mxu0
  %v2671 = vadd.f32 %v2643, %v2667
  %v2672 = vadd.f32 %v2644, %v2669
  %2673 = vrot.lane.b32.xlu0 %v2541, 114
  %v2674 = vpop.permute.xlu0 %2673
  %2675 = vrot.lane.b32.xlu0 %v2543, 114
  %v2676 = vpop.permute.xlu0 %2675
  %2677 = vrot.lane.b32.xlu0 %v2542, 114
  %v2678 = vpop.permute.xlu0 %2677
  %2679 = vrot.lane.b32.xlu0 %v2544, 114
  %v2680 = vpop.permute.xlu0 %2679
  %v2681 = vsel %vm359, %v2674, %v2676
  %v2682 = vsel %vm359, %v2678, %v2680
  %2685 = vmatpush.bf16.msra.mxu0 0
  %2686 = vmatpush.bf16.msra.mxu0 0
  %2687 = vmatpush.bf16.msra.mxu0 0
  %2688 = vmatpush.bf16.msra.mxu0 0
  %2689 = vmatpush.bf16.msra.mxu0 0
  %2690 = vmatpush.bf16.msra.mxu0 0
  %2691 = vmatpush.bf16.msra.mxu0 %v2682
  %2692 = vmatpush.bf16.msra.mxu0 %v2681
  %2693 = vmatmul.bf16.gmra.mxu0 %v365
  %v2694 = vpop.f32.mrf.mxu0
  %v2695 = vadd.f32 0.0, %v2694
  %v2696 = vpop.f32.mrf.mxu0
  %v2697 = vadd.f32 0.0, %v2696
  %2698 = vdwg.mxu0
  %v2699 = vadd.f32 %v2671, %v2695
  %v2700 = vadd.f32 %v2672, %v2697
  %2701 = vrot.lane.b32.xlu0 %v2541, 104
  %v2702 = vpop.permute.xlu0 %2701
  %2703 = vrot.lane.b32.xlu0 %v2543, 104
  %v2704 = vpop.permute.xlu0 %2703
  %2705 = vrot.lane.b32.xlu0 %v2542, 104
  %v2706 = vpop.permute.xlu0 %2705
  %2707 = vrot.lane.b32.xlu0 %v2544, 104
  %v2708 = vpop.permute.xlu0 %2707
  %v2709 = vsel %vm396, %v2702, %v2704
  %v2710 = vsel %vm396, %v2706, %v2708
  %2713 = vmatpush.bf16.msra.mxu0 0
  %2714 = vmatpush.bf16.msra.mxu0 0
  %2715 = vmatpush.bf16.msra.mxu0 0
  %2716 = vmatpush.bf16.msra.mxu0 0
  %2717 = vmatpush.bf16.msra.mxu0 0
  %2718 = vmatpush.bf16.msra.mxu0 0
  %2719 = vmatpush.bf16.msra.mxu0 %v2710
  %2720 = vmatpush.bf16.msra.mxu0 %v2709
  %2721 = vmatmul.bf16.gmra.mxu0 %v402
  %v2722 = vpop.f32.mrf.mxu0
  %v2723 = vadd.f32 0.0, %v2722
  %v2724 = vpop.f32.mrf.mxu0
  %v2725 = vadd.f32 0.0, %v2724
  %2726 = vdwg.mxu0
  %v2727 = vadd.f32 %v2699, %v2723
  %v2728 = vadd.f32 %v2700, %v2725
  %2729 = vrot.lane.b32.xlu0 %v2541, 103
  %v2730 = vpop.permute.xlu0 %2729
  %2731 = vrot.lane.b32.xlu0 %v2543, 103
  %v2732 = vpop.permute.xlu0 %2731
  %2733 = vrot.lane.b32.xlu0 %v2542, 103
  %v2734 = vpop.permute.xlu0 %2733
  %2735 = vrot.lane.b32.xlu0 %v2544, 103
  %v2736 = vpop.permute.xlu0 %2735
  %v2737 = vsel %vm433, %v2730, %v2732
  %v2738 = vsel %vm433, %v2734, %v2736
  %2741 = vmatpush.bf16.msra.mxu0 0
  %2742 = vmatpush.bf16.msra.mxu0 0
  %2743 = vmatpush.bf16.msra.mxu0 0
  %2744 = vmatpush.bf16.msra.mxu0 0
  %2745 = vmatpush.bf16.msra.mxu0 0
  %2746 = vmatpush.bf16.msra.mxu0 0
  %2747 = vmatpush.bf16.msra.mxu0 %v2738
  %2748 = vmatpush.bf16.msra.mxu0 %v2737
  %2749 = vmatmul.bf16.gmra.mxu0 %v439
  %v2750 = vpop.f32.mrf.mxu0
  %v2751 = vadd.f32 0.0, %v2750
  %v2752 = vpop.f32.mrf.mxu0
  %v2753 = vadd.f32 0.0, %v2752
  %2754 = vdwg.mxu0
  %v2755 = vadd.f32 %v2727, %v2751
  %v2756 = vadd.f32 %v2728, %v2753
  %2757 = vrot.lane.b32.xlu0 %v2541, 102
  %v2758 = vpop.permute.xlu0 %2757
  %2759 = vrot.lane.b32.xlu0 %v2543, 102
  %v2760 = vpop.permute.xlu0 %2759
  %2761 = vrot.lane.b32.xlu0 %v2542, 102
  %v2762 = vpop.permute.xlu0 %2761
  %2763 = vrot.lane.b32.xlu0 %v2544, 102
  %v2764 = vpop.permute.xlu0 %2763
  %v2765 = vsel %vm470, %v2758, %v2760
  %v2766 = vsel %vm470, %v2762, %v2764
  %2769 = vmatpush.bf16.msra.mxu0 0
  %2770 = vmatpush.bf16.msra.mxu0 0
  %2771 = vmatpush.bf16.msra.mxu0 0
  %2772 = vmatpush.bf16.msra.mxu0 0
  %2773 = vmatpush.bf16.msra.mxu0 0
  %2774 = vmatpush.bf16.msra.mxu0 0
  %2775 = vmatpush.bf16.msra.mxu0 %v2766
  %2776 = vmatpush.bf16.msra.mxu0 %v2765
  %2777 = vmatmul.bf16.gmra.mxu0 %v476
  %v2778 = vpop.f32.mrf.mxu0
  %v2779 = vadd.f32 0.0, %v2778
  %v2780 = vpop.f32.mrf.mxu0
  %v2781 = vadd.f32 0.0, %v2780
  %2782 = vdwg.mxu0
  %v2783 = vadd.f32 %v2755, %v2779
  %v2784 = vadd.f32 %v2756, %v2781
  %v2785 = vadd.f32 %v2783, %v497
  %v2786 = vadd.f32 %v2784, %v502
  %v2787 = vmax.f32 %v2785, 0.0
  %v2788 = vmax.f32 %v2786, 0.0
  %s2789 = scalar_lea.vmem %s5, 112
  %2790 = vst [vmem:[%s2789] sm:$0xff] %v2787
  %2791 = vst [vmem:[%s2789 + $0x8] sm:$0xff] %v2788
  // Predicated region
  $region22: #{conv_qnet_forward.2} parent=0 // pred_check
    _
  $region23: #{conv_qnet_forward.2} parent=0 // pred_check_branch
    %2793 = sbr.rel (0) target = $region25
  $region24: #{conv_qnet_forward.2} parent=0 // pred_region
    _
  $region25: #{conv_qnet_forward.2} parent=0 // pred_fallthru
    _
  // Predicated region
  $region26: #{conv_qnet_forward.2} parent=0 // pred_check
    _
  $region27: #{conv_qnet_forward.2} parent=0 // pred_check_branch
    %2795 = sbr.rel (0) target = $region29
  $region28: #{conv_qnet_forward.2} parent=0 // pred_region
    _
  $region29: #{conv_qnet_forward.2} parent=0 // pred_fallthru
    _

</llo_original>
